<compile_context>
chip_gen: v5e
topology: v5e:2x2
jax: 0.10.0
libtpu: 0.0.40
codegen_flags: <defaults>
</compile_context>

<pallas_src>
from functools import partial

import jax
import jax.numpy as jnp
from jax.experimental import pallas as pl
from jax.experimental.pallas import tpu as pltpu

_LN_EPS = 1e-5


def _vmem_limit_bytes():
    # 128 MiB physical VMEM on v5e/v6e -> ~96 MiB scoped; 64 MiB on v7x -> ~48 MiB scoped.
    try:
        cap = pltpu.get_tpu_info().vmem_capacity_bytes
    except Exception:
        cap = 64 * 1024 * 1024
    return int(min(96 * 1024 * 1024, cap * 3 // 4))


_VMEM_LIMIT = _vmem_limit_bytes()

_ROW_TILES = (512, 256, 128, 64, 32, 16, 8)          # sublane-dim (row) tile candidates
_ROW_TILES_LN = (1024, 512, 256, 128, 64, 32, 16, 8)  # pure-LN kernel (mem-bound, go bigger)
_COL_TILES = (1024, 512, 256, 128)                    # lane-dim (column) tile candidates


def _pick_tile(dim, candidates):
    """Largest candidate that evenly divides `dim`; else the full dimension (small dims only)."""
    for c in candidates:
        if dim >= c and dim % c == 0:
            return c
    if dim > 4 * candidates[0]:
        # TODO(synk): padding path for large non-divisible dims instead of raising.
        raise ValueError(f"dim {dim} not divisible by any tile candidate {candidates}")
    return dim


def _cparams(*semantics):
    return pltpu.CompilerParams(
        dimension_semantics=tuple(semantics),
        vmem_limit_bytes=_VMEM_LIMIT,
    )


# ----------------------------------------------------------------------------
# in-kernel math helpers (fp32 statistics; matmul operands bf16)
# ----------------------------------------------------------------------------

def _layernorm_f32(x, gamma_row):
    mu = jnp.mean(x, axis=-1, keepdims=True)
    xc = x - mu
    var = jnp.mean(xc * xc, axis=-1, keepdims=True)
    return (xc * jax.lax.rsqrt(var + _LN_EPS)) * gamma_row


def _l2norm(x):
    # F.normalize(dim=-1): x * rsqrt(max(sum(x^2), eps^2))
    return x * jax.lax.rsqrt(jnp.maximum(jnp.sum(x * x, axis=-1, keepdims=True), 1e-24))


def _gelu_tanh(x):
    # tanh-approx GELU (routes through the EUP slot) per perf review; ~1e-3 deviation vs erf.
    c = 0.7978845608028654
    return 0.5 * x * (1.0 + jnp.tanh(c * (x + 0.044715 * x * x * x)))


# ----------------------------------------------------------------------------
# Kernel 1: [LayerNorm] + lane-dense projection(s) + fused per-head qk-norm/scale
#   x (B, S, D) -> each output (B, S, H*dh) bf16
# ----------------------------------------------------------------------------

def _ln_proj_kernel(*refs, n_w, n_norm, apply_ln, heads, dim_head):
    g_ref = refs[0]
    scale_refs = refs[1:1 + n_norm]
    x_ref = refs[1 + n_norm]
    w_refs = refs[2 + n_norm:2 + n_norm + n_w]
    o_refs = refs[2 + n_norm + n_w:]

    x = x_ref[0]                                             # (ts, D) fp32
    if apply_ln:
        x = _layernorm_f32(x, g_ref[...])
    xb = x.astype(jnp.bfloat16)

    for i in range(n_w):
        y = jnp.dot(xb, w_refs[i][...], preferred_element_type=jnp.float32)   # (ts, H*dh)
        if i < n_norm:
            # fused per-head l2norm + scale (q gets q_scale*8, k gets k_scale); v untouched.
            scale = scale_refs[i][...]                       # (1, dh) fp32
            parts = []
            for h in range(heads):
                yh = y[:, h * dim_head:(h + 1) * dim_head]
                parts.append(_l2norm(yh) * scale)
            y = parts[0] if heads == 1 else jnp.concatenate(parts, axis=-1)
        o_refs[i][0] = y.astype(jnp.bfloat16)


def ln_project(x, gamma, weights, scales, heads, dim_head, apply_ln=True):
    """weights: list of (D, H*dh) bf16; scales apply (after per-head l2norm) to the first
    len(scales) outputs.  Returns a list of (B, S, H*dh) bf16 arrays."""
    B, S, D = x.shape
    inner = weights[0].shape[1]
    ts = _pick_tile(S, _ROW_TILES)
    n_w, n_norm = len(weights), len(scales)

    in_specs = ([pl.BlockSpec((1, D), lambda b, i: (0, 0))]
                + [pl.BlockSpec((1, dim_head), lambda b, i: (0, 0))] * n_norm
                + [pl.BlockSpec((1, ts, D), lambda b, i: (b, i, 0))]
                + [pl.BlockSpec((D, inner), lambda b, i: (0, 0))] * n_w)
    out_specs = [pl.BlockSpec((1, ts, inner), lambda b, i: (b, i, 0))] * n_w
    out_shape = [jax.ShapeDtypeStruct((B, S, inner), jnp.bfloat16)] * n_w

    outs = pl.pallas_call(
        partial(_ln_proj_kernel, n_w=n_w, n_norm=n_norm, apply_ln=apply_ln,
                heads=heads, dim_head=dim_head),
        grid=(B, S // ts),
        in_specs=in_specs,
        out_specs=out_specs,
        out_shape=out_shape,
        compiler_params=_cparams("parallel", "parallel"),
    )(gamma.reshape(1, D), *scales, x, *weights)
    return list(outs)


# ----------------------------------------------------------------------------
# Kernel 2: flash attention, all heads per grid step on the lane-dense layout.
#   q/k pre-normalized & pre-scaled (scale=8 folded into q).  Null-KV handled in-kernel.
# ----------------------------------------------------------------------------

def _flash_attn_kernel(*refs, heads, dim_head, has_mask):
    if has_mask:
        (nk_ref, nv_ref, q_ref, k_ref, v_ref, msk_ref,
         o_ref, m_sc, l_sc, acc_sc) = refs
    else:
        (nk_ref, nv_ref, q_ref, k_ref, v_ref,
         o_ref, m_sc, l_sc, acc_sc) = refs

    H, dh = heads, dim_head
    ki = pl.program_id(2)

    q = q_ref[0]                     # (tq, H*dh) bf16, already l2norm'ed * q_scale * 8
    k = k_ref[0]                     # (tk, H*dh) bf16, already l2norm'ed * k_scale
    v = v_ref[0]                     # (tk, H*dh) bf16

    @pl.when(ki == 0)
    def _():
        # Always-attended null key/value column initializes the online-softmax state.
        nk = nk_ref[...]             # (1, H*dh) fp32 (pre-normalized & k-scaled)
        l_sc[...] = jnp.ones(l_sc.shape, jnp.float32)
        acc_sc[...] = jnp.broadcast_to(nv_ref[...], acc_sc.shape)
        m0 = []
        for h in range(H):
            hs = slice(h * dh, (h + 1) * dh)
            m0.append(jnp.sum(q[:, hs].astype(jnp.float32) * nk[:, hs],
                              axis=-1, keepdims=True))
        m_sc[...] = m0[0] if H == 1 else jnp.concatenate(m0, axis=-1)

    if has_mask:
        keep = msk_ref[0] != 0       # (1, tk) — per-key mask, shared by all heads / q rows

    for h in range(H):
        hs = slice(h * dh, (h + 1) * dh)
        sim = jax.lax.dot_general(q[:, hs], k[:, hs], (((1,), (1,)), ((), ())),
                                  preferred_element_type=jnp.float32)       # (tq, tk)
        if has_mask:
            sim = jnp.where(keep, sim, -1e30)                # finite fill
        m_p = m_sc[:, h:h + 1]
        m_n = jnp.maximum(m_p, jnp.max(sim, axis=-1, keepdims=True))
        alpha = jnp.exp(m_p - m_n)
        p = jnp.exp(sim - m_n)
        m_sc[:, h:h + 1] = m_n
        l_sc[:, h:h + 1] = alpha * l_sc[:, h:h + 1] + jnp.sum(p, axis=-1, keepdims=True)
        acc_sc[:, hs] = alpha * acc_sc[:, hs] + jnp.dot(
            p.astype(jnp.bfloat16), v[:, hs], preferred_element_type=jnp.float32)

    @pl.when(ki == pl.num_programs(2) - 1)
    def _():
        outs = []
        for h in range(H):
            hs = slice(h * dh, (h + 1) * dh)
            outs.append(acc_sc[:, hs] * pl.reciprocal(l_sc[:, h:h + 1], approx=True))
        o_ref[0] = (outs[0] if H == 1 else
                    jnp.concatenate(outs, axis=-1)).astype(o_ref.dtype)


def flash_attention(q, k, v, null_k_flat, null_v_flat, heads, dim_head, mask=None):
    """q: (B, N, H*dh); k/v: (B, M, H*dh) bf16 -> (B, N, H*dh) bf16."""
    B, N, inner = q.shape
    M = k.shape[1]
    tq = _pick_tile(N, _ROW_TILES)
    tk = _pick_tile(M, _ROW_TILES)
    has_mask = mask is not None

    in_specs = [
        pl.BlockSpec((1, inner), lambda b, qi, ki: (0, 0)),              # null_k (pre-normed)
        pl.BlockSpec((1, inner), lambda b, qi, ki: (0, 0)),              # null_v
        pl.BlockSpec((1, tq, inner), lambda b, qi, ki: (b, qi, 0)),      # q
        pl.BlockSpec((1, tk, inner), lambda b, qi, ki: (b, ki, 0)),      # k
        pl.BlockSpec((1, tk, inner), lambda b, qi, ki: (b, ki, 0)),      # v
    ]
    args = [null_k_flat, null_v_flat, q, k, v]
    if has_mask:
        in_specs.append(pl.BlockSpec((1, 1, tk), lambda b, qi, ki: (b, 0, ki)))
        args.append(mask)

    return pl.pallas_call(
        partial(_flash_attn_kernel, heads=heads, dim_head=dim_head, has_mask=has_mask),
        out_shape=jax.ShapeDtypeStruct((B, N, inner), jnp.bfloat16),
        grid=(B, N // tq, M // tk),
        in_specs=in_specs,
        out_specs=pl.BlockSpec((1, tq, inner), lambda b, qi, ki: (b, qi, 0)),
        scratch_shapes=[pltpu.VMEM((tq, heads), jnp.float32),    # m
                        pltpu.VMEM((tq, heads), jnp.float32),    # l
                        pltpu.VMEM((tq, inner), jnp.float32)],   # acc
        compiler_params=_cparams("parallel", "parallel", "arbitrary"),
    )(*args)


# ----------------------------------------------------------------------------
# Kernel 3: output projection — deep K = H*dh matmul + fused residual add
# ----------------------------------------------------------------------------

def _matmul_residual_kernel(a_ref, w_ref, r_ref, o_ref):
    o_ref[...] = (jnp.dot(a_ref[...], w_ref[...], preferred_element_type=jnp.float32)
                  + r_ref[...])


def matmul_residual(a2d, w, residual2d):
    """(R, K) bf16 @ (K, Dout) bf16 + (R, Dout) fp32 -> (R, Dout) fp32.  K kept un-tiled."""
    R, K = a2d.shape
    Dout = w.shape[1]
    tm = _pick_tile(R, _ROW_TILES)
    tn = _pick_tile(Dout, _COL_TILES)
    return pl.pallas_call(
        _matmul_residual_kernel,
        out_shape=jax.ShapeDtypeStruct((R, Dout), jnp.float32),
        grid=(R // tm, Dout // tn),
        in_specs=[pl.BlockSpec((tm, K), lambda i, j: (i, 0)),
                  pl.BlockSpec((K, tn), lambda i, j: (0, j)),
                  pl.BlockSpec((tm, tn), lambda i, j: (i, j))],
        out_specs=pl.BlockSpec((tm, tn), lambda i, j: (i, j)),
        compiler_params=_cparams("parallel", "parallel"),
    )(a2d, w, residual2d)


# ----------------------------------------------------------------------------
# Kernels 4/5: FeedForward — (LN + W1 + GEGLU) and (LN + W2 + residual)
#   LN computed once per row tile into bf16 VMEM scratch under pl.when(j == 0).
# ----------------------------------------------------------------------------

def _ff1_kernel(g_ref, x_ref, wx_ref, wg_ref, o_ref, xln_sc):
    @pl.when(pl.program_id(1) == 0)
    def _():
        xln_sc[...] = _layernorm_f32(x_ref[...], g_ref[...]).astype(jnp.bfloat16)
    xb = xln_sc[...]
    a = jnp.dot(xb, wx_ref[...], preferred_element_type=jnp.float32)   # first chunk -> gelu
    g = jnp.dot(xb, wg_ref[...], preferred_element_type=jnp.float32)   # second chunk -> gate
    o_ref[...] = (g * _gelu_tanh(a)).astype(o_ref.dtype)


def ff_in(x2d, gamma, w_x, w_gate):
    R, D = x2d.shape
    F_ = w_x.shape[1]
    tm = _pick_tile(R, _ROW_TILES)
    tn = _pick_tile(F_, _COL_TILES)
    return pl.pallas_call(
        _ff1_kernel,
        out_shape=jax.ShapeDtypeStruct((R, F_), jnp.bfloat16),          # bf16 intermediate
        grid=(R // tm, F_ // tn),
        in_specs=[pl.BlockSpec((1, D), lambda i, j: (0, 0)),
                  pl.BlockSpec((tm, D), lambda i, j: (i, 0)),
                  pl.BlockSpec((D, tn), lambda i, j: (0, j)),
                  pl.BlockSpec((D, tn), lambda i, j: (0, j))],
        out_specs=pl.BlockSpec((tm, tn), lambda i, j: (i, j)),
        scratch_shapes=[pltpu.VMEM((tm, D), jnp.bfloat16)],
        compiler_params=_cparams("parallel", "arbitrary"),
    )(gamma.reshape(1, D), x2d, w_x, w_gate)


def _ff2_kernel(g_ref, h_ref, w_ref, r_ref, o_ref, hln_sc):
    @pl.when(pl.program_id(1) == 0)
    def _():
        hf = h_ref[...].astype(jnp.float32)                             # upcast for LN stats
        hln_sc[...] = _layernorm_f32(hf, g_ref[...]).astype(jnp.bfloat16)
    o_ref[...] = (jnp.dot(hln_sc[...], w_ref[...], preferred_element_type=jnp.float32)
                  + r_ref[...])


def ff_out(h2d, gamma, w2, residual2d):
    R, F_ = h2d.shape
    D = w2.shape[1]
    tm = _pick_tile(R, _ROW_TILES)
    tn = _pick_tile(D, _COL_TILES)
    return pl.pallas_call(
        _ff2_kernel,
        out_shape=jax.ShapeDtypeStruct((R, D), jnp.float32),
        grid=(R // tm, D // tn),
        in_specs=[pl.BlockSpec((1, F_), lambda i, j: (0, 0)),
                  pl.BlockSpec((tm, F_), lambda i, j: (i, 0)),
                  pl.BlockSpec((F_, tn), lambda i, j: (0, j)),
                  pl.BlockSpec((tm, tn), lambda i, j: (i, j))],
        out_specs=pl.BlockSpec((tm, tn), lambda i, j: (i, j)),
        scratch_shapes=[pltpu.VMEM((tm, F_), jnp.bfloat16)],
        compiler_params=_cparams("parallel", "arbitrary"),
    )(gamma.reshape(1, F_), h2d, w2, residual2d)


# ----------------------------------------------------------------------------
# Kernel 6: final LayerNorm
# ----------------------------------------------------------------------------

def _ln_kernel(g_ref, x_ref, o_ref):
    o_ref[...] = _layernorm_f32(x_ref[...], g_ref[...])


def layernorm_2d(x2d, gamma):
    R, D = x2d.shape
    tm = _pick_tile(R, _ROW_TILES_LN)
    return pl.pallas_call(
        _ln_kernel,
        out_shape=jax.ShapeDtypeStruct((R, D), jnp.float32),
        grid=(R // tm,),
        in_specs=[pl.BlockSpec((1, D), lambda i: (0, 0)),
                  pl.BlockSpec((tm, D), lambda i: (i, 0))],
        out_specs=pl.BlockSpec((tm, D), lambda i: (i, 0)),
        compiler_params=_cparams("parallel"),
    )(gamma.reshape(1, D), x2d)


# ----------------------------------------------------------------------------
# Module forward (thin JAX glue only — no activation transposes / concats in HBM)
# ----------------------------------------------------------------------------

def attention_block(x, p, heads, dim_head, context=None, context_mask=None):
    """Returns attention(x) + x (residual fused into the output-projection kernel)."""
    B, N, D = x.shape
    inner = heads * dim_head

    q_scale_fold = (p["q_scale"] * 8.0).reshape(1, dim_head)   # Attend scale=8 folded into q
    k_scale = p["k_scale"].reshape(1, dim_head)

    if context is None:
        # self-attention: one fused LN + 3-way lane-dense projection (shares x load & LN).
        q, k, v = ln_project(x, p["norm_gamma"], [p["wq"], p["wk"], p["wv"]],
                             [q_scale_fold, k_scale], heads, dim_head)
        mask = None
    else:
        # cross-attention: q from LN(x); k/v from the raw context (PyTorch norms x only).
        (q,) = ln_project(x, p["norm_gamma"], [p["wq"]], [q_scale_fold], heads, dim_head)
        k, v = ln_project(context, p["norm_gamma"], [p["wk"], p["wv"]], [k_scale],
                          heads, dim_head, apply_ln=False)
        mask = None
        if context_mask is not None:
            mask = context_mask.astype(jnp.int32).reshape(B, 1, context.shape[1])

    # null key/value column: normalize + k_scale in the glue (tiny (H, dh) op), lane-flattened.
    nk = p["null_k"]
    nk = nk * jax.lax.rsqrt(jnp.maximum(jnp.sum(nk * nk, axis=-1, keepdims=True), 1e-24))
    null_k_flat = (nk * p["k_scale"]).reshape(1, inner).astype(jnp.float32)
    null_v_flat = p["null_v"].reshape(1, inner).astype(jnp.float32)

    attn = flash_attention(q, k, v, null_k_flat, null_v_flat, heads, dim_head, mask=mask)
    out = matmul_residual(attn.reshape(B * N, inner), p["wo"], x.reshape(B * N, D))
    return out.reshape(B, N, D)


def feedforward_block(x, p):
    """Returns FF(x) + x (LN / GEGLU / residual fused into the two matmul kernels)."""
    B, N, D = x.shape
    x2 = x.reshape(B * N, D)
    h = ff_in(x2, p["ln1_gamma"], p["w1_x"], p["w1_gate"])
    y = ff_out(h, p["ln2_gamma"], p["w2"], x2)
    return y.reshape(B, N, D)


def transformer_blocks(x, context, context_mask, params, heads, dim_head):
    for layer in params["layers"]:
        x = attention_block(x, layer["self_attn"], heads, dim_head)
        x = attention_block(x, layer["cross_attn"], heads, dim_head,
                            context=context, context_mask=context_mask)
        x = feedforward_block(x, layer["ff"])
    B, N, D = x.shape
    return layernorm_2d(x.reshape(B * N, D), params["final_gamma"]).reshape(B, N, D)


# ----------------------------------------------------------------------------
# Parameter init (kernel-friendly lane-dense bf16 weight layouts)
# ----------------------------------------------------------------------------

def init_params(key, dim, depth, heads, dim_head, ff_mult):
    inner = heads * dim_head
    ff_inner = int(dim * ff_mult * 2 / 3)

    def normal(k, shape, std=0.02):
        return std * jax.random.normal(k, shape, dtype=jnp.float32)

    layers = []
    for _ in range(depth):
        key, *ks = jax.random.split(key, 11)

        def attn_params(k_null, k_q, k_kv, k_o):
            wkv = normal(k_kv, (dim, 2 * inner))
            null_kv = jax.random.normal(k_null, (2, heads, 1, dim_head), dtype=jnp.float32)
            return dict(
                norm_gamma=jnp.ones((dim,), jnp.float32),
                wq=normal(k_q, (dim, inner)).astype(jnp.bfloat16),
                wk=wkv[:, :inner].astype(jnp.bfloat16),
                wv=wkv[:, inner:].astype(jnp.bfloat16),
                wo=normal(k_o, (inner, dim)).astype(jnp.bfloat16),
                q_scale=jnp.ones((dim_head,), jnp.float32),
                k_scale=jnp.ones((dim_head,), jnp.float32),
                null_k=null_kv[0, :, 0, :],    # (H, dh) fp32
                null_v=null_kv[1, :, 0, :],    # (H, dh) fp32
            )

        sa = attn_params(ks[0], ks[1], ks[2], ks[3])
        ca = attn_params(ks[4], ks[5], ks[6], ks[7])
        w1 = normal(ks[8], (dim, 2 * ff_inner))
        ff = dict(
            ln1_gamma=jnp.ones((dim,), jnp.float32),
            w1_x=w1[:, :ff_inner].astype(jnp.bfloat16),      # first chunk -> gelu
            w1_gate=w1[:, ff_inner:].astype(jnp.bfloat16),   # second chunk -> gate
            ln2_gamma=jnp.ones((ff_inner,), jnp.float32),
            w2=normal(ks[9], (ff_inner, dim)).astype(jnp.bfloat16),
        )
        layers.append(dict(self_attn=sa, cross_attn=ca, ff=ff))

    return dict(layers=layers, final_gamma=jnp.ones((dim,), jnp.float32))


# ----------------------------------------------------------------------------
# Example run
# ----------------------------------------------------------------------------

if __name__ == "__main__":
    B, N, DIM = 2, 8, 32
    DEPTH, HEADS, DIM_HEAD, FF_MULT = 2, 2, 8, 4
    CTX = 6

    key = jax.random.PRNGKey(0)
    kx, kc, kp = jax.random.split(key, 3)

    x = jax.random.normal(kx, (B, N, DIM), dtype=jnp.float32)
    context = jax.random.normal(kc, (B, CTX, DIM), dtype=jnp.float32)
    context_mask = jnp.array(
        [[1, 1, 1, 1, 1, 1],
         [1, 1, 1, 0, 0, 0]], dtype=jnp.int32).astype(bool)

    params = init_params(kp, DIM, DEPTH, HEADS, DIM_HEAD, FF_MULT)

    fwd = jax.jit(partial(transformer_blocks, heads=HEADS, dim_head=DIM_HEAD))
    out = fwd(x, context, context_mask, params)
    out = jax.block_until_ready(out)

    assert out.shape == (B, N, DIM)
    assert bool(jnp.all(jnp.isfinite(out)))
    print("KERNEL_OK")
</pallas_src>

<mosaic_0001>
module attributes {stable_mosaic.version = 11 : i64} {
  func.func @_ln_proj_kernel(%arg0: i32, %arg1: i32, %arg2: memref<1x32xf32, #tpu.memory_space<vmem>>, %arg3: memref<1x8xf32, #tpu.memory_space<vmem>>, %arg4: memref<1x8xf32, #tpu.memory_space<vmem>>, %arg5: memref<1x8x32xf32, #tpu.memory_space<vmem>>, %arg6: memref<32x16xbf16, #tpu.memory_space<vmem>>, %arg7: memref<32x16xbf16, #tpu.memory_space<vmem>>, %arg8: memref<32x16xbf16, #tpu.memory_space<vmem>>, %arg9: memref<1x8x16xbf16, #tpu.memory_space<vmem>>, %arg10: memref<1x8x16xbf16, #tpu.memory_space<vmem>>, %arg11: memref<1x8x16xbf16, #tpu.memory_space<vmem>>) attributes {dimension_semantics = [#tpu.dimension_semantics<parallel>, #tpu.dimension_semantics<parallel>], iteration_bounds = array<i64: 2, 1>, scalar_prefetch = 0 : i64, scratch_operands = 0 : i64, tpu.core_type = #tpu.core_type<tc>, window_params = [{pipeline_mode = #tpu.pipeline_mode<synchronous>, transform_indices = @transform_0, window_bounds = array<i64: 1, 32>}, {pipeline_mode = #tpu.pipeline_mode<synchronous>, transform_indices = @transform_1, window_bounds = array<i64: 1, 8>}, {pipeline_mode = #tpu.pipeline_mode<synchronous>, transform_indices = @transform_2, window_bounds = array<i64: 1, 8>}, {transform_indices = @transform_3, window_bounds = array<i64: 1, 8, 32>}, {pipeline_mode = #tpu.pipeline_mode<synchronous>, transform_indices = @transform_4, window_bounds = array<i64: 32, 16>}, {pipeline_mode = #tpu.pipeline_mode<synchronous>, transform_indices = @transform_5, window_bounds = array<i64: 32, 16>}, {pipeline_mode = #tpu.pipeline_mode<synchronous>, transform_indices = @transform_6, window_bounds = array<i64: 32, 16>}, {transform_indices = @transform_7, window_bounds = array<i64: 1, 8, 16>}, {transform_indices = @transform_8, window_bounds = array<i64: 1, 8, 16>}, {transform_indices = @transform_9, window_bounds = array<i64: 1, 8, 16>}]} {
    %c0 = arith.constant 0 : index
    %c0_0 = arith.constant 0 : index
    %c0_1 = arith.constant 0 : index
    %0 = vector.load %arg5[%c0, %c0_0, %c0_1] : memref<1x8x32xf32, #tpu.memory_space<vmem>>, vector<1x8x32xf32>
    %1 = vector.shape_cast %0 : vector<1x8x32xf32> to vector<8x32xf32>
    %c0_2 = arith.constant 0 : index
    %c0_3 = arith.constant 0 : index
    %2 = vector.load %arg2[%c0_2, %c0_3] : memref<1x32xf32, #tpu.memory_space<vmem>>, vector<1x32xf32>
    %cst = arith.constant dense<0.000000e+00> : vector<8xf32>
    %3 = vector.multi_reduction <add>, %1, %cst [1] : vector<8x32xf32> to vector<8xf32>
    %4 = vector.shape_cast %3 : vector<8xf32> to vector<8x1xf32>
    %cst_4 = arith.constant 3.200000e+01 : f32
    %5 = vector.broadcast %cst_4 : f32 to vector<8x1xf32>
    %6 = arith.divf %4, %5 : vector<8x1xf32>
    %7 = vector.broadcast %6 : vector<8x1xf32> to vector<8x32xf32>
    %8 = arith.subf %1, %7 : vector<8x32xf32>
    %9 = arith.mulf %8, %8 : vector<8x32xf32>
    %cst_5 = arith.constant dense<0.000000e+00> : vector<8xf32>
    %10 = vector.multi_reduction <add>, %9, %cst_5 [1] : vector<8x32xf32> to vector<8xf32>
    %11 = vector.shape_cast %10 : vector<8xf32> to vector<8x1xf32>
    %cst_6 = arith.constant 3.200000e+01 : f32
    %12 = vector.broadcast %cst_6 : f32 to vector<8x1xf32>
    %13 = arith.divf %11, %12 : vector<8x1xf32>
    %cst_7 = arith.constant 9.99999974E-6 : f32
    %14 = vector.broadcast %cst_7 : f32 to vector<8x1xf32>
    %15 = arith.addf %13, %14 : vector<8x1xf32>
    %16 = math.rsqrt %15 : vector<8x1xf32>
    %17 = vector.broadcast %16 : vector<8x1xf32> to vector<8x32xf32>
    %18 = arith.mulf %8, %17 : vector<8x32xf32>
    %19 = vector.broadcast %2 : vector<1x32xf32> to vector<8x32xf32>
    %20 = arith.mulf %18, %19 : vector<8x32xf32>
    %21 = arith.truncf %20 : vector<8x32xf32> to vector<8x32xbf16>
    %c0_8 = arith.constant 0 : index
    %c0_9 = arith.constant 0 : index
    %22 = vector.load %arg6[%c0_8, %c0_9] : memref<32x16xbf16, #tpu.memory_space<vmem>>, vector<32x16xbf16>
    %cst_10 = arith.constant dense<0.000000e+00> : vector<8x16xf32>
    %23 = tpu.matmul %21, %22, %cst_10 {dimension_numbers = #tpu.dot_dimension_numbers<[1], [0], [0], [1], [0, 0, 1, 1], [], []>} : vector<8x32xbf16>, vector<32x16xbf16>, vector<8x16xf32> -> vector<8x16xf32>
    %c0_11 = arith.constant 0 : index
    %c0_12 = arith.constant 0 : index
    %24 = vector.load %arg3[%c0_11, %c0_12] : memref<1x8xf32, #tpu.memory_space<vmem>>, vector<1x8xf32>
    %25 = vector.extract_strided_slice %23 {offsets = [0, 0], sizes = [8, 8], strides = [1, 1]} : vector<8x16xf32> to vector<8x8xf32>
    %26 = arith.mulf %25, %25 : vector<8x8xf32>
    %cst_13 = arith.constant dense<0.000000e+00> : vector<8xf32>
    %27 = vector.multi_reduction <add>, %26, %cst_13 [1] : vector<8x8xf32> to vector<8xf32>
    %28 = vector.shape_cast %27 : vector<8xf32> to vector<8x1xf32>
    %cst_14 = arith.constant 1.000000e-24 : f32
    %29 = vector.broadcast %cst_14 : f32 to vector<8x1xf32>
    %30 = arith.maximumf %28, %29 : vector<8x1xf32>
    %31 = math.rsqrt %30 : vector<8x1xf32>
    %32 = vector.broadcast %31 : vector<8x1xf32> to vector<8x8xf32>
    %33 = arith.mulf %25, %32 : vector<8x8xf32>
    %34 = vector.broadcast %24 : vector<1x8xf32> to vector<8x8xf32>
    %35 = arith.mulf %33, %34 : vector<8x8xf32>
    %36 = vector.extract_strided_slice %23 {offsets = [0, 8], sizes = [8, 8], strides = [1, 1]} : vector<8x16xf32> to vector<8x8xf32>
    %37 = arith.mulf %36, %36 : vector<8x8xf32>
    %cst_15 = arith.constant dense<0.000000e+00> : vector<8xf32>
    %38 = vector.multi_reduction <add>, %37, %cst_15 [1] : vector<8x8xf32> to vector<8xf32>
    %39 = vector.shape_cast %38 : vector<8xf32> to vector<8x1xf32>
    %cst_16 = arith.constant 1.000000e-24 : f32
    %40 = vector.broadcast %cst_16 : f32 to vector<8x1xf32>
    %41 = arith.maximumf %39, %40 : vector<8x1xf32>
    %42 = math.rsqrt %41 : vector<8x1xf32>
    %43 = vector.broadcast %42 : vector<8x1xf32> to vector<8x8xf32>
    %44 = arith.mulf %36, %43 : vector<8x8xf32>
    %45 = vector.broadcast %24 : vector<1x8xf32> to vector<8x8xf32>
    %46 = arith.mulf %44, %45 : vector<8x8xf32>
    %47 = tpu.concatenate %35, %46 in 1 : vector<8x8xf32>, vector<8x8xf32> -> vector<8x16xf32>
    %48 = arith.truncf %47 : vector<8x16xf32> to vector<8x16xbf16>
    %c0_17 = arith.constant 0 : index
    %c0_18 = arith.constant 0 : index
    %c0_19 = arith.constant 0 : index
    %49 = vector.load %arg9[%c0_17, %c0_18, %c0_19] : memref<1x8x16xbf16, #tpu.memory_space<vmem>>, vector<1x8x16xbf16>
    %50 = vector.shape_cast %49 : vector<1x8x16xbf16> to vector<8x16xbf16>
    %51 = vector.shape_cast %48 : vector<8x16xbf16> to vector<1x8x16xbf16>
    tpu.vector_store %arg9[%c0_17, %c0_18, %c0_19], %51 {strides = array<i32>} : memref<1x8x16xbf16, #tpu.memory_space<vmem>>, vector<1x8x16xbf16>,
    %c0_20 = arith.constant 0 : index
    %c0_21 = arith.constant 0 : index
    %52 = vector.load %arg7[%c0_20, %c0_21] : memref<32x16xbf16, #tpu.memory_space<vmem>>, vector<32x16xbf16>
    %cst_22 = arith.constant dense<0.000000e+00> : vector<8x16xf32>
    %53 = tpu.matmul %21, %52, %cst_22 {dimension_numbers = #tpu.dot_dimension_numbers<[1], [0], [0], [1], [0, 0, 1, 1], [], []>} : vector<8x32xbf16>, vector<32x16xbf16>, vector<8x16xf32> -> vector<8x16xf32>
    %c0_23 = arith.constant 0 : index
    %c0_24 = arith.constant 0 : index
    %54 = vector.load %arg4[%c0_23, %c0_24] : memref<1x8xf32, #tpu.memory_space<vmem>>, vector<1x8xf32>
    %55 = vector.extract_strided_slice %53 {offsets = [0, 0], sizes = [8, 8], strides = [1, 1]} : vector<8x16xf32> to vector<8x8xf32>
    %56 = arith.mulf %55, %55 : vector<8x8xf32>
    %cst_25 = arith.constant dense<0.000000e+00> : vector<8xf32>
    %57 = vector.multi_reduction <add>, %56, %cst_25 [1] : vector<8x8xf32> to vector<8xf32>
    %58 = vector.shape_cast %57 : vector<8xf32> to vector<8x1xf32>
    %cst_26 = arith.constant 1.000000e-24 : f32
    %59 = vector.broadcast %cst_26 : f32 to vector<8x1xf32>
    %60 = arith.maximumf %58, %59 : vector<8x1xf32>
    %61 = math.rsqrt %60 : vector<8x1xf32>
    %62 = vector.broadcast %61 : vector<8x1xf32> to vector<8x8xf32>
    %63 = arith.mulf %55, %62 : vector<8x8xf32>
    %64 = vector.broadcast %54 : vector<1x8xf32> to vector<8x8xf32>
    %65 = arith.mulf %63, %64 : vector<8x8xf32>
    %66 = vector.extract_strided_slice %53 {offsets = [0, 8], sizes = [8, 8], strides = [1, 1]} : vector<8x16xf32> to vector<8x8xf32>
    %67 = arith.mulf %66, %66 : vector<8x8xf32>
    %cst_27 = arith.constant dense<0.000000e+00> : vector<8xf32>
    %68 = vector.multi_reduction <add>, %67, %cst_27 [1] : vector<8x8xf32> to vector<8xf32>
    %69 = vector.shape_cast %68 : vector<8xf32> to vector<8x1xf32>
    %cst_28 = arith.constant 1.000000e-24 : f32
    %70 = vector.broadcast %cst_28 : f32 to vector<8x1xf32>
    %71 = arith.maximumf %69, %70 : vector<8x1xf32>
    %72 = math.rsqrt %71 : vector<8x1xf32>
    %73 = vector.broadcast %72 : vector<8x1xf32> to vector<8x8xf32>
    %74 = arith.mulf %66, %73 : vector<8x8xf32>
    %75 = vector.broadcast %54 : vector<1x8xf32> to vector<8x8xf32>
    %76 = arith.mulf %74, %75 : vector<8x8xf32>
    %77 = tpu.concatenate %65, %76 in 1 : vector<8x8xf32>, vector<8x8xf32> -> vector<8x16xf32>
    %78 = arith.truncf %77 : vector<8x16xf32> to vector<8x16xbf16>
    %c0_29 = arith.constant 0 : index
    %c0_30 = arith.constant 0 : index
    %c0_31 = arith.constant 0 : index
    %79 = vector.load %arg10[%c0_29, %c0_30, %c0_31] : memref<1x8x16xbf16, #tpu.memory_space<vmem>>, vector<1x8x16xbf16>
    %80 = vector.shape_cast %79 : vector<1x8x16xbf16> to vector<8x16xbf16>
    %81 = vector.shape_cast %78 : vector<8x16xbf16> to vector<1x8x16xbf16>
    tpu.vector_store %arg10[%c0_29, %c0_30, %c0_31], %81 {strides = array<i32>} : memref<1x8x16xbf16, #tpu.memory_space<vmem>>, vector<1x8x16xbf16>,
    %c0_32 = arith.constant 0 : index
    %c0_33 = arith.constant 0 : index
    %82 = vector.load %arg8[%c0_32, %c0_33] : memref<32x16xbf16, #tpu.memory_space<vmem>>, vector<32x16xbf16>
    %cst_34 = arith.constant dense<0.000000e+00> : vector<8x16xf32>
    %83 = tpu.matmul %21, %82, %cst_34 {dimension_numbers = #tpu.dot_dimension_numbers<[1], [0], [0], [1], [0, 0, 1, 1], [], []>} : vector<8x32xbf16>, vector<32x16xbf16>, vector<8x16xf32> -> vector<8x16xf32>
    %84 = arith.truncf %83 : vector<8x16xf32> to vector<8x16xbf16>
    %c0_35 = arith.constant 0 : index
    %c0_36 = arith.constant 0 : index
    %c0_37 = arith.constant 0 : index
    %85 = vector.load %arg11[%c0_35, %c0_36, %c0_37] : memref<1x8x16xbf16, #tpu.memory_space<vmem>>, vector<1x8x16xbf16>
    %86 = vector.shape_cast %85 : vector<1x8x16xbf16> to vector<8x16xbf16>
    %87 = vector.shape_cast %84 : vector<8x16xbf16> to vector<1x8x16xbf16>
    tpu.vector_store %arg11[%c0_35, %c0_36, %c0_37], %87 {strides = array<i32>} : memref<1x8x16xbf16, #tpu.memory_space<vmem>>, vector<1x8x16xbf16>,
    return
  }
  func.func @transform_0(%arg0: i32, %arg1: i32) -> (i32, i32) {
    %c0_i32 = arith.constant 0 : i32
    %c0_i32_0 = arith.constant 0 : i32
    %c0_i32_1 = arith.constant 0 : i32
    return %c0_i32, %c0_i32_0 : i32, i32
  }
  func.func @transform_1(%arg0: i32, %arg1: i32) -> (i32, i32) {
    %c0_i32 = arith.constant 0 : i32
    %c0_i32_0 = arith.constant 0 : i32
    %c0_i32_1 = arith.constant 0 : i32
    return %c0_i32, %c0_i32_0 : i32, i32
  }
  func.func @transform_2(%arg0: i32, %arg1: i32) -> (i32, i32) {
    %c0_i32 = arith.constant 0 : i32
    %c0_i32_0 = arith.constant 0 : i32
    %c0_i32_1 = arith.constant 0 : i32
    return %c0_i32, %c0_i32_0 : i32, i32
  }
  func.func @transform_3(%arg0: i32, %arg1: i32) -> (i32, i32, i32) {
    %c0_i32 = arith.constant 0 : i32
    %c0_i32_0 = arith.constant 0 : i32
    return %arg0, %arg1, %c0_i32 : i32, i32, i32
  }
  func.func @transform_4(%arg0: i32, %arg1: i32) -> (i32, i32) {
    %c0_i32 = arith.constant 0 : i32
    %c0_i32_0 = arith.constant 0 : i32
    %c0_i32_1 = arith.constant 0 : i32
    return %c0_i32, %c0_i32_0 : i32, i32
  }
  func.func @transform_5(%arg0: i32, %arg1: i32) -> (i32, i32) {
    %c0_i32 = arith.constant 0 : i32
    %c0_i32_0 = arith.constant 0 : i32
    %c0_i32_1 = arith.constant 0 : i32
    return %c0_i32, %c0_i32_0 : i32, i32
  }
  func.func @transform_6(%arg0: i32, %arg1: i32) -> (i32, i32) {
    %c0_i32 = arith.constant 0 : i32
    %c0_i32_0 = arith.constant 0 : i32
    %c0_i32_1 = arith.constant 0 : i32
    return %c0_i32, %c0_i32_0 : i32, i32
  }
  func.func @transform_7(%arg0: i32, %arg1: i32) -> (i32, i32, i32) {
    %c0_i32 = arith.constant 0 : i32
    %c0_i32_0 = arith.constant 0 : i32
    return %arg0, %arg1, %c0_i32 : i32, i32, i32
  }
  func.func @transform_8(%arg0: i32, %arg1: i32) -> (i32, i32, i32) {
    %c0_i32 = arith.constant 0 : i32
    %c0_i32_0 = arith.constant 0 : i32
    return %arg0, %arg1, %c0_i32 : i32, i32, i32
  }
  func.func @transform_9(%arg0: i32, %arg1: i32) -> (i32, i32, i32) {
    %c0_i32 = arith.constant 0 : i32
    %c0_i32_0 = arith.constant 0 : i32
    return %arg0, %arg1, %c0_i32 : i32, i32, i32
  }
}

module attributes {stable_mosaic.version = 11 : i64} {
  func.func @_flash_attn_kernel(%arg0: i32, %arg1: i32, %arg2: i32, %arg3: memref<1x16xf32, #tpu.memory_space<vmem>>, %arg4: memref<1x16xf32, #tpu.memory_space<vmem>>, %arg5: memref<1x8x16xbf16, #tpu.memory_space<vmem>>, %arg6: memref<1x8x16xbf16, #tpu.memory_space<vmem>>, %arg7: memref<1x8x16xbf16, #tpu.memory_space<vmem>>, %arg8: memref<1x8x16xbf16, #tpu.memory_space<vmem>>, %arg9: memref<8x2xf32, #tpu.memory_space<vmem>>, %arg10: memref<8x2xf32, #tpu.memory_space<vmem>>, %arg11: memref<8x16xf32, #tpu.memory_space<vmem>>) attributes {dimension_semantics = [#tpu.dimension_semantics<parallel>, #tpu.dimension_semantics<parallel>, #tpu.dimension_semantics<arbitrary>], iteration_bounds = array<i64: 2, 1, 1>, scalar_prefetch = 0 : i64, scratch_operands = 3 : i64, tpu.core_type = #tpu.core_type<tc>, window_params = [{pipeline_mode = #tpu.pipeline_mode<synchronous>, transform_indices = @transform_0, window_bounds = array<i64: 1, 16>}, {pipeline_mode = #tpu.pipeline_mode<synchronous>, transform_indices = @transform_1, window_bounds = array<i64: 1, 16>}, {transform_indices = @transform_2, window_bounds = array<i64: 1, 8, 16>}, {transform_indices = @transform_3, window_bounds = array<i64: 1, 8, 16>}, {transform_indices = @transform_4, window_bounds = array<i64: 1, 8, 16>}, {transform_indices = @transform_5, window_bounds = array<i64: 1, 8, 16>}]} {
    %c0 = arith.constant 0 : index
    %c0_0 = arith.constant 0 : index
    %c0_1 = arith.constant 0 : index
    %0 = vector.load %arg5[%c0, %c0_0, %c0_1] : memref<1x8x16xbf16, #tpu.memory_space<vmem>>, vector<1x8x16xbf16>
    %1 = vector.shape_cast %0 : vector<1x8x16xbf16> to vector<8x16xbf16>
    %c0_2 = arith.constant 0 : index
    %c0_3 = arith.constant 0 : index
    %c0_4 = arith.constant 0 : index
    %2 = vector.load %arg6[%c0_2, %c0_3, %c0_4] : memref<1x8x16xbf16, #tpu.memory_space<vmem>>, vector<1x8x16xbf16>
    %3 = vector.shape_cast %2 : vector<1x8x16xbf16> to vector<8x16xbf16>
    %c0_5 = arith.constant 0 : index
    %c0_6 = arith.constant 0 : index
    %c0_7 = arith.constant 0 : index
    %4 = vector.load %arg7[%c0_5, %c0_6, %c0_7] : memref<1x8x16xbf16, #tpu.memory_space<vmem>>, vector<1x8x16xbf16>
    %5 = vector.shape_cast %4 : vector<1x8x16xbf16> to vector<8x16xbf16>
    %c0_i32 = arith.constant 0 : i32
    %6 = arith.cmpi eq, %arg2, %c0_i32 : i32
    %7 = arith.extui %6 : i1 to i32
    %c0_i32_8 = arith.constant 0 : i32
    %8 = arith.cmpi ne, %7, %c0_i32_8 : i32
    scf.if %8 {
      %c0_40 = arith.constant 0 : index
      %c0_41 = arith.constant 0 : index
      %66 = vector.load %arg3[%c0_40, %c0_41] : memref<1x16xf32, #tpu.memory_space<vmem>>, vector<1x16xf32>
      %cst_42 = arith.constant 1.000000e+00 : f32
      %67 = vector.broadcast %cst_42 : f32 to vector<8x2xf32>
      %c0_43 = arith.constant 0 : index
      %c0_44 = arith.constant 0 : index
      %68 = vector.load %arg10[%c0_43, %c0_44] : memref<8x2xf32, #tpu.memory_space<vmem>>, vector<8x2xf32>
      tpu.vector_store %arg10[%c0_43, %c0_44], %67 {strides = array<i32>} : memref<8x2xf32, #tpu.memory_space<vmem>>, vector<8x2xf32>,
      %c0_45 = arith.constant 0 : index
      %c0_46 = arith.constant 0 : index
      %69 = vector.load %arg4[%c0_45, %c0_46] : memref<1x16xf32, #tpu.memory_space<vmem>>, vector<1x16xf32>
      %70 = vector.shape_cast %69 : vector<1x16xf32> to vector<1x16xf32>
      %71 = vector.broadcast %70 : vector<1x16xf32> to vector<8x16xf32>
      %c0_47 = arith.constant 0 : index
      %c0_48 = arith.constant 0 : index
      %72 = vector.load %arg11[%c0_47, %c0_48] : memref<8x16xf32, #tpu.memory_space<vmem>>, vector<8x16xf32>
      tpu.vector_store %arg11[%c0_47, %c0_48], %71 {strides = array<i32>} : memref<8x16xf32, #tpu.memory_space<vmem>>, vector<8x16xf32>,
      %73 = vector.extract_strided_slice %1 {offsets = [0, 0], sizes = [8, 8], strides = [1, 1]} : vector<8x16xbf16> to vector<8x8xbf16>
      %74 = arith.extf %73 : vector<8x8xbf16> to vector<8x8xf32>
      %75 = vector.extract_strided_slice %66 {offsets = [0, 0], sizes = [1, 8], strides = [1, 1]} : vector<1x16xf32> to vector<1x8xf32>
      %76 = vector.broadcast %75 : vector<1x8xf32> to vector<8x8xf32>
      %77 = arith.mulf %74, %76 : vector<8x8xf32>
      %cst_49 = arith.constant dense<0.000000e+00> : vector<8xf32>
      %78 = vector.multi_reduction <add>, %77, %cst_49 [1] : vector<8x8xf32> to vector<8xf32>
      %79 = vector.shape_cast %78 : vector<8xf32> to vector<8x1xf32>
      %80 = vector.extract_strided_slice %1 {offsets = [0, 8], sizes = [8, 8], strides = [1, 1]} : vector<8x16xbf16> to vector<8x8xbf16>
      %81 = arith.extf %80 : vector<8x8xbf16> to vector<8x8xf32>
      %82 = vector.extract_strided_slice %66 {offsets = [0, 8], sizes = [1, 8], strides = [1, 1]} : vector<1x16xf32> to vector<1x8xf32>
      %83 = vector.broadcast %82 : vector<1x8xf32> to vector<8x8xf32>
      %84 = arith.mulf %81, %83 : vector<8x8xf32>
      %cst_50 = arith.constant dense<0.000000e+00> : vector<8xf32>
      %85 = vector.multi_reduction <add>, %84, %cst_50 [1] : vector<8x8xf32> to vector<8xf32>
      %86 = vector.shape_cast %85 : vector<8xf32> to vector<8x1xf32>
      %87 = tpu.concatenate %79, %86 in 1 : vector<8x1xf32>, vector<8x1xf32> -> vector<8x2xf32>
      %c0_51 = arith.constant 0 : index
      %c0_52 = arith.constant 0 : index
      %88 = vector.load %arg9[%c0_51, %c0_52] : memref<8x2xf32, #tpu.memory_space<vmem>>, vector<8x2xf32>
      tpu.vector_store %arg9[%c0_51, %c0_52], %87 {strides = array<i32>} : memref<8x2xf32, #tpu.memory_space<vmem>>, vector<8x2xf32>,
    } else {
    }
    %9 = vector.extract_strided_slice %1 {offsets = [0, 0], sizes = [8, 8], strides = [1, 1]} : vector<8x16xbf16> to vector<8x8xbf16>
    %10 = vector.extract_strided_slice %3 {offsets = [0, 0], sizes = [8, 8], strides = [1, 1]} : vector<8x16xbf16> to vector<8x8xbf16>
    %cst = arith.constant dense<0.000000e+00> : vector<8x8xf32>
    %11 = tpu.matmul %9, %10, %cst {dimension_numbers = #tpu.dot_dimension_numbers<[1], [1], [0], [0], [0, 0, 1, 0], [], []>} : vector<8x8xbf16>, vector<8x8xbf16>, vector<8x8xf32> -> vector<8x8xf32>
    %c0_9 = arith.constant 0 : index
    %c0_10 = arith.constant 0 : index
    %12 = vector.load %arg9[%c0_9, %c0_10] : memref<8x2xf32, #tpu.memory_space<vmem>>, vector<8x1xf32>
    %cst_11 = arith.constant dense<0xFF800000> : vector<8xf32>
    %13 = vector.multi_reduction <maximumf>, %11, %cst_11 [1] : vector<8x8xf32> to vector<8xf32>
    %14 = vector.shape_cast %13 : vector<8xf32> to vector<8x1xf32>
    %15 = arith.maximumf %12, %14 : vector<8x1xf32>
    %16 = arith.subf %12, %15 : vector<8x1xf32>
    %17 = math.exp %16 : vector<8x1xf32>
    %18 = vector.broadcast %15 : vector<8x1xf32> to vector<8x8xf32>
    %19 = arith.subf %11, %18 : vector<8x8xf32>
    %20 = math.exp %19 : vector<8x8xf32>
    %c0_12 = arith.constant 0 : index
    %c0_13 = arith.constant 0 : index
    %21 = vector.load %arg9[%c0_12, %c0_13] : memref<8x2xf32, #tpu.memory_space<vmem>>, vector<8x1xf32>
    tpu.vector_store %arg9[%c0_12, %c0_13], %15 {strides = array<i32>} : memref<8x2xf32, #tpu.memory_space<vmem>>, vector<8x1xf32>,
    %c0_14 = arith.constant 0 : index
    %c0_15 = arith.constant 0 : index
    %22 = vector.load %arg10[%c0_14, %c0_15] : memref<8x2xf32, #tpu.memory_space<vmem>>, vector<8x1xf32>
    %23 = arith.mulf %17, %22 : vector<8x1xf32>
    %cst_16 = arith.constant dense<0.000000e+00> : vector<8xf32>
    %24 = vector.multi_reduction <add>, %20, %cst_16 [1] : vector<8x8xf32> to vector<8xf32>
    %25 = vector.shape_cast %24 : vector<8xf32> to vector<8x1xf32>
    %26 = arith.addf %23, %25 : vector<8x1xf32>
    %c0_17 = arith.constant 0 : index
    %c0_18 = arith.constant 0 : index
    %27 = vector.load %arg10[%c0_17, %c0_18] : memref<8x2xf32, #tpu.memory_space<vmem>>, vector<8x1xf32>
    tpu.vector_store %arg10[%c0_17, %c0_18], %26 {strides = array<i32>} : memref<8x2xf32, #tpu.memory_space<vmem>>, vector<8x1xf32>,
    %c0_19 = arith.constant 0 : index
    %c0_20 = arith.constant 0 : index
    %28 = vector.load %arg11[%c0_19, %c0_20] : memref<8x16xf32, #tpu.memory_space<vmem>>, vector<8x8xf32>
    %29 = vector.broadcast %17 : vector<8x1xf32> to vector<8x8xf32>
    %30 = arith.mulf %29, %28 : vector<8x8xf32>
    %31 = arith.truncf %20 : vector<8x8xf32> to vector<8x8xbf16>
    %32 = vector.extract_strided_slice %5 {offsets = [0, 0], sizes = [8, 8], strides = [1, 1]} : vector<8x16xbf16> to vector<8x8xbf16>
    %cst_21 = arith.constant dense<0.000000e+00> : vector<8x8xf32>
    %33 = tpu.matmul %31, %32, %cst_21 {dimension_numbers = #tpu.dot_dimension_numbers<[1], [0], [0], [1], [0, 0, 1, 1], [], []>} : vector<8x8xbf16>, vector<8x8xbf16>, vector<8x8xf32> -> vector<8x8xf32>
    %34 = arith.addf %30, %33 : vector<8x8xf32>
    %c0_22 = arith.constant 0 : index
    %c0_23 = arith.constant 0 : index
    %35 = vector.load %arg11[%c0_22, %c0_23] : memref<8x16xf32, #tpu.memory_space<vmem>>, vector<8x8xf32>
    tpu.vector_store %arg11[%c0_22, %c0_23], %34 {strides = array<i32>} : memref<8x16xf32, #tpu.memory_space<vmem>>, vector<8x8xf32>,
    %36 = vector.extract_strided_slice %1 {offsets = [0, 8], sizes = [8, 8], strides = [1, 1]} : vector<8x16xbf16> to vector<8x8xbf16>
    %37 = vector.extract_strided_slice %3 {offsets = [0, 8], sizes = [8, 8], strides = [1, 1]} : vector<8x16xbf16> to vector<8x8xbf16>
    %cst_24 = arith.constant dense<0.000000e+00> : vector<8x8xf32>
    %38 = tpu.matmul %36, %37, %cst_24 {dimension_numbers = #tpu.dot_dimension_numbers<[1], [1], [0], [0], [0, 0, 1, 0], [], []>} : vector<8x8xbf16>, vector<8x8xbf16>, vector<8x8xf32> -> vector<8x8xf32>
    %c0_25 = arith.constant 0 : index
    %c1 = arith.constant 1 : index
    %39 = vector.load %arg9[%c0_25, %c1] : memref<8x2xf32, #tpu.memory_space<vmem>>, vector<8x1xf32>
    %cst_26 = arith.constant dense<0xFF800000> : vector<8xf32>
    %40 = vector.multi_reduction <maximumf>, %38, %cst_26 [1] : vector<8x8xf32> to vector<8xf32>
    %41 = vector.shape_cast %40 : vector<8xf32> to vector<8x1xf32>
    %42 = arith.maximumf %39, %41 : vector<8x1xf32>
    %43 = arith.subf %39, %42 : vector<8x1xf32>
    %44 = math.exp %43 : vector<8x1xf32>
    %45 = vector.broadcast %42 : vector<8x1xf32> to vector<8x8xf32>
    %46 = arith.subf %38, %45 : vector<8x8xf32>
    %47 = math.exp %46 : vector<8x8xf32>
    %c0_27 = arith.constant 0 : index
    %c1_28 = arith.constant 1 : index
    %48 = vector.load %arg9[%c0_27, %c1_28] : memref<8x2xf32, #tpu.memory_space<vmem>>, vector<8x1xf32>
    tpu.vector_store %arg9[%c0_27, %c1_28], %42 {strides = array<i32>} : memref<8x2xf32, #tpu.memory_space<vmem>>, vector<8x1xf32>,
    %c0_29 = arith.constant 0 : index
    %c1_30 = arith.constant 1 : index
    %49 = vector.load %arg10[%c0_29, %c1_30] : memref<8x2xf32, #tpu.memory_space<vmem>>, vector<8x1xf32>
    %50 = arith.mulf %44, %49 : vector<8x1xf32>
    %cst_31 = arith.constant dense<0.000000e+00> : vector<8xf32>
    %51 = vector.multi_reduction <add>, %47, %cst_31 [1] : vector<8x8xf32> to vector<8xf32>
    %52 = vector.shape_cast %51 : vector<8xf32> to vector<8x1xf32>
    %53 = arith.addf %50, %52 : vector<8x1xf32>
    %c0_32 = arith.constant 0 : index
    %c1_33 = arith.constant 1 : index
    %54 = vector.load %arg10[%c0_32, %c1_33] : memref<8x2xf32, #tpu.memory_space<vmem>>, vector<8x1xf32>
    tpu.vector_store %arg10[%c0_32, %c1_33], %53 {strides = array<i32>} : memref<8x2xf32, #tpu.memory_space<vmem>>, vector<8x1xf32>,
    %c0_34 = arith.constant 0 : index
    %c8 = arith.constant 8 : index
    %55 = vector.load %arg11[%c0_34, %c8] : memref<8x16xf32, #tpu.memory_space<vmem>>, vector<8x8xf32>
    %56 = vector.broadcast %44 : vector<8x1xf32> to vector<8x8xf32>
    %57 = arith.mulf %56, %55 : vector<8x8xf32>
    %58 = arith.truncf %47 : vector<8x8xf32> to vector<8x8xbf16>
    %59 = vector.extract_strided_slice %5 {offsets = [0, 8], sizes = [8, 8], strides = [1, 1]} : vector<8x16xbf16> to vector<8x8xbf16>
    %cst_35 = arith.constant dense<0.000000e+00> : vector<8x8xf32>
    %60 = tpu.matmul %58, %59, %cst_35 {dimension_numbers = #tpu.dot_dimension_numbers<[1], [0], [0], [1], [0, 0, 1, 1], [], []>} : vector<8x8xbf16>, vector<8x8xbf16>, vector<8x8xf32> -> vector<8x8xf32>
    %61 = arith.addf %57, %60 : vector<8x8xf32>
    %c0_36 = arith.constant 0 : index
    %c8_37 = arith.constant 8 : index
    %62 = vector.load %arg11[%c0_36, %c8_37] : memref<8x16xf32, #tpu.memory_space<vmem>>, vector<8x8xf32>
    tpu.vector_store %arg11[%c0_36, %c8_37], %61 {strides = array<i32>} : memref<8x16xf32, #tpu.memory_space<vmem>>, vector<8x8xf32>,
    %c0_i32_38 = arith.constant 0 : i32
    %63 = arith.cmpi eq, %arg2, %c0_i32_38 : i32
    %64 = arith.extui %63 : i1 to i32
    %c0_i32_39 = arith.constant 0 : i32
    %65 = arith.cmpi ne, %64, %c0_i32_39 : i32
    scf.if %65 {
      %c0_40 = arith.constant 0 : index
      %c0_41 = arith.constant 0 : index
      %66 = vector.load %arg11[%c0_40, %c0_41] : memref<8x16xf32, #tpu.memory_space<vmem>>, vector<8x8xf32>
      %c0_42 = arith.constant 0 : index
      %c0_43 = arith.constant 0 : index
      %67 = vector.load %arg10[%c0_42, %c0_43] : memref<8x2xf32, #tpu.memory_space<vmem>>, vector<8x1xf32>
      %68 = tpu.reciprocal %67 {approx = true} : vector<8x1xf32> -> vector<8x1xf32>
      %69 = vector.broadcast %68 : vector<8x1xf32> to vector<8x8xf32>
      %70 = arith.mulf %66, %69 : vector<8x8xf32>
      %c0_44 = arith.constant 0 : index
      %c8_45 = arith.constant 8 : index
      %71 = vector.load %arg11[%c0_44, %c8_45] : memref<8x16xf32, #tpu.memory_space<vmem>>, vector<8x8xf32>
      %c0_46 = arith.constant 0 : index
      %c1_47 = arith.constant 1 : index
      %72 = vector.load %arg10[%c0_46, %c1_47] : memref<8x2xf32, #tpu.memory_space<vmem>>, vector<8x1xf32>
      %73 = tpu.reciprocal %72 {approx = true} : vector<8x1xf32> -> vector<8x1xf32>
      %74 = vector.broadcast %73 : vector<8x1xf32> to vector<8x8xf32>
      %75 = arith.mulf %71, %74 : vector<8x8xf32>
      %76 = tpu.concatenate %70, %75 in 1 : vector<8x8xf32>, vector<8x8xf32> -> vector<8x16xf32>
      %77 = arith.truncf %76 : vector<8x16xf32> to vector<8x16xbf16>
      %c0_48 = arith.constant 0 : index
      %c0_49 = arith.constant 0 : index
      %c0_50 = arith.constant 0 : index
      %78 = vector.load %arg8[%c0_48, %c0_49, %c0_50] : memref<1x8x16xbf16, #tpu.memory_space<vmem>>, vector<1x8x16xbf16>
      %79 = vector.shape_cast %78 : vector<1x8x16xbf16> to vector<8x16xbf16>
      %80 = vector.shape_cast %77 : vector<8x16xbf16> to vector<1x8x16xbf16>
      tpu.vector_store %arg8[%c0_48, %c0_49, %c0_50], %80 {strides = array<i32>} : memref<1x8x16xbf16, #tpu.memory_space<vmem>>, vector<1x8x16xbf16>,
    } else {
    }
    return
  }
  func.func @transform_0(%arg0: i32, %arg1: i32, %arg2: i32) -> (i32, i32) {
    %c0_i32 = arith.constant 0 : i32
    %c0_i32_0 = arith.constant 0 : i32
    %c0_i32_1 = arith.constant 0 : i32
    return %c0_i32, %c0_i32_0 : i32, i32
  }
  func.func @transform_1(%arg0: i32, %arg1: i32, %arg2: i32) -> (i32, i32) {
    %c0_i32 = arith.constant 0 : i32
    %c0_i32_0 = arith.constant 0 : i32
    %c0_i32_1 = arith.constant 0 : i32
    return %c0_i32, %c0_i32_0 : i32, i32
  }
  func.func @transform_2(%arg0: i32, %arg1: i32, %arg2: i32) -> (i32, i32, i32) {
    %c0_i32 = arith.constant 0 : i32
    %c0_i32_0 = arith.constant 0 : i32
    return %arg0, %arg1, %c0_i32 : i32, i32, i32
  }
  func.func @transform_3(%arg0: i32, %arg1: i32, %arg2: i32) -> (i32, i32, i32) {
    %c0_i32 = arith.constant 0 : i32
    %c0_i32_0 = arith.constant 0 : i32
    return %arg0, %arg2, %c0_i32 : i32, i32, i32
  }
  func.func @transform_4(%arg0: i32, %arg1: i32, %arg2: i32) -> (i32, i32, i32) {
    %c0_i32 = arith.constant 0 : i32
    %c0_i32_0 = arith.constant 0 : i32
    return %arg0, %arg2, %c0_i32 : i32, i32, i32
  }
  func.func @transform_5(%arg0: i32, %arg1: i32, %arg2: i32) -> (i32, i32, i32) {
    %c0_i32 = arith.constant 0 : i32
    %c0_i32_0 = arith.constant 0 : i32
    return %arg0, %arg1, %c0_i32 : i32, i32, i32
  }
}

module attributes {stable_mosaic.version = 11 : i64} {
  func.func @_matmul_residual_kernel(%arg0: i32, %arg1: i32, %arg2: memref<16x16xbf16, #tpu.memory_space<vmem>>, %arg3: memref<16x32xbf16, #tpu.memory_space<vmem>>, %arg4: memref<16x32xf32, #tpu.memory_space<vmem>>, %arg5: memref<16x32xf32, #tpu.memory_space<vmem>>) attributes {dimension_semantics = [#tpu.dimension_semantics<parallel>, #tpu.dimension_semantics<parallel>], iteration_bounds = array<i64: 1, 1>, scalar_prefetch = 0 : i64, scratch_operands = 0 : i64, tpu.core_type = #tpu.core_type<tc>, window_params = [{transform_indices = @transform_0, window_bounds = array<i64: 16, 16>}, {transform_indices = @transform_1, window_bounds = array<i64: 16, 32>}, {transform_indices = @transform_2, window_bounds = array<i64: 16, 32>}, {transform_indices = @transform_3, window_bounds = array<i64: 16, 32>}]} {
    %c0 = arith.constant 0 : index
    %c0_0 = arith.constant 0 : index
    %0 = vector.load %arg2[%c0, %c0_0] : memref<16x16xbf16, #tpu.memory_space<vmem>>, vector<16x16xbf16>
    %c0_1 = arith.constant 0 : index
    %c0_2 = arith.constant 0 : index
    %1 = vector.load %arg3[%c0_1, %c0_2] : memref<16x32xbf16, #tpu.memory_space<vmem>>, vector<16x32xbf16>
    %cst = arith.constant dense<0.000000e+00> : vector<16x32xf32>
    %2 = tpu.matmul %0, %1, %cst {dimension_numbers = #tpu.dot_dimension_numbers<[1], [0], [0], [1], [0, 0, 1, 1], [], []>} : vector<16x16xbf16>, vector<16x32xbf16>, vector<16x32xf32> -> vector<16x32xf32>
    %c0_3 = arith.constant 0 : index
    %c0_4 = arith.constant 0 : index
    %3 = vector.load %arg4[%c0_3, %c0_4] : memref<16x32xf32, #tpu.memory_space<vmem>>, vector<16x32xf32>
    %4 = arith.addf %2, %3 : vector<16x32xf32>
    %c0_5 = arith.constant 0 : index
    %c0_6 = arith.constant 0 : index
    %5 = vector.load %arg5[%c0_5, %c0_6] : memref<16x32xf32, #tpu.memory_space<vmem>>, vector<16x32xf32>
    tpu.vector_store %arg5[%c0_5, %c0_6], %4 {strides = array<i32>} : memref<16x32xf32, #tpu.memory_space<vmem>>, vector<16x32xf32>,
    return
  }
  func.func @transform_0(%arg0: i32, %arg1: i32) -> (i32, i32) {
    %c0_i32 = arith.constant 0 : i32
    %c0_i32_0 = arith.constant 0 : i32
    return %arg0, %c0_i32 : i32, i32
  }
  func.func @transform_1(%arg0: i32, %arg1: i32) -> (i32, i32) {
    %c0_i32 = arith.constant 0 : i32
    %c0_i32_0 = arith.constant 0 : i32
    return %c0_i32, %arg1 : i32, i32
  }
  func.func @transform_2(%arg0: i32, %arg1: i32) -> (i32, i32) {
    %c0_i32 = arith.constant 0 : i32
    return %arg0, %arg1 : i32, i32
  }
  func.func @transform_3(%arg0: i32, %arg1: i32) -> (i32, i32) {
    %c0_i32 = arith.constant 0 : i32
    return %arg0, %arg1 : i32, i32
  }
}

module attributes {stable_mosaic.version = 11 : i64} {
  func.func @_ln_proj_kernel(%arg0: i32, %arg1: i32, %arg2: memref<1x32xf32, #tpu.memory_space<vmem>>, %arg3: memref<1x8xf32, #tpu.memory_space<vmem>>, %arg4: memref<1x8x32xf32, #tpu.memory_space<vmem>>, %arg5: memref<32x16xbf16, #tpu.memory_space<vmem>>, %arg6: memref<1x8x16xbf16, #tpu.memory_space<vmem>>) attributes {dimension_semantics = [#tpu.dimension_semantics<parallel>, #tpu.dimension_semantics<parallel>], iteration_bounds = array<i64: 2, 1>, scalar_prefetch = 0 : i64, scratch_operands = 0 : i64, tpu.core_type = #tpu.core_type<tc>, window_params = [{pipeline_mode = #tpu.pipeline_mode<synchronous>, transform_indices = @transform_0, window_bounds = array<i64: 1, 32>}, {pipeline_mode = #tpu.pipeline_mode<synchronous>, transform_indices = @transform_1, window_bounds = array<i64: 1, 8>}, {transform_indices = @transform_2, window_bounds = array<i64: 1, 8, 32>}, {pipeline_mode = #tpu.pipeline_mode<synchronous>, transform_indices = @transform_3, window_bounds = array<i64: 32, 16>}, {transform_indices = @transform_4, window_bounds = array<i64: 1, 8, 16>}]} {
    %c0 = arith.constant 0 : index
    %c0_0 = arith.constant 0 : index
    %c0_1 = arith.constant 0 : index
    %0 = vector.load %arg4[%c0, %c0_0, %c0_1] : memref<1x8x32xf32, #tpu.memory_space<vmem>>, vector<1x8x32xf32>
    %1 = vector.shape_cast %0 : vector<1x8x32xf32> to vector<8x32xf32>
    %c0_2 = arith.constant 0 : index
    %c0_3 = arith.constant 0 : index
    %2 = vector.load %arg2[%c0_2, %c0_3] : memref<1x32xf32, #tpu.memory_space<vmem>>, vector<1x32xf32>
    %cst = arith.constant dense<0.000000e+00> : vector<8xf32>
    %3 = vector.multi_reduction <add>, %1, %cst [1] : vector<8x32xf32> to vector<8xf32>
    %4 = vector.shape_cast %3 : vector<8xf32> to vector<8x1xf32>
    %cst_4 = arith.constant 3.200000e+01 : f32
    %5 = vector.broadcast %cst_4 : f32 to vector<8x1xf32>
    %6 = arith.divf %4, %5 : vector<8x1xf32>
    %7 = vector.broadcast %6 : vector<8x1xf32> to vector<8x32xf32>
    %8 = arith.subf %1, %7 : vector<8x32xf32>
    %9 = arith.mulf %8, %8 : vector<8x32xf32>
    %cst_5 = arith.constant dense<0.000000e+00> : vector<8xf32>
    %10 = vector.multi_reduction <add>, %9, %cst_5 [1] : vector<8x32xf32> to vector<8xf32>
    %11 = vector.shape_cast %10 : vector<8xf32> to vector<8x1xf32>
    %cst_6 = arith.constant 3.200000e+01 : f32
    %12 = vector.broadcast %cst_6 : f32 to vector<8x1xf32>
    %13 = arith.divf %11, %12 : vector<8x1xf32>
    %cst_7 = arith.constant 9.99999974E-6 : f32
    %14 = vector.broadcast %cst_7 : f32 to vector<8x1xf32>
    %15 = arith.addf %13, %14 : vector<8x1xf32>
    %16 = math.rsqrt %15 : vector<8x1xf32>
    %17 = vector.broadcast %16 : vector<8x1xf32> to vector<8x32xf32>
    %18 = arith.mulf %8, %17 : vector<8x32xf32>
    %19 = vector.broadcast %2 : vector<1x32xf32> to vector<8x32xf32>
    %20 = arith.mulf %18, %19 : vector<8x32xf32>
    %21 = arith.truncf %20 : vector<8x32xf32> to vector<8x32xbf16>
    %c0_8 = arith.constant 0 : index
    %c0_9 = arith.constant 0 : index
    %22 = vector.load %arg5[%c0_8, %c0_9] : memref<32x16xbf16, #tpu.memory_space<vmem>>, vector<32x16xbf16>
    %cst_10 = arith.constant dense<0.000000e+00> : vector<8x16xf32>
    %23 = tpu.matmul %21, %22, %cst_10 {dimension_numbers = #tpu.dot_dimension_numbers<[1], [0], [0], [1], [0, 0, 1, 1], [], []>} : vector<8x32xbf16>, vector<32x16xbf16>, vector<8x16xf32> -> vector<8x16xf32>
    %c0_11 = arith.constant 0 : index
    %c0_12 = arith.constant 0 : index
    %24 = vector.load %arg3[%c0_11, %c0_12] : memref<1x8xf32, #tpu.memory_space<vmem>>, vector<1x8xf32>
    %25 = vector.extract_strided_slice %23 {offsets = [0, 0], sizes = [8, 8], strides = [1, 1]} : vector<8x16xf32> to vector<8x8xf32>
    %26 = arith.mulf %25, %25 : vector<8x8xf32>
    %cst_13 = arith.constant dense<0.000000e+00> : vector<8xf32>
    %27 = vector.multi_reduction <add>, %26, %cst_13 [1] : vector<8x8xf32> to vector<8xf32>
    %28 = vector.shape_cast %27 : vector<8xf32> to vector<8x1xf32>
    %cst_14 = arith.constant 1.000000e-24 : f32
    %29 = vector.broadcast %cst_14 : f32 to vector<8x1xf32>
    %30 = arith.maximumf %28, %29 : vector<8x1xf32>
    %31 = math.rsqrt %30 : vector<8x1xf32>
    %32 = vector.broadcast %31 : vector<8x1xf32> to vector<8x8xf32>
    %33 = arith.mulf %25, %32 : vector<8x8xf32>
    %34 = vector.broadcast %24 : vector<1x8xf32> to vector<8x8xf32>
    %35 = arith.mulf %33, %34 : vector<8x8xf32>
    %36 = vector.extract_strided_slice %23 {offsets = [0, 8], sizes = [8, 8], strides = [1, 1]} : vector<8x16xf32> to vector<8x8xf32>
    %37 = arith.mulf %36, %36 : vector<8x8xf32>
    %cst_15 = arith.constant dense<0.000000e+00> : vector<8xf32>
    %38 = vector.multi_reduction <add>, %37, %cst_15 [1] : vector<8x8xf32> to vector<8xf32>
    %39 = vector.shape_cast %38 : vector<8xf32> to vector<8x1xf32>
    %cst_16 = arith.constant 1.000000e-24 : f32
    %40 = vector.broadcast %cst_16 : f32 to vector<8x1xf32>
    %41 = arith.maximumf %39, %40 : vector<8x1xf32>
    %42 = math.rsqrt %41 : vector<8x1xf32>
    %43 = vector.broadcast %42 : vector<8x1xf32> to vector<8x8xf32>
    %44 = arith.mulf %36, %43 : vector<8x8xf32>
    %45 = vector.broadcast %24 : vector<1x8xf32> to vector<8x8xf32>
    %46 = arith.mulf %44, %45 : vector<8x8xf32>
    %47 = tpu.concatenate %35, %46 in 1 : vector<8x8xf32>, vector<8x8xf32> -> vector<8x16xf32>
    %48 = arith.truncf %47 : vector<8x16xf32> to vector<8x16xbf16>
    %c0_17 = arith.constant 0 : index
    %c0_18 = arith.constant 0 : index
    %c0_19 = arith.constant 0 : index
    %49 = vector.load %arg6[%c0_17, %c0_18, %c0_19] : memref<1x8x16xbf16, #tpu.memory_space<vmem>>, vector<1x8x16xbf16>
    %50 = vector.shape_cast %49 : vector<1x8x16xbf16> to vector<8x16xbf16>
    %51 = vector.shape_cast %48 : vector<8x16xbf16> to vector<1x8x16xbf16>
    tpu.vector_store %arg6[%c0_17, %c0_18, %c0_19], %51 {strides = array<i32>} : memref<1x8x16xbf16, #tpu.memory_space<vmem>>, vector<1x8x16xbf16>,
    return
  }
  func.func @transform_0(%arg0: i32, %arg1: i32) -> (i32, i32) {
    %c0_i32 = arith.constant 0 : i32
    %c0_i32_0 = arith.constant 0 : i32
    %c0_i32_1 = arith.constant 0 : i32
    return %c0_i32, %c0_i32_0 : i32, i32
  }
  func.func @transform_1(%arg0: i32, %arg1: i32) -> (i32, i32) {
    %c0_i32 = arith.constant 0 : i32
    %c0_i32_0 = arith.constant 0 : i32
    %c0_i32_1 = arith.constant 0 : i32
    return %c0_i32, %c0_i32_0 : i32, i32
  }
  func.func @transform_2(%arg0: i32, %arg1: i32) -> (i32, i32, i32) {
    %c0_i32 = arith.constant 0 : i32
    %c0_i32_0 = arith.constant 0 : i32
    return %arg0, %arg1, %c0_i32 : i32, i32, i32
  }
  func.func @transform_3(%arg0: i32, %arg1: i32) -> (i32, i32) {
    %c0_i32 = arith.constant 0 : i32
    %c0_i32_0 = arith.constant 0 : i32
    %c0_i32_1 = arith.constant 0 : i32
    return %c0_i32, %c0_i32_0 : i32, i32
  }
  func.func @transform_4(%arg0: i32, %arg1: i32) -> (i32, i32, i32) {
    %c0_i32 = arith.constant 0 : i32
    %c0_i32_0 = arith.constant 0 : i32
    return %arg0, %arg1, %c0_i32 : i32, i32, i32
  }
}

module attributes {stable_mosaic.version = 11 : i64} {
  func.func @_ff1_kernel(%arg0: i32, %arg1: i32, %arg2: memref<1x32xf32, #tpu.memory_space<vmem>>, %arg3: memref<16x32xf32, #tpu.memory_space<vmem>>, %arg4: memref<32x85xbf16, #tpu.memory_space<vmem>>, %arg5: memref<32x85xbf16, #tpu.memory_space<vmem>>, %arg6: memref<16x85xbf16, #tpu.memory_space<vmem>>, %arg7: memref<16x32xbf16, #tpu.memory_space<vmem>>) attributes {dimension_semantics = [#tpu.dimension_semantics<parallel>, #tpu.dimension_semantics<arbitrary>], iteration_bounds = array<i64: 1, 1>, scalar_prefetch = 0 : i64, scratch_operands = 1 : i64, tpu.core_type = #tpu.core_type<tc>, window_params = [{pipeline_mode = #tpu.pipeline_mode<synchronous>, transform_indices = @transform_0, window_bounds = array<i64: 1, 32>}, {transform_indices = @transform_1, window_bounds = array<i64: 16, 32>}, {transform_indices = @transform_2, window_bounds = array<i64: 32, 85>}, {transform_indices = @transform_3, window_bounds = array<i64: 32, 85>}, {transform_indices = @transform_4, window_bounds = array<i64: 16, 85>}]} {
    %c0_i32 = arith.constant 0 : i32
    %0 = arith.cmpi eq, %arg1, %c0_i32 : i32
    %1 = arith.extui %0 : i1 to i32
    %c0_i32_0 = arith.constant 0 : i32
    %2 = arith.cmpi ne, %1, %c0_i32_0 : i32
    scf.if %2 {
      %c0_13 = arith.constant 0 : index
      %c0_14 = arith.constant 0 : index
      %24 = vector.load %arg3[%c0_13, %c0_14] : memref<16x32xf32, #tpu.memory_space<vmem>>, vector<16x32xf32>
      %c0_15 = arith.constant 0 : index
      %c0_16 = arith.constant 0 : index
      %25 = vector.load %arg2[%c0_15, %c0_16] : memref<1x32xf32, #tpu.memory_space<vmem>>, vector<1x32xf32>
      %cst_17 = arith.constant dense<0.000000e+00> : vector<16xf32>
      %26 = vector.multi_reduction <add>, %24, %cst_17 [1] : vector<16x32xf32> to vector<16xf32>
      %27 = vector.shape_cast %26 : vector<16xf32> to vector<16x1xf32>
      %cst_18 = arith.constant 3.200000e+01 : f32
      %28 = vector.broadcast %cst_18 : f32 to vector<16x1xf32>
      %29 = arith.divf %27, %28 : vector<16x1xf32>
      %30 = vector.broadcast %29 : vector<16x1xf32> to vector<16x32xf32>
      %31 = arith.subf %24, %30 : vector<16x32xf32>
      %32 = arith.mulf %31, %31 : vector<16x32xf32>
      %cst_19 = arith.constant dense<0.000000e+00> : vector<16xf32>
      %33 = vector.multi_reduction <add>, %32, %cst_19 [1] : vector<16x32xf32> to vector<16xf32>
      %34 = vector.shape_cast %33 : vector<16xf32> to vector<16x1xf32>
      %cst_20 = arith.constant 3.200000e+01 : f32
      %35 = vector.broadcast %cst_20 : f32 to vector<16x1xf32>
      %36 = arith.divf %34, %35 : vector<16x1xf32>
      %cst_21 = arith.constant 9.99999974E-6 : f32
      %37 = vector.broadcast %cst_21 : f32 to vector<16x1xf32>
      %38 = arith.addf %36, %37 : vector<16x1xf32>
      %39 = math.rsqrt %38 : vector<16x1xf32>
      %40 = vector.broadcast %39 : vector<16x1xf32> to vector<16x32xf32>
      %41 = arith.mulf %31, %40 : vector<16x32xf32>
      %42 = vector.broadcast %25 : vector<1x32xf32> to vector<16x32xf32>
      %43 = arith.mulf %41, %42 : vector<16x32xf32>
      %44 = arith.truncf %43 : vector<16x32xf32> to vector<16x32xbf16>
      %c0_22 = arith.constant 0 : index
      %c0_23 = arith.constant 0 : index
      %45 = vector.load %arg7[%c0_22, %c0_23] : memref<16x32xbf16, #tpu.memory_space<vmem>>, vector<16x32xbf16>
      tpu.vector_store %arg7[%c0_22, %c0_23], %44 {strides = array<i32>} : memref<16x32xbf16, #tpu.memory_space<vmem>>, vector<16x32xbf16>,
    } else {
    }
    %c0 = arith.constant 0 : index
    %c0_1 = arith.constant 0 : index
    %3 = vector.load %arg7[%c0, %c0_1] : memref<16x32xbf16, #tpu.memory_space<vmem>>, vector<16x32xbf16>
    %c0_2 = arith.constant 0 : index
    %c0_3 = arith.constant 0 : index
    %4 = vector.load %arg4[%c0_2, %c0_3] : memref<32x85xbf16, #tpu.memory_space<vmem>>, vector<32x85xbf16>
    %cst = arith.constant dense<0.000000e+00> : vector<16x85xf32>
    %5 = tpu.matmul %3, %4, %cst {dimension_numbers = #tpu.dot_dimension_numbers<[1], [0], [0], [1], [0, 0, 1, 1], [], []>} : vector<16x32xbf16>, vector<32x85xbf16>, vector<16x85xf32> -> vector<16x85xf32>
    %c0_4 = arith.constant 0 : index
    %c0_5 = arith.constant 0 : index
    %6 = vector.load %arg5[%c0_4, %c0_5] : memref<32x85xbf16, #tpu.memory_space<vmem>>, vector<32x85xbf16>
    %cst_6 = arith.constant dense<0.000000e+00> : vector<16x85xf32>
    %7 = tpu.matmul %3, %6, %cst_6 {dimension_numbers = #tpu.dot_dimension_numbers<[1], [0], [0], [1], [0, 0, 1, 1], [], []>} : vector<16x32xbf16>, vector<32x85xbf16>, vector<16x85xf32> -> vector<16x85xf32>
    %cst_7 = arith.constant 5.000000e-01 : f32
    %8 = vector.broadcast %cst_7 : f32 to vector<16x85xf32>
    %9 = arith.mulf %8, %5 : vector<16x85xf32>
    %cst_8 = arith.constant 4.471500e-02 : f32
    %10 = vector.broadcast %cst_8 : f32 to vector<16x85xf32>
    %11 = arith.mulf %10, %5 : vector<16x85xf32>
    %12 = arith.mulf %11, %5 : vector<16x85xf32>
    %13 = arith.mulf %12, %5 : vector<16x85xf32>
    %14 = arith.addf %5, %13 : vector<16x85xf32>
    %cst_9 = arith.constant 0.797884583 : f32
    %15 = vector.broadcast %cst_9 : f32 to vector<16x85xf32>
    %16 = arith.mulf %15, %14 : vector<16x85xf32>
    %17 = math.tanh %16 : vector<16x85xf32>
    %cst_10 = arith.constant 1.000000e+00 : f32
    %18 = vector.broadcast %cst_10 : f32 to vector<16x85xf32>
    %19 = arith.addf %18, %17 : vector<16x85xf32>
    %20 = arith.mulf %9, %19 : vector<16x85xf32>
    %21 = arith.mulf %7, %20 : vector<16x85xf32>
    %22 = arith.truncf %21 : vector<16x85xf32> to vector<16x85xbf16>
    %c0_11 = arith.constant 0 : index
    %c0_12 = arith.constant 0 : index
    %23 = vector.load %arg6[%c0_11, %c0_12] : memref<16x85xbf16, #tpu.memory_space<vmem>>, vector<16x85xbf16>
    tpu.vector_store %arg6[%c0_11, %c0_12], %22 {strides = array<i32>} : memref<16x85xbf16, #tpu.memory_space<vmem>>, vector<16x85xbf16>,
    return
  }
  func.func @transform_0(%arg0: i32, %arg1: i32) -> (i32, i32) {
    %c0_i32 = arith.constant 0 : i32
    %c0_i32_0 = arith.constant 0 : i32
    %c0_i32_1 = arith.constant 0 : i32
    return %c0_i32, %c0_i32_0 : i32, i32
  }
  func.func @transform_1(%arg0: i32, %arg1: i32) -> (i32, i32) {
    %c0_i32 = arith.constant 0 : i32
    %c0_i32_0 = arith.constant 0 : i32
    return %arg0, %c0_i32 : i32, i32
  }
  func.func @transform_2(%arg0: i32, %arg1: i32) -> (i32, i32) {
    %c0_i32 = arith.constant 0 : i32
    %c0_i32_0 = arith.constant 0 : i32
    return %c0_i32, %arg1 : i32, i32
  }
  func.func @transform_3(%arg0: i32, %arg1: i32) -> (i32, i32) {
    %c0_i32 = arith.constant 0 : i32
    %c0_i32_0 = arith.constant 0 : i32
    return %c0_i32, %arg1 : i32, i32
  }
  func.func @transform_4(%arg0: i32, %arg1: i32) -> (i32, i32) {
    %c0_i32 = arith.constant 0 : i32
    return %arg0, %arg1 : i32, i32
  }
}

module attributes {stable_mosaic.version = 11 : i64} {
  func.func @_flash_attn_kernel(%arg0: i32, %arg1: i32, %arg2: i32, %arg3: memref<1x16xf32, #tpu.memory_space<vmem>>, %arg4: memref<1x16xf32, #tpu.memory_space<vmem>>, %arg5: memref<1x8x16xbf16, #tpu.memory_space<vmem>>, %arg6: memref<1x6x16xbf16, #tpu.memory_space<vmem>>, %arg7: memref<1x6x16xbf16, #tpu.memory_space<vmem>>, %arg8: memref<1x1x6xi32, #tpu.memory_space<vmem>>, %arg9: memref<1x8x16xbf16, #tpu.memory_space<vmem>>, %arg10: memref<8x2xf32, #tpu.memory_space<vmem>>, %arg11: memref<8x2xf32, #tpu.memory_space<vmem>>, %arg12: memref<8x16xf32, #tpu.memory_space<vmem>>) attributes {dimension_semantics = [#tpu.dimension_semantics<parallel>, #tpu.dimension_semantics<parallel>, #tpu.dimension_semantics<arbitrary>], iteration_bounds = array<i64: 2, 1, 1>, scalar_prefetch = 0 : i64, scratch_operands = 3 : i64, tpu.core_type = #tpu.core_type<tc>, window_params = [{pipeline_mode = #tpu.pipeline_mode<synchronous>, transform_indices = @transform_0, window_bounds = array<i64: 1, 16>}, {pipeline_mode = #tpu.pipeline_mode<synchronous>, transform_indices = @transform_1, window_bounds = array<i64: 1, 16>}, {transform_indices = @transform_2, window_bounds = array<i64: 1, 8, 16>}, {transform_indices = @transform_3, window_bounds = array<i64: 1, 6, 16>}, {transform_indices = @transform_4, window_bounds = array<i64: 1, 6, 16>}, {transform_indices = @transform_5, window_bounds = array<i64: 1, 1, 6>}, {transform_indices = @transform_6, window_bounds = array<i64: 1, 8, 16>}]} {
    %c0 = arith.constant 0 : index
    %c0_0 = arith.constant 0 : index
    %c0_1 = arith.constant 0 : index
    %0 = vector.load %arg5[%c0, %c0_0, %c0_1] : memref<1x8x16xbf16, #tpu.memory_space<vmem>>, vector<1x8x16xbf16>
    %1 = vector.shape_cast %0 : vector<1x8x16xbf16> to vector<8x16xbf16>
    %c0_2 = arith.constant 0 : index
    %c0_3 = arith.constant 0 : index
    %c0_4 = arith.constant 0 : index
    %2 = vector.load %arg6[%c0_2, %c0_3, %c0_4] : memref<1x6x16xbf16, #tpu.memory_space<vmem>>, vector<1x6x16xbf16>
    %3 = vector.shape_cast %2 : vector<1x6x16xbf16> to vector<6x16xbf16>
    %c0_5 = arith.constant 0 : index
    %c0_6 = arith.constant 0 : index
    %c0_7 = arith.constant 0 : index
    %4 = vector.load %arg7[%c0_5, %c0_6, %c0_7] : memref<1x6x16xbf16, #tpu.memory_space<vmem>>, vector<1x6x16xbf16>
    %5 = vector.shape_cast %4 : vector<1x6x16xbf16> to vector<6x16xbf16>
    %c0_i32 = arith.constant 0 : i32
    %6 = arith.cmpi eq, %arg2, %c0_i32 : i32
    %7 = arith.extui %6 : i1 to i32
    %c0_i32_8 = arith.constant 0 : i32
    %8 = arith.cmpi ne, %7, %c0_i32_8 : i32
    scf.if %8 {
      %c0_46 = arith.constant 0 : index
      %c0_47 = arith.constant 0 : index
      %78 = vector.load %arg3[%c0_46, %c0_47] : memref<1x16xf32, #tpu.memory_space<vmem>>, vector<1x16xf32>
      %cst_48 = arith.constant 1.000000e+00 : f32
      %79 = vector.broadcast %cst_48 : f32 to vector<8x2xf32>
      %c0_49 = arith.constant 0 : index
      %c0_50 = arith.constant 0 : index
      %80 = vector.load %arg11[%c0_49, %c0_50] : memref<8x2xf32, #tpu.memory_space<vmem>>, vector<8x2xf32>
      tpu.vector_store %arg11[%c0_49, %c0_50], %79 {strides = array<i32>} : memref<8x2xf32, #tpu.memory_space<vmem>>, vector<8x2xf32>,
      %c0_51 = arith.constant 0 : index
      %c0_52 = arith.constant 0 : index
      %81 = vector.load %arg4[%c0_51, %c0_52] : memref<1x16xf32, #tpu.memory_space<vmem>>, vector<1x16xf32>
      %82 = vector.shape_cast %81 : vector<1x16xf32> to vector<1x16xf32>
      %83 = vector.broadcast %82 : vector<1x16xf32> to vector<8x16xf32>
      %c0_53 = arith.constant 0 : index
      %c0_54 = arith.constant 0 : index
      %84 = vector.load %arg12[%c0_53, %c0_54] : memref<8x16xf32, #tpu.memory_space<vmem>>, vector<8x16xf32>
      tpu.vector_store %arg12[%c0_53, %c0_54], %83 {strides = array<i32>} : memref<8x16xf32, #tpu.memory_space<vmem>>, vector<8x16xf32>,
      %85 = vector.extract_strided_slice %1 {offsets = [0, 0], sizes = [8, 8], strides = [1, 1]} : vector<8x16xbf16> to vector<8x8xbf16>
      %86 = arith.extf %85 : vector<8x8xbf16> to vector<8x8xf32>
      %87 = vector.extract_strided_slice %78 {offsets = [0, 0], sizes = [1, 8], strides = [1, 1]} : vector<1x16xf32> to vector<1x8xf32>
      %88 = vector.broadcast %87 : vector<1x8xf32> to vector<8x8xf32>
      %89 = arith.mulf %86, %88 : vector<8x8xf32>
      %cst_55 = arith.constant dense<0.000000e+00> : vector<8xf32>
      %90 = vector.multi_reduction <add>, %89, %cst_55 [1] : vector<8x8xf32> to vector<8xf32>
      %91 = vector.shape_cast %90 : vector<8xf32> to vector<8x1xf32>
      %92 = vector.extract_strided_slice %1 {offsets = [0, 8], sizes = [8, 8], strides = [1, 1]} : vector<8x16xbf16> to vector<8x8xbf16>
      %93 = arith.extf %92 : vector<8x8xbf16> to vector<8x8xf32>
      %94 = vector.extract_strided_slice %78 {offsets = [0, 8], sizes = [1, 8], strides = [1, 1]} : vector<1x16xf32> to vector<1x8xf32>
      %95 = vector.broadcast %94 : vector<1x8xf32> to vector<8x8xf32>
      %96 = arith.mulf %93, %95 : vector<8x8xf32>
      %cst_56 = arith.constant dense<0.000000e+00> : vector<8xf32>
      %97 = vector.multi_reduction <add>, %96, %cst_56 [1] : vector<8x8xf32> to vector<8xf32>
      %98 = vector.shape_cast %97 : vector<8xf32> to vector<8x1xf32>
      %99 = tpu.concatenate %91, %98 in 1 : vector<8x1xf32>, vector<8x1xf32> -> vector<8x2xf32>
      %c0_57 = arith.constant 0 : index
      %c0_58 = arith.constant 0 : index
      %100 = vector.load %arg10[%c0_57, %c0_58] : memref<8x2xf32, #tpu.memory_space<vmem>>, vector<8x2xf32>
      tpu.vector_store %arg10[%c0_57, %c0_58], %99 {strides = array<i32>} : memref<8x2xf32, #tpu.memory_space<vmem>>, vector<8x2xf32>,
    } else {
    }
    %c0_9 = arith.constant 0 : index
    %c0_10 = arith.constant 0 : index
    %c0_11 = arith.constant 0 : index
    %9 = vector.load %arg8[%c0_9, %c0_10, %c0_11] : memref<1x1x6xi32, #tpu.memory_space<vmem>>, vector<1x1x6xi32>
    %10 = vector.shape_cast %9 : vector<1x1x6xi32> to vector<1x6xi32>
    %c0_i32_12 = arith.constant 0 : i32
    %11 = vector.broadcast %c0_i32_12 : i32 to vector<1x6xi32>
    %12 = arith.cmpi ne, %10, %11 : vector<1x6xi32>
    %13 = vector.extract_strided_slice %1 {offsets = [0, 0], sizes = [8, 8], strides = [1, 1]} : vector<8x16xbf16> to vector<8x8xbf16>
    %14 = vector.extract_strided_slice %3 {offsets = [0, 0], sizes = [6, 8], strides = [1, 1]} : vector<6x16xbf16> to vector<6x8xbf16>
    %cst = arith.constant dense<0.000000e+00> : vector<8x6xf32>
    %15 = tpu.matmul %13, %14, %cst {dimension_numbers = #tpu.dot_dimension_numbers<[1], [1], [0], [0], [0, 0, 1, 0], [], []>} : vector<8x8xbf16>, vector<6x8xbf16>, vector<8x6xf32> -> vector<8x6xf32>
    %cst_13 = arith.constant -1.000000e+30 : f32
    %16 = vector.shape_cast %12 : vector<1x6xi1> to vector<1x6xi1>
    %17 = vector.broadcast %16 : vector<1x6xi1> to vector<8x6xi1>
    %18 = vector.broadcast %cst_13 : f32 to vector<8x6xf32>
    %19 = arith.select %17, %15, %18 : vector<8x6xi1>, vector<8x6xf32>
    %c0_14 = arith.constant 0 : index
    %c0_15 = arith.constant 0 : index
    %20 = vector.load %arg10[%c0_14, %c0_15] : memref<8x2xf32, #tpu.memory_space<vmem>>, vector<8x1xf32>
    %cst_16 = arith.constant dense<0xFF800000> : vector<8xf32>
    %21 = vector.multi_reduction <maximumf>, %19, %cst_16 [1] : vector<8x6xf32> to vector<8xf32>
    %22 = vector.shape_cast %21 : vector<8xf32> to vector<8x1xf32>
    %23 = arith.maximumf %20, %22 : vector<8x1xf32>
    %24 = arith.subf %20, %23 : vector<8x1xf32>
    %25 = math.exp %24 : vector<8x1xf32>
    %26 = vector.broadcast %23 : vector<8x1xf32> to vector<8x6xf32>
    %27 = arith.subf %19, %26 : vector<8x6xf32>
    %28 = math.exp %27 : vector<8x6xf32>
    %c0_17 = arith.constant 0 : index
    %c0_18 = arith.constant 0 : index
    %29 = vector.load %arg10[%c0_17, %c0_18] : memref<8x2xf32, #tpu.memory_space<vmem>>, vector<8x1xf32>
    tpu.vector_store %arg10[%c0_17, %c0_18], %23 {strides = array<i32>} : memref<8x2xf32, #tpu.memory_space<vmem>>, vector<8x1xf32>,
    %c0_19 = arith.constant 0 : index
    %c0_20 = arith.constant 0 : index
    %30 = vector.load %arg11[%c0_19, %c0_20] : memref<8x2xf32, #tpu.memory_space<vmem>>, vector<8x1xf32>
    %31 = arith.mulf %25, %30 : vector<8x1xf32>
    %cst_21 = arith.constant dense<0.000000e+00> : vector<8xf32>
    %32 = vector.multi_reduction <add>, %28, %cst_21 [1] : vector<8x6xf32> to vector<8xf32>
    %33 = vector.shape_cast %32 : vector<8xf32> to vector<8x1xf32>
    %34 = arith.addf %31, %33 : vector<8x1xf32>
    %c0_22 = arith.constant 0 : index
    %c0_23 = arith.constant 0 : index
    %35 = vector.load %arg11[%c0_22, %c0_23] : memref<8x2xf32, #tpu.memory_space<vmem>>, vector<8x1xf32>
    tpu.vector_store %arg11[%c0_22, %c0_23], %34 {strides = array<i32>} : memref<8x2xf32, #tpu.memory_space<vmem>>, vector<8x1xf32>,
    %c0_24 = arith.constant 0 : index
    %c0_25 = arith.constant 0 : index
    %36 = vector.load %arg12[%c0_24, %c0_25] : memref<8x16xf32, #tpu.memory_space<vmem>>, vector<8x8xf32>
    %37 = vector.broadcast %25 : vector<8x1xf32> to vector<8x8xf32>
    %38 = arith.mulf %37, %36 : vector<8x8xf32>
    %39 = arith.truncf %28 : vector<8x6xf32> to vector<8x6xbf16>
    %40 = vector.extract_strided_slice %5 {offsets = [0, 0], sizes = [6, 8], strides = [1, 1]} : vector<6x16xbf16> to vector<6x8xbf16>
    %cst_26 = arith.constant dense<0.000000e+00> : vector<8x8xf32>
    %41 = tpu.matmul %39, %40, %cst_26 {dimension_numbers = #tpu.dot_dimension_numbers<[1], [0], [0], [1], [0, 0, 1, 1], [], []>} : vector<8x6xbf16>, vector<6x8xbf16>, vector<8x8xf32> -> vector<8x8xf32>
    %42 = arith.addf %38, %41 : vector<8x8xf32>
    %c0_27 = arith.constant 0 : index
    %c0_28 = arith.constant 0 : index
    %43 = vector.load %arg12[%c0_27, %c0_28] : memref<8x16xf32, #tpu.memory_space<vmem>>, vector<8x8xf32>
    tpu.vector_store %arg12[%c0_27, %c0_28], %42 {strides = array<i32>} : memref<8x16xf32, #tpu.memory_space<vmem>>, vector<8x8xf32>,
    %44 = vector.extract_strided_slice %1 {offsets = [0, 8], sizes = [8, 8], strides = [1, 1]} : vector<8x16xbf16> to vector<8x8xbf16>
    %45 = vector.extract_strided_slice %3 {offsets = [0, 8], sizes = [6, 8], strides = [1, 1]} : vector<6x16xbf16> to vector<6x8xbf16>
    %cst_29 = arith.constant dense<0.000000e+00> : vector<8x6xf32>
    %46 = tpu.matmul %44, %45, %cst_29 {dimension_numbers = #tpu.dot_dimension_numbers<[1], [1], [0], [0], [0, 0, 1, 0], [], []>} : vector<8x8xbf16>, vector<6x8xbf16>, vector<8x6xf32> -> vector<8x6xf32>
    %cst_30 = arith.constant -1.000000e+30 : f32
    %47 = vector.shape_cast %12 : vector<1x6xi1> to vector<1x6xi1>
    %48 = vector.broadcast %47 : vector<1x6xi1> to vector<8x6xi1>
    %49 = vector.broadcast %cst_30 : f32 to vector<8x6xf32>
    %50 = arith.select %48, %46, %49 : vector<8x6xi1>, vector<8x6xf32>
    %c0_31 = arith.constant 0 : index
    %c1 = arith.constant 1 : index
    %51 = vector.load %arg10[%c0_31, %c1] : memref<8x2xf32, #tpu.memory_space<vmem>>, vector<8x1xf32>
    %cst_32 = arith.constant dense<0xFF800000> : vector<8xf32>
    %52 = vector.multi_reduction <maximumf>, %50, %cst_32 [1] : vector<8x6xf32> to vector<8xf32>
    %53 = vector.shape_cast %52 : vector<8xf32> to vector<8x1xf32>
    %54 = arith.maximumf %51, %53 : vector<8x1xf32>
    %55 = arith.subf %51, %54 : vector<8x1xf32>
    %56 = math.exp %55 : vector<8x1xf32>
    %57 = vector.broadcast %54 : vector<8x1xf32> to vector<8x6xf32>
    %58 = arith.subf %50, %57 : vector<8x6xf32>
    %59 = math.exp %58 : vector<8x6xf32>
    %c0_33 = arith.constant 0 : index
    %c1_34 = arith.constant 1 : index
    %60 = vector.load %arg10[%c0_33, %c1_34] : memref<8x2xf32, #tpu.memory_space<vmem>>, vector<8x1xf32>
    tpu.vector_store %arg10[%c0_33, %c1_34], %54 {strides = array<i32>} : memref<8x2xf32, #tpu.memory_space<vmem>>, vector<8x1xf32>,
    %c0_35 = arith.constant 0 : index
    %c1_36 = arith.constant 1 : index
    %61 = vector.load %arg11[%c0_35, %c1_36] : memref<8x2xf32, #tpu.memory_space<vmem>>, vector<8x1xf32>
    %62 = arith.mulf %56, %61 : vector<8x1xf32>
    %cst_37 = arith.constant dense<0.000000e+00> : vector<8xf32>
    %63 = vector.multi_reduction <add>, %59, %cst_37 [1] : vector<8x6xf32> to vector<8xf32>
    %64 = vector.shape_cast %63 : vector<8xf32> to vector<8x1xf32>
    %65 = arith.addf %62, %64 : vector<8x1xf32>
    %c0_38 = arith.constant 0 : index
    %c1_39 = arith.constant 1 : index
    %66 = vector.load %arg11[%c0_38, %c1_39] : memref<8x2xf32, #tpu.memory_space<vmem>>, vector<8x1xf32>
    tpu.vector_store %arg11[%c0_38, %c1_39], %65 {strides = array<i32>} : memref<8x2xf32, #tpu.memory_space<vmem>>, vector<8x1xf32>,
    %c0_40 = arith.constant 0 : index
    %c8 = arith.constant 8 : index
    %67 = vector.load %arg12[%c0_40, %c8] : memref<8x16xf32, #tpu.memory_space<vmem>>, vector<8x8xf32>
    %68 = vector.broadcast %56 : vector<8x1xf32> to vector<8x8xf32>
    %69 = arith.mulf %68, %67 : vector<8x8xf32>
    %70 = arith.truncf %59 : vector<8x6xf32> to vector<8x6xbf16>
    %71 = vector.extract_strided_slice %5 {offsets = [0, 8], sizes = [6, 8], strides = [1, 1]} : vector<6x16xbf16> to vector<6x8xbf16>
    %cst_41 = arith.constant dense<0.000000e+00> : vector<8x8xf32>
    %72 = tpu.matmul %70, %71, %cst_41 {dimension_numbers = #tpu.dot_dimension_numbers<[1], [0], [0], [1], [0, 0, 1, 1], [], []>} : vector<8x6xbf16>, vector<6x8xbf16>, vector<8x8xf32> -> vector<8x8xf32>
    %73 = arith.addf %69, %72 : vector<8x8xf32>
    %c0_42 = arith.constant 0 : index
    %c8_43 = arith.constant 8 : index
    %74 = vector.load %arg12[%c0_42, %c8_43] : memref<8x16xf32, #tpu.memory_space<vmem>>, vector<8x8xf32>
    tpu.vector_store %arg12[%c0_42, %c8_43], %73 {strides = array<i32>} : memref<8x16xf32, #tpu.memory_space<vmem>>, vector<8x8xf32>,
    %c0_i32_44 = arith.constant 0 : i32
    %75 = arith.cmpi eq, %arg2, %c0_i32_44 : i32
    %76 = arith.extui %75 : i1 to i32
    %c0_i32_45 = arith.constant 0 : i32
    %77 = arith.cmpi ne, %76, %c0_i32_45 : i32
    scf.if %77 {
      %c0_46 = arith.constant 0 : index
      %c0_47 = arith.constant 0 : index
      %78 = vector.load %arg12[%c0_46, %c0_47] : memref<8x16xf32, #tpu.memory_space<vmem>>, vector<8x8xf32>
      %c0_48 = arith.constant 0 : index
      %c0_49 = arith.constant 0 : index
      %79 = vector.load %arg11[%c0_48, %c0_49] : memref<8x2xf32, #tpu.memory_space<vmem>>, vector<8x1xf32>
      %80 = tpu.reciprocal %79 {approx = true} : vector<8x1xf32> -> vector<8x1xf32>
      %81 = vector.broadcast %80 : vector<8x1xf32> to vector<8x8xf32>
      %82 = arith.mulf %78, %81 : vector<8x8xf32>
      %c0_50 = arith.constant 0 : index
      %c8_51 = arith.constant 8 : index
      %83 = vector.load %arg12[%c0_50, %c8_51] : memref<8x16xf32, #tpu.memory_space<vmem>>, vector<8x8xf32>
      %c0_52 = arith.constant 0 : index
      %c1_53 = arith.constant 1 : index
      %84 = vector.load %arg11[%c0_52, %c1_53] : memref<8x2xf32, #tpu.memory_space<vmem>>, vector<8x1xf32>
      %85 = tpu.reciprocal %84 {approx = true} : vector<8x1xf32> -> vector<8x1xf32>
      %86 = vector.broadcast %85 : vector<8x1xf32> to vector<8x8xf32>
      %87 = arith.mulf %83, %86 : vector<8x8xf32>
      %88 = tpu.concatenate %82, %87 in 1 : vector<8x8xf32>, vector<8x8xf32> -> vector<8x16xf32>
      %89 = arith.truncf %88 : vector<8x16xf32> to vector<8x16xbf16>
      %c0_54 = arith.constant 0 : index
      %c0_55 = arith.constant 0 : index
      %c0_56 = arith.constant 0 : index
      %90 = vector.load %arg9[%c0_54, %c0_55, %c0_56] : memref<1x8x16xbf16, #tpu.memory_space<vmem>>, vector<1x8x16xbf16>
      %91 = vector.shape_cast %90 : vector<1x8x16xbf16> to vector<8x16xbf16>
      %92 = vector.shape_cast %89 : vector<8x16xbf16> to vector<1x8x16xbf16>
      tpu.vector_store %arg9[%c0_54, %c0_55, %c0_56], %92 {strides = array<i32>} : memref<1x8x16xbf16, #tpu.memory_space<vmem>>, vector<1x8x16xbf16>,
    } else {
    }
    return
  }
  func.func @transform_0(%arg0: i32, %arg1: i32, %arg2: i32) -> (i32, i32) {
    %c0_i32 = arith.constant 0 : i32
    %c0_i32_0 = arith.constant 0 : i32
    %c0_i32_1 = arith.constant 0 : i32
    return %c0_i32, %c0_i32_0 : i32, i32
  }
  func.func @transform_1(%arg0: i32, %arg1: i32, %arg2: i32) -> (i32, i32) {
    %c0_i32 = arith.constant 0 : i32
    %c0_i32_0 = arith.constant 0 : i32
    %c0_i32_1 = arith.constant 0 : i32
    return %c0_i32, %c0_i32_0 : i32, i32
  }
  func.func @transform_2(%arg0: i32, %arg1: i32, %arg2: i32) -> (i32, i32, i32) {
    %c0_i32 = arith.constant 0 : i32
    %c0_i32_0 = arith.constant 0 : i32
    return %arg0, %arg1, %c0_i32 : i32, i32, i32
  }
  func.func @transform_3(%arg0: i32, %arg1: i32, %arg2: i32) -> (i32, i32, i32) {
    %c0_i32 = arith.constant 0 : i32
    %c0_i32_0 = arith.constant 0 : i32
    return %arg0, %arg2, %c0_i32 : i32, i32, i32
  }
  func.func @transform_4(%arg0: i32, %arg1: i32, %arg2: i32) -> (i32, i32, i32) {
    %c0_i32 = arith.constant 0 : i32
    %c0_i32_0 = arith.constant 0 : i32
    return %arg0, %arg2, %c0_i32 : i32, i32, i32
  }
  func.func @transform_5(%arg0: i32, %arg1: i32, %arg2: i32) -> (i32, i32, i32) {
    %c0_i32 = arith.constant 0 : i32
    %c0_i32_0 = arith.constant 0 : i32
    return %arg0, %c0_i32, %arg2 : i32, i32, i32
  }
  func.func @transform_6(%arg0: i32, %arg1: i32, %arg2: i32) -> (i32, i32, i32) {
    %c0_i32 = arith.constant 0 : i32
    %c0_i32_0 = arith.constant 0 : i32
    return %arg0, %arg1, %c0_i32 : i32, i32, i32
  }
}

module attributes {stable_mosaic.version = 11 : i64} {
  func.func @_ln_proj_kernel(%arg0: i32, %arg1: i32, %arg2: memref<1x32xf32, #tpu.memory_space<vmem>>, %arg3: memref<1x8xf32, #tpu.memory_space<vmem>>, %arg4: memref<1x6x32xf32, #tpu.memory_space<vmem>>, %arg5: memref<32x16xbf16, #tpu.memory_space<vmem>>, %arg6: memref<32x16xbf16, #tpu.memory_space<vmem>>, %arg7: memref<1x6x16xbf16, #tpu.memory_space<vmem>>, %arg8: memref<1x6x16xbf16, #tpu.memory_space<vmem>>) attributes {dimension_semantics = [#tpu.dimension_semantics<parallel>, #tpu.dimension_semantics<parallel>], iteration_bounds = array<i64: 2, 1>, scalar_prefetch = 0 : i64, scratch_operands = 0 : i64, tpu.core_type = #tpu.core_type<tc>, window_params = [{pipeline_mode = #tpu.pipeline_mode<synchronous>, transform_indices = @transform_0, window_bounds = array<i64: 1, 32>}, {pipeline_mode = #tpu.pipeline_mode<synchronous>, transform_indices = @transform_1, window_bounds = array<i64: 1, 8>}, {transform_indices = @transform_2, window_bounds = array<i64: 1, 6, 32>}, {pipeline_mode = #tpu.pipeline_mode<synchronous>, transform_indices = @transform_3, window_bounds = array<i64: 32, 16>}, {pipeline_mode = #tpu.pipeline_mode<synchronous>, transform_indices = @transform_4, window_bounds = array<i64: 32, 16>}, {transform_indices = @transform_5, window_bounds = array<i64: 1, 6, 16>}, {transform_indices = @transform_6, window_bounds = array<i64: 1, 6, 16>}]} {
    %c0 = arith.constant 0 : index
    %c0_0 = arith.constant 0 : index
    %c0_1 = arith.constant 0 : index
    %0 = vector.load %arg4[%c0, %c0_0, %c0_1] : memref<1x6x32xf32, #tpu.memory_space<vmem>>, vector<1x6x32xf32>
    %1 = vector.shape_cast %0 : vector<1x6x32xf32> to vector<6x32xf32>
    %2 = arith.truncf %1 : vector<6x32xf32> to vector<6x32xbf16>
    %c0_2 = arith.constant 0 : index
    %c0_3 = arith.constant 0 : index
    %3 = vector.load %arg5[%c0_2, %c0_3] : memref<32x16xbf16, #tpu.memory_space<vmem>>, vector<32x16xbf16>
    %cst = arith.constant dense<0.000000e+00> : vector<6x16xf32>
    %4 = tpu.matmul %2, %3, %cst {dimension_numbers = #tpu.dot_dimension_numbers<[1], [0], [0], [1], [0, 0, 1, 1], [], []>} : vector<6x32xbf16>, vector<32x16xbf16>, vector<6x16xf32> -> vector<6x16xf32>
    %c0_4 = arith.constant 0 : index
    %c0_5 = arith.constant 0 : index
    %5 = vector.load %arg3[%c0_4, %c0_5] : memref<1x8xf32, #tpu.memory_space<vmem>>, vector<1x8xf32>
    %6 = vector.extract_strided_slice %4 {offsets = [0, 0], sizes = [6, 8], strides = [1, 1]} : vector<6x16xf32> to vector<6x8xf32>
    %7 = arith.mulf %6, %6 : vector<6x8xf32>
    %cst_6 = arith.constant dense<0.000000e+00> : vector<6xf32>
    %8 = vector.multi_reduction <add>, %7, %cst_6 [1] : vector<6x8xf32> to vector<6xf32>
    %9 = vector.shape_cast %8 : vector<6xf32> to vector<6x1xf32>
    %cst_7 = arith.constant 1.000000e-24 : f32
    %10 = vector.broadcast %cst_7 : f32 to vector<6x1xf32>
    %11 = arith.maximumf %9, %10 : vector<6x1xf32>
    %12 = math.rsqrt %11 : vector<6x1xf32>
    %13 = vector.broadcast %12 : vector<6x1xf32> to vector<6x8xf32>
    %14 = arith.mulf %6, %13 : vector<6x8xf32>
    %15 = vector.broadcast %5 : vector<1x8xf32> to vector<6x8xf32>
    %16 = arith.mulf %14, %15 : vector<6x8xf32>
    %17 = vector.extract_strided_slice %4 {offsets = [0, 8], sizes = [6, 8], strides = [1, 1]} : vector<6x16xf32> to vector<6x8xf32>
    %18 = arith.mulf %17, %17 : vector<6x8xf32>
    %cst_8 = arith.constant dense<0.000000e+00> : vector<6xf32>
    %19 = vector.multi_reduction <add>, %18, %cst_8 [1] : vector<6x8xf32> to vector<6xf32>
    %20 = vector.shape_cast %19 : vector<6xf32> to vector<6x1xf32>
    %cst_9 = arith.constant 1.000000e-24 : f32
    %21 = vector.broadcast %cst_9 : f32 to vector<6x1xf32>
    %22 = arith.maximumf %20, %21 : vector<6x1xf32>
    %23 = math.rsqrt %22 : vector<6x1xf32>
    %24 = vector.broadcast %23 : vector<6x1xf32> to vector<6x8xf32>
    %25 = arith.mulf %17, %24 : vector<6x8xf32>
    %26 = vector.broadcast %5 : vector<1x8xf32> to vector<6x8xf32>
    %27 = arith.mulf %25, %26 : vector<6x8xf32>
    %28 = tpu.concatenate %16, %27 in 1 : vector<6x8xf32>, vector<6x8xf32> -> vector<6x16xf32>
    %29 = arith.truncf %28 : vector<6x16xf32> to vector<6x16xbf16>
    %c0_10 = arith.constant 0 : index
    %c0_11 = arith.constant 0 : index
    %c0_12 = arith.constant 0 : index
    %30 = vector.load %arg7[%c0_10, %c0_11, %c0_12] : memref<1x6x16xbf16, #tpu.memory_space<vmem>>, vector<1x6x16xbf16>
    %31 = vector.shape_cast %30 : vector<1x6x16xbf16> to vector<6x16xbf16>
    %32 = vector.shape_cast %29 : vector<6x16xbf16> to vector<1x6x16xbf16>
    tpu.vector_store %arg7[%c0_10, %c0_11, %c0_12], %32 {strides = array<i32>} : memref<1x6x16xbf16, #tpu.memory_space<vmem>>, vector<1x6x16xbf16>,
    %c0_13 = arith.constant 0 : index
    %c0_14 = arith.constant 0 : index
    %33 = vector.load %arg6[%c0_13, %c0_14] : memref<32x16xbf16, #tpu.memory_space<vmem>>, vector<32x16xbf16>
    %cst_15 = arith.constant dense<0.000000e+00> : vector<6x16xf32>
    %34 = tpu.matmul %2, %33, %cst_15 {dimension_numbers = #tpu.dot_dimension_numbers<[1], [0], [0], [1], [0, 0, 1, 1], [], []>} : vector<6x32xbf16>, vector<32x16xbf16>, vector<6x16xf32> -> vector<6x16xf32>
    %35 = arith.truncf %34 : vector<6x16xf32> to vector<6x16xbf16>
    %c0_16 = arith.constant 0 : index
    %c0_17 = arith.constant 0 : index
    %c0_18 = arith.constant 0 : index
    %36 = vector.load %arg8[%c0_16, %c0_17, %c0_18] : memref<1x6x16xbf16, #tpu.memory_space<vmem>>, vector<1x6x16xbf16>
    %37 = vector.shape_cast %36 : vector<1x6x16xbf16> to vector<6x16xbf16>
    %38 = vector.shape_cast %35 : vector<6x16xbf16> to vector<1x6x16xbf16>
    tpu.vector_store %arg8[%c0_16, %c0_17, %c0_18], %38 {strides = array<i32>} : memref<1x6x16xbf16, #tpu.memory_space<vmem>>, vector<1x6x16xbf16>,
    return
  }
  func.func @transform_0(%arg0: i32, %arg1: i32) -> (i32, i32) {
    %c0_i32 = arith.constant 0 : i32
    %c0_i32_0 = arith.constant 0 : i32
    %c0_i32_1 = arith.constant 0 : i32
    return %c0_i32, %c0_i32_0 : i32, i32
  }
  func.func @transform_1(%arg0: i32, %arg1: i32) -> (i32, i32) {
    %c0_i32 = arith.constant 0 : i32
    %c0_i32_0 = arith.constant 0 : i32
    %c0_i32_1 = arith.constant 0 : i32
    return %c0_i32, %c0_i32_0 : i32, i32
  }
  func.func @transform_2(%arg0: i32, %arg1: i32) -> (i32, i32, i32) {
    %c0_i32 = arith.constant 0 : i32
    %c0_i32_0 = arith.constant 0 : i32
    return %arg0, %arg1, %c0_i32 : i32, i32, i32
  }
  func.func @transform_3(%arg0: i32, %arg1: i32) -> (i32, i32) {
    %c0_i32 = arith.constant 0 : i32
    %c0_i32_0 = arith.constant 0 : i32
    %c0_i32_1 = arith.constant 0 : i32
    return %c0_i32, %c0_i32_0 : i32, i32
  }
  func.func @transform_4(%arg0: i32, %arg1: i32) -> (i32, i32) {
    %c0_i32 = arith.constant 0 : i32
    %c0_i32_0 = arith.constant 0 : i32
    %c0_i32_1 = arith.constant 0 : i32
    return %c0_i32, %c0_i32_0 : i32, i32
  }
  func.func @transform_5(%arg0: i32, %arg1: i32) -> (i32, i32, i32) {
    %c0_i32 = arith.constant 0 : i32
    %c0_i32_0 = arith.constant 0 : i32
    return %arg0, %arg1, %c0_i32 : i32, i32, i32
  }
  func.func @transform_6(%arg0: i32, %arg1: i32) -> (i32, i32, i32) {
    %c0_i32 = arith.constant 0 : i32
    %c0_i32_0 = arith.constant 0 : i32
    return %arg0, %arg1, %c0_i32 : i32, i32, i32
  }
}

module attributes {stable_mosaic.version = 11 : i64} {
  func.func @_ff2_kernel(%arg0: i32, %arg1: i32, %arg2: memref<1x85xf32, #tpu.memory_space<vmem>>, %arg3: memref<16x85xbf16, #tpu.memory_space<vmem>>, %arg4: memref<85x32xbf16, #tpu.memory_space<vmem>>, %arg5: memref<16x32xf32, #tpu.memory_space<vmem>>, %arg6: memref<16x32xf32, #tpu.memory_space<vmem>>, %arg7: memref<16x85xbf16, #tpu.memory_space<vmem>>) attributes {dimension_semantics = [#tpu.dimension_semantics<parallel>, #tpu.dimension_semantics<arbitrary>], iteration_bounds = array<i64: 1, 1>, scalar_prefetch = 0 : i64, scratch_operands = 1 : i64, tpu.core_type = #tpu.core_type<tc>, window_params = [{pipeline_mode = #tpu.pipeline_mode<synchronous>, transform_indices = @transform_0, window_bounds = array<i64: 1, 85>}, {transform_indices = @transform_1, window_bounds = array<i64: 16, 85>}, {transform_indices = @transform_2, window_bounds = array<i64: 85, 32>}, {transform_indices = @transform_3, window_bounds = array<i64: 16, 32>}, {transform_indices = @transform_4, window_bounds = array<i64: 16, 32>}]} {
    %c0_i32 = arith.constant 0 : i32
    %0 = arith.cmpi eq, %arg1, %c0_i32 : i32
    %1 = arith.extui %0 : i1 to i32
    %c0_i32_0 = arith.constant 0 : i32
    %2 = arith.cmpi ne, %1, %c0_i32_0 : i32
    scf.if %2 {
      %c0_8 = arith.constant 0 : index
      %c0_9 = arith.constant 0 : index
      %9 = vector.load %arg3[%c0_8, %c0_9] : memref<16x85xbf16, #tpu.memory_space<vmem>>, vector<16x85xbf16>
      %10 = arith.extf %9 : vector<16x85xbf16> to vector<16x85xf32>
      %c0_10 = arith.constant 0 : index
      %c0_11 = arith.constant 0 : index
      %11 = vector.load %arg2[%c0_10, %c0_11] : memref<1x85xf32, #tpu.memory_space<vmem>>, vector<1x85xf32>
      %cst_12 = arith.constant dense<0.000000e+00> : vector<16xf32>
      %12 = vector.multi_reduction <add>, %10, %cst_12 [1] : vector<16x85xf32> to vector<16xf32>
      %13 = vector.shape_cast %12 : vector<16xf32> to vector<16x1xf32>
      %cst_13 = arith.constant 8.500000e+01 : f32
      %14 = vector.broadcast %cst_13 : f32 to vector<16x1xf32>
      %15 = arith.divf %13, %14 : vector<16x1xf32>
      %16 = vector.broadcast %15 : vector<16x1xf32> to vector<16x85xf32>
      %17 = arith.subf %10, %16 : vector<16x85xf32>
      %18 = arith.mulf %17, %17 : vector<16x85xf32>
      %cst_14 = arith.constant dense<0.000000e+00> : vector<16xf32>
      %19 = vector.multi_reduction <add>, %18, %cst_14 [1] : vector<16x85xf32> to vector<16xf32>
      %20 = vector.shape_cast %19 : vector<16xf32> to vector<16x1xf32>
      %cst_15 = arith.constant 8.500000e+01 : f32
      %21 = vector.broadcast %cst_15 : f32 to vector<16x1xf32>
      %22 = arith.divf %20, %21 : vector<16x1xf32>
      %cst_16 = arith.constant 9.99999974E-6 : f32
      %23 = vector.broadcast %cst_16 : f32 to vector<16x1xf32>
      %24 = arith.addf %22, %23 : vector<16x1xf32>
      %25 = math.rsqrt %24 : vector<16x1xf32>
      %26 = vector.broadcast %25 : vector<16x1xf32> to vector<16x85xf32>
      %27 = arith.mulf %17, %26 : vector<16x85xf32>
      %28 = vector.broadcast %11 : vector<1x85xf32> to vector<16x85xf32>
      %29 = arith.mulf %27, %28 : vector<16x85xf32>
      %30 = arith.truncf %29 : vector<16x85xf32> to vector<16x85xbf16>
      %c0_17 = arith.constant 0 : index
      %c0_18 = arith.constant 0 : index
      %31 = vector.load %arg7[%c0_17, %c0_18] : memref<16x85xbf16, #tpu.memory_space<vmem>>, vector<16x85xbf16>
      tpu.vector_store %arg7[%c0_17, %c0_18], %30 {strides = array<i32>} : memref<16x85xbf16, #tpu.memory_space<vmem>>, vector<16x85xbf16>,
    } else {
    }
    %c0 = arith.constant 0 : index
    %c0_1 = arith.constant 0 : index
    %3 = vector.load %arg7[%c0, %c0_1] : memref<16x85xbf16, #tpu.memory_space<vmem>>, vector<16x85xbf16>
    %c0_2 = arith.constant 0 : index
    %c0_3 = arith.constant 0 : index
    %4 = vector.load %arg4[%c0_2, %c0_3] : memref<85x32xbf16, #tpu.memory_space<vmem>>, vector<85x32xbf16>
    %cst = arith.constant dense<0.000000e+00> : vector<16x32xf32>
    %5 = tpu.matmul %3, %4, %cst {dimension_numbers = #tpu.dot_dimension_numbers<[1], [0], [0], [1], [0, 0, 1, 1], [], []>} : vector<16x85xbf16>, vector<85x32xbf16>, vector<16x32xf32> -> vector<16x32xf32>
    %c0_4 = arith.constant 0 : index
    %c0_5 = arith.constant 0 : index
    %6 = vector.load %arg5[%c0_4, %c0_5] : memref<16x32xf32, #tpu.memory_space<vmem>>, vector<16x32xf32>
    %7 = arith.addf %5, %6 : vector<16x32xf32>
    %c0_6 = arith.constant 0 : index
    %c0_7 = arith.constant 0 : index
    %8 = vector.load %arg6[%c0_6, %c0_7] : memref<16x32xf32, #tpu.memory_space<vmem>>, vector<16x32xf32>
    tpu.vector_store %arg6[%c0_6, %c0_7], %7 {strides = array<i32>} : memref<16x32xf32, #tpu.memory_space<vmem>>, vector<16x32xf32>,
    return
  }
  func.func @transform_0(%arg0: i32, %arg1: i32) -> (i32, i32) {
    %c0_i32 = arith.constant 0 : i32
    %c0_i32_0 = arith.constant 0 : i32
    %c0_i32_1 = arith.constant 0 : i32
    return %c0_i32, %c0_i32_0 : i32, i32
  }
  func.func @transform_1(%arg0: i32, %arg1: i32) -> (i32, i32) {
    %c0_i32 = arith.constant 0 : i32
    %c0_i32_0 = arith.constant 0 : i32
    return %arg0, %c0_i32 : i32, i32
  }
  func.func @transform_2(%arg0: i32, %arg1: i32) -> (i32, i32) {
    %c0_i32 = arith.constant 0 : i32
    %c0_i32_0 = arith.constant 0 : i32
    return %c0_i32, %arg1 : i32, i32
  }
  func.func @transform_3(%arg0: i32, %arg1: i32) -> (i32, i32) {
    %c0_i32 = arith.constant 0 : i32
    return %arg0, %arg1 : i32, i32
  }
  func.func @transform_4(%arg0: i32, %arg1: i32) -> (i32, i32) {
    %c0_i32 = arith.constant 0 : i32
    return %arg0, %arg1 : i32, i32
  }
}

module attributes {stable_mosaic.version = 11 : i64} {
  func.func @_ln_kernel(%arg0: i32, %arg1: memref<1x32xf32, #tpu.memory_space<vmem>>, %arg2: memref<16x32xf32, #tpu.memory_space<vmem>>, %arg3: memref<16x32xf32, #tpu.memory_space<vmem>>) attributes {dimension_semantics = [#tpu.dimension_semantics<parallel>], iteration_bounds = array<i64: 1>, scalar_prefetch = 0 : i64, scratch_operands = 0 : i64, tpu.core_type = #tpu.core_type<tc>, window_params = [{pipeline_mode = #tpu.pipeline_mode<synchronous>, transform_indices = @transform_0, window_bounds = array<i64: 1, 32>}, {transform_indices = @transform_1, window_bounds = array<i64: 16, 32>}, {transform_indices = @transform_2, window_bounds = array<i64: 16, 32>}]} {
    %c0 = arith.constant 0 : index
    %c0_0 = arith.constant 0 : index
    %0 = vector.load %arg2[%c0, %c0_0] : memref<16x32xf32, #tpu.memory_space<vmem>>, vector<16x32xf32>
    %c0_1 = arith.constant 0 : index
    %c0_2 = arith.constant 0 : index
    %1 = vector.load %arg1[%c0_1, %c0_2] : memref<1x32xf32, #tpu.memory_space<vmem>>, vector<1x32xf32>
    %cst = arith.constant dense<0.000000e+00> : vector<16xf32>
    %2 = vector.multi_reduction <add>, %0, %cst [1] : vector<16x32xf32> to vector<16xf32>
    %3 = vector.shape_cast %2 : vector<16xf32> to vector<16x1xf32>
    %cst_3 = arith.constant 3.200000e+01 : f32
    %4 = vector.broadcast %cst_3 : f32 to vector<16x1xf32>
    %5 = arith.divf %3, %4 : vector<16x1xf32>
    %6 = vector.broadcast %5 : vector<16x1xf32> to vector<16x32xf32>
    %7 = arith.subf %0, %6 : vector<16x32xf32>
    %8 = arith.mulf %7, %7 : vector<16x32xf32>
    %cst_4 = arith.constant dense<0.000000e+00> : vector<16xf32>
    %9 = vector.multi_reduction <add>, %8, %cst_4 [1] : vector<16x32xf32> to vector<16xf32>
    %10 = vector.shape_cast %9 : vector<16xf32> to vector<16x1xf32>
    %cst_5 = arith.constant 3.200000e+01 : f32
    %11 = vector.broadcast %cst_5 : f32 to vector<16x1xf32>
    %12 = arith.divf %10, %11 : vector<16x1xf32>
    %cst_6 = arith.constant 9.99999974E-6 : f32
    %13 = vector.broadcast %cst_6 : f32 to vector<16x1xf32>
    %14 = arith.addf %12, %13 : vector<16x1xf32>
    %15 = math.rsqrt %14 : vector<16x1xf32>
    %16 = vector.broadcast %15 : vector<16x1xf32> to vector<16x32xf32>
    %17 = arith.mulf %7, %16 : vector<16x32xf32>
    %18 = vector.broadcast %1 : vector<1x32xf32> to vector<16x32xf32>
    %19 = arith.mulf %17, %18 : vector<16x32xf32>
    %c0_7 = arith.constant 0 : index
    %c0_8 = arith.constant 0 : index
    %20 = vector.load %arg3[%c0_7, %c0_8] : memref<16x32xf32, #tpu.memory_space<vmem>>, vector<16x32xf32>
    tpu.vector_store %arg3[%c0_7, %c0_8], %19 {strides = array<i32>} : memref<16x32xf32, #tpu.memory_space<vmem>>, vector<16x32xf32>,
    return
  }
  func.func @transform_0(%arg0: i32) -> (i32, i32) {
    %c0_i32 = arith.constant 0 : i32
    %c0_i32_0 = arith.constant 0 : i32
    %c0_i32_1 = arith.constant 0 : i32
    return %c0_i32, %c0_i32_0 : i32, i32
  }
  func.func @transform_1(%arg0: i32) -> (i32, i32) {
    %c0_i32 = arith.constant 0 : i32
    %c0_i32_0 = arith.constant 0 : i32
    return %arg0, %c0_i32 : i32, i32
  }
  func.func @transform_2(%arg0: i32) -> (i32, i32) {
    %c0_i32 = arith.constant 0 : i32
    %c0_i32_0 = arith.constant 0 : i32
    return %arg0, %c0_i32 : i32, i32
  }
}

</mosaic_0001>

<llo_original>
// kernel: transformer_blocks.19
$region0: #{transformer_blocks.19}
  #allocation0 [shape = 'u32[]', space=smem, size = 0x4, offset = 0x4, fixed_abs, tag = 'smem constant byte address 0x4 - core index']
  #allocation1 [shape = 'u32[72,128]{1,0:T(1,128)}', space=vmem, size = 0x9000, scoped, tag = 'internal scratch']
  %s0 = inlined_call_operand.vmem [shape: f32[1,32], index: 0, kind: input, shape index: {}]
  %s1 = inlined_call_operand.vmem [shape: f32[1,8], index: 1, kind: input, shape index: {}]
  %s2 = inlined_call_operand.vmem [shape: f32[1,8], index: 2, kind: input, shape index: {}]
  %s3 = inlined_call_operand.vmem [shape: f32[2,8,32], index: 3, kind: input, shape index: {}]
  %s4 = inlined_call_operand.vmem [shape: bf16[32,16], index: 4, kind: input, shape index: {}]
  %s5 = inlined_call_operand.vmem [shape: bf16[32,16], index: 5, kind: input, shape index: {}]
  %s6 = inlined_call_operand.vmem [shape: bf16[32,16], index: 6, kind: input, shape index: {}]
  %s7 = inlined_call_operand.vmem [shape: bf16[2,8,16], index: 7, kind: output, shape index: {0}]
  %s8 = inlined_call_operand.vmem [shape: bf16[2,8,16], index: 8, kind: output, shape index: {1}]
  %s9 = inlined_call_operand.vmem [shape: bf16[2,8,16], index: 9, kind: output, shape index: {2}]
  %10 = xla_tuple %s7, %s8, %s9
  %s11 = sld [smem:[#allocation0]]
  $region77: #{transformer_blocks.19} parent=0
    _
  %s13 = ssub.s32 1, %s11
  %s14 = scalar_select 0, %s13, %s11
  loop: start=0, step=1, limit=4
  $region2: #{transformer_blocks.19} parent=0 // loop_pre_header
    _
  $region3: #{transformer_blocks.19} parent=0 // loop_header
    %s16 = sphi 0, %s20
    %p17 = scmp.ge.s32.totalorder %s16, 4
    %s23 = sphi 0, %s35
    %s24 = sphi 0, %s31
    %s25 = sphi 0, %s23
    %s26 = sphi 0, %s24
    %s27 = sphi 0, %s25
    %s28 = sphi 0, %s26
    %s36 = sphi 0, %s36
    %s38 = sphi 0, %s36
    %s39 = sphi 0, %s38
    %s53 = sphi 0, %s39
    %s57 = sphi 0, %s57
    %s59 = sphi 0, %s57
    %s60 = sphi 0, %s59
    %s74 = sphi 0, %s60
    %s78 = sphi 0, %s78
    %s80 = sphi 0, %s78
    %s81 = sphi 0, %s80
    %s95 = sphi 0, %s81
    %s103 = sphi 0, %s105
    %s106 = sphi 0, %s103
    %s107 = sphi 0, %s106
    %s123 = sphi 0, %s107
    %s127 = sphi 0, %s127
    %s129 = sphi 0, %s127
    %s130 = sphi 0, %s129
    %s144 = sphi 0, %s130
    %s148 = sphi 0, %s148
    %s150 = sphi 0, %s148
    %s151 = sphi 0, %s150
    %s165 = sphi 0, %s151
    %s169 = sphi 0, %s169
    %s171 = sphi 0, %s169
    %s172 = sphi 0, %s171
    %s186 = sphi 0, %s172
    %s194 = sphi 0, %s196
    %s197 = sphi 0, %s194
    %s198 = sphi 0, %s197
    %s214 = sphi 0, %s198
    %s222 = sphi 0, %s224
    %s225 = sphi 0, %s222
    %s226 = sphi 0, %s225
    %s242 = sphi 0, %s226
    %s250 = sphi 0, %s252
    %s253 = sphi 0, %s250
    %s254 = sphi 0, %s253
    %s270 = sphi 0, %s254
  $region4: #{transformer_blocks.19} parent=0 // loop_header_branch
    %19 = sbr.rel (%p17) target = $region8
  $region5: #{transformer_blocks.19} parent=0 // loop_body
    %s21 = ssub.s32 %s16, 1
    %s22 = ssub.s32 %s16, 2
    %s29 = sadd.s32 1, %s24
    %p30 = scmp.ge.s32.totalorder %s29, 1
    %s31 = scalar_select %p30, 0, %s29
    %s32 = sadd.s32 1, %s23
    %s33 = scalar_select %p30, %s32, %s23
    %p34 = scmp.ge.s32.totalorder %s33, 2
    %s35 = scalar_select %p34, 0, %s33
    %s37 = sadd.s32 %s36, 1
    %p40 = scmp.eq.s32.totalorder %s16, 1
    %p41 = scmp.ne.s32.totalorder %s36, %s38
    %p42 = scmp.eq.s32.totalorder %s16, 0
    %p43 = por %p41, %p42
    %p44 = scmp.ne.s32.totalorder %s36, %s38
    %p45 = scmp.eq.s32.totalorder %s21, 1
    %p46 = por %p44, %p45
    %p47 = scmp.ne.s32.totalorder %s38, %s39
    %p48 = scmp.eq.s32.totalorder %s21, 0
    %p49 = por %p47, %p48
    %p50 = scmp.ne.s32.totalorder %s38, %s39
    %p51 = scmp.eq.s32.totalorder %s22, 1
    %p52 = por %p50, %p51
    %p54 = scmp.ne.s32.totalorder %s39, %s53
    %p55 = scmp.eq.s32.totalorder %s22, 0
    %p56 = por %p54, %p55
    %s58 = sadd.s32 %s57, 1
    %p61 = scmp.eq.s32.totalorder %s16, 1
    %p62 = scmp.ne.s32.totalorder %s57, %s59
    %p63 = scmp.eq.s32.totalorder %s16, 0
    %p64 = por %p62, %p63
    %p65 = scmp.ne.s32.totalorder %s57, %s59
    %p66 = scmp.eq.s32.totalorder %s21, 1
    %p67 = por %p65, %p66
    %p68 = scmp.ne.s32.totalorder %s59, %s60
    %p69 = scmp.eq.s32.totalorder %s21, 0
    %p70 = por %p68, %p69
    %p71 = scmp.ne.s32.totalorder %s59, %s60
    %p72 = scmp.eq.s32.totalorder %s22, 1
    %p73 = por %p71, %p72
    %p75 = scmp.ne.s32.totalorder %s60, %s74
    %p76 = scmp.eq.s32.totalorder %s22, 0
    %p77 = por %p75, %p76
    %s79 = sadd.s32 %s78, 1
    %p82 = scmp.eq.s32.totalorder %s16, 1
    %p83 = scmp.ne.s32.totalorder %s78, %s80
    %p84 = scmp.eq.s32.totalorder %s16, 0
    %p85 = por %p83, %p84
    %p86 = scmp.ne.s32.totalorder %s78, %s80
    %p87 = scmp.eq.s32.totalorder %s21, 1
    %p88 = por %p86, %p87
    %p89 = scmp.ne.s32.totalorder %s80, %s81
    %p90 = scmp.eq.s32.totalorder %s21, 0
    %p91 = por %p89, %p90
    %p92 = scmp.ne.s32.totalorder %s80, %s81
    %p93 = scmp.eq.s32.totalorder %s22, 1
    %p94 = por %p92, %p93
    %p96 = scmp.ne.s32.totalorder %s81, %s95
    %p97 = scmp.eq.s32.totalorder %s22, 0
    %p98 = por %p96, %p97
    %s99 = ssub.s32 %s23, %s35
    %s100 = ssub.s32 %s24, %s31
    %s101 = sor.u32 %s99, %s100
    %p102 = scmp.eq.s32.totalorder %s101, 0
    %s104 = sadd.s32 %s103, 1
    %s105 = scalar_select %p102, %s103, %s104
    %p108 = pneg %p102
    %p109 = scmp.eq.s32.totalorder %s16, 1
    %p110 = por %p108, %p109
    %p111 = scmp.ne.s32.totalorder %s103, %s106
    %p112 = scmp.eq.s32.totalorder %s16, 0
    %p113 = por %p111, %p112
    %p114 = scmp.ne.s32.totalorder %s103, %s106
    %p115 = scmp.eq.s32.totalorder %s21, 1
    %p116 = por %p114, %p115
    %p117 = scmp.ne.s32.totalorder %s106, %s107
    %p118 = scmp.eq.s32.totalorder %s21, 0
    %p119 = por %p117, %p118
    %p120 = scmp.ne.s32.totalorder %s106, %s107
    %p121 = scmp.eq.s32.totalorder %s22, 1
    %p122 = por %p120, %p121
    %p124 = scmp.ne.s32.totalorder %s107, %s123
    %p125 = scmp.eq.s32.totalorder %s22, 0
    %p126 = por %p124, %p125
    %s128 = sadd.s32 %s127, 1
    %p131 = scmp.eq.s32.totalorder %s16, 1
    %p132 = scmp.ne.s32.totalorder %s127, %s129
    %p133 = scmp.eq.s32.totalorder %s16, 0
    %p134 = por %p132, %p133
    %p135 = scmp.ne.s32.totalorder %s127, %s129
    %p136 = scmp.eq.s32.totalorder %s21, 1
    %p137 = por %p135, %p136
    %p138 = scmp.ne.s32.totalorder %s129, %s130
    %p139 = scmp.eq.s32.totalorder %s21, 0
    %p140 = por %p138, %p139
    %p141 = scmp.ne.s32.totalorder %s129, %s130
    %p142 = scmp.eq.s32.totalorder %s22, 1
    %p143 = por %p141, %p142
    %p145 = scmp.ne.s32.totalorder %s130, %s144
    %p146 = scmp.eq.s32.totalorder %s22, 0
    %p147 = por %p145, %p146
    %s149 = sadd.s32 %s148, 1
    %p152 = scmp.eq.s32.totalorder %s16, 1
    %p153 = scmp.ne.s32.totalorder %s148, %s150
    %p154 = scmp.eq.s32.totalorder %s16, 0
    %p155 = por %p153, %p154
    %p156 = scmp.ne.s32.totalorder %s148, %s150
    %p157 = scmp.eq.s32.totalorder %s21, 1
    %p158 = por %p156, %p157
    %p159 = scmp.ne.s32.totalorder %s150, %s151
    %p160 = scmp.eq.s32.totalorder %s21, 0
    %p161 = por %p159, %p160
    %p162 = scmp.ne.s32.totalorder %s150, %s151
    %p163 = scmp.eq.s32.totalorder %s22, 1
    %p164 = por %p162, %p163
    %p166 = scmp.ne.s32.totalorder %s151, %s165
    %p167 = scmp.eq.s32.totalorder %s22, 0
    %p168 = por %p166, %p167
    %s170 = sadd.s32 %s169, 1
    %p173 = scmp.eq.s32.totalorder %s16, 1
    %p174 = scmp.ne.s32.totalorder %s169, %s171
    %p175 = scmp.eq.s32.totalorder %s16, 0
    %p176 = por %p174, %p175
    %p177 = scmp.ne.s32.totalorder %s169, %s171
    %p178 = scmp.eq.s32.totalorder %s21, 1
    %p179 = por %p177, %p178
    %p180 = scmp.ne.s32.totalorder %s171, %s172
    %p181 = scmp.eq.s32.totalorder %s21, 0
    %p182 = por %p180, %p181
    %p183 = scmp.ne.s32.totalorder %s171, %s172
    %p184 = scmp.eq.s32.totalorder %s22, 1
    %p185 = por %p183, %p184
    %p187 = scmp.ne.s32.totalorder %s172, %s186
    %p188 = scmp.eq.s32.totalorder %s22, 0
    %p189 = por %p187, %p188
    %s190 = ssub.s32 %s23, %s35
    %s191 = ssub.s32 %s24, %s31
    %s192 = sor.u32 %s190, %s191
    %p193 = scmp.eq.s32.totalorder %s192, 0
    %s195 = sadd.s32 %s194, 1
    %s196 = scalar_select %p193, %s194, %s195
    %p199 = pneg %p193
    %p200 = scmp.eq.s32.totalorder %s16, 1
    %p201 = por %p199, %p200
    %p202 = scmp.ne.s32.totalorder %s194, %s197
    %p203 = scmp.eq.s32.totalorder %s16, 0
    %p204 = por %p202, %p203
    %p205 = scmp.ne.s32.totalorder %s194, %s197
    %p206 = scmp.eq.s32.totalorder %s21, 1
    %p207 = por %p205, %p206
    %p208 = scmp.ne.s32.totalorder %s197, %s198
    %p209 = scmp.eq.s32.totalorder %s21, 0
    %p210 = por %p208, %p209
    %p211 = scmp.ne.s32.totalorder %s197, %s198
    %p212 = scmp.eq.s32.totalorder %s22, 1
    %p213 = por %p211, %p212
    %p215 = scmp.ne.s32.totalorder %s198, %s214
    %p216 = scmp.eq.s32.totalorder %s22, 0
    %p217 = por %p215, %p216
    %s218 = ssub.s32 %s23, %s35
    %s219 = ssub.s32 %s24, %s31
    %s220 = sor.u32 %s218, %s219
    %p221 = scmp.eq.s32.totalorder %s220, 0
    %s223 = sadd.s32 %s222, 1
    %s224 = scalar_select %p221, %s222, %s223
    %p227 = pneg %p221
    %p228 = scmp.eq.s32.totalorder %s16, 1
    %p229 = por %p227, %p228
    %p230 = scmp.ne.s32.totalorder %s222, %s225
    %p231 = scmp.eq.s32.totalorder %s16, 0
    %p232 = por %p230, %p231
    %p233 = scmp.ne.s32.totalorder %s222, %s225
    %p234 = scmp.eq.s32.totalorder %s21, 1
    %p235 = por %p233, %p234
    %p236 = scmp.ne.s32.totalorder %s225, %s226
    %p237 = scmp.eq.s32.totalorder %s21, 0
    %p238 = por %p236, %p237
    %p239 = scmp.ne.s32.totalorder %s225, %s226
    %p240 = scmp.eq.s32.totalorder %s22, 1
    %p241 = por %p239, %p240
    %p243 = scmp.ne.s32.totalorder %s226, %s242
    %p244 = scmp.eq.s32.totalorder %s22, 0
    %p245 = por %p243, %p244
    %s246 = ssub.s32 %s23, %s35
    %s247 = ssub.s32 %s24, %s31
    %s248 = sor.u32 %s246, %s247
    %p249 = scmp.eq.s32.totalorder %s248, 0
    %s251 = sadd.s32 %s250, 1
    %s252 = scalar_select %p249, %s250, %s251
    %p255 = pneg %p249
    %p256 = scmp.eq.s32.totalorder %s16, 1
    %p257 = por %p255, %p256
    %p258 = scmp.ne.s32.totalorder %s250, %s253
    %p259 = scmp.eq.s32.totalorder %s16, 0
    %p260 = por %p258, %p259
    %p261 = scmp.ne.s32.totalorder %s250, %s253
    %p262 = scmp.eq.s32.totalorder %s21, 1
    %p263 = por %p261, %p262
    %p264 = scmp.ne.s32.totalorder %s253, %s254
    %p265 = scmp.eq.s32.totalorder %s21, 0
    %p266 = por %p264, %p265
    %p267 = scmp.ne.s32.totalorder %s253, %s254
    %p268 = scmp.eq.s32.totalorder %s22, 1
    %p269 = por %p267, %p268
    %p271 = scmp.ne.s32.totalorder %s254, %s270
    %p272 = scmp.eq.s32.totalorder %s22, 0
    %p273 = por %p271, %p272
    %p274 = scmp.le.s32.totalorder 1, %s16
    %p275 = scmp.lt.s32.totalorder %s16, 3
    %p276 = pnand %p274, %p275
    %p277 = pneg %p276
    // Predicated region
    $region9: #{transformer_blocks.19} parent=5 // pred_check
      _
    $region10: #{transformer_blocks.19} parent=5 // pred_check_branch
      %279 = sbr.rel (%p276) target = $region12
    $region11: #{transformer_blocks.19} parent=5 // pred_region
      %s280 = ssub.s32 %s16, 1
      // Predicated region
      $region13: #{transformer_blocks.19} parent=11 // pred_check
        %p281 = pneg %p49
      $region14: #{transformer_blocks.19} parent=11 // pred_check_branch
        %283 = sbr.rel (%p281) target = $region16
      $region15: #{transformer_blocks.19} parent=11 // pred_region
        _
      $region16: #{transformer_blocks.19} parent=11 // pred_fallthru
        _
      // Predicated region
      $region17: #{transformer_blocks.19} parent=11 // pred_check
        %p284 = pneg %p70
      $region18: #{transformer_blocks.19} parent=11 // pred_check_branch
        %286 = sbr.rel (%p284) target = $region20
      $region19: #{transformer_blocks.19} parent=11 // pred_region
        _
      $region20: #{transformer_blocks.19} parent=11 // pred_fallthru
        _
      // Predicated region
      $region21: #{transformer_blocks.19} parent=11 // pred_check
        %p287 = pneg %p91
      $region22: #{transformer_blocks.19} parent=11 // pred_check_branch
        %289 = sbr.rel (%p287) target = $region24
      $region23: #{transformer_blocks.19} parent=11 // pred_region
        _
      $region24: #{transformer_blocks.19} parent=11 // pred_fallthru
        _
      // Predicated region
      $region25: #{transformer_blocks.19} parent=11 // pred_check
        %p290 = pneg %p140
      $region26: #{transformer_blocks.19} parent=11 // pred_check_branch
        %292 = sbr.rel (%p290) target = $region28
      $region27: #{transformer_blocks.19} parent=11 // pred_region
        _
      $region28: #{transformer_blocks.19} parent=11 // pred_fallthru
        _
      // Predicated region
      $region29: #{transformer_blocks.19} parent=11 // pred_check
        %p293 = pneg %p161
      $region30: #{transformer_blocks.19} parent=11 // pred_check_branch
        %295 = sbr.rel (%p293) target = $region32
      $region31: #{transformer_blocks.19} parent=11 // pred_region
        _
      $region32: #{transformer_blocks.19} parent=11 // pred_fallthru
        _
      // Predicated region
      $region33: #{transformer_blocks.19} parent=11 // pred_check
        %p296 = pneg %p182
      $region34: #{transformer_blocks.19} parent=11 // pred_check_branch
        %298 = sbr.rel (%p296) target = $region36
      $region35: #{transformer_blocks.19} parent=11 // pred_region
        _
      $region36: #{transformer_blocks.19} parent=11 // pred_fallthru
        _
    $region12: #{transformer_blocks.19} parent=5 // pred_fallthru
      _
    %p299 = scmp.lt.s32.totalorder %s16, 2
    // Predicated region
    $region37: #{transformer_blocks.19} parent=5 // pred_check
      %p300 = pneg %p299
    $region38: #{transformer_blocks.19} parent=5 // pred_check_branch
      %302 = sbr.rel (%p300) target = $region40
    $region39: #{transformer_blocks.19} parent=5 // pred_region
      // Predicated region
      $region41: #{transformer_blocks.19} parent=39 // pred_check
        %p303 = pneg %p113
      $region42: #{transformer_blocks.19} parent=39 // pred_check_branch
        %305 = sbr.rel (%p303) target = $region44
      $region43: #{transformer_blocks.19} parent=39 // pred_region
        %p306 = scmp.lt.s32.totalorder %s23, 1
        %s307 = scalar_select %p306, %s23, 1
        %p308 = scmp.lt.s32.totalorder %s24, 0
        %s309 = scalar_select %p308, %s24, 0
        %s310 = sadd.s32 %s309, %s307
        %s311 = smul.addr %s310, 8
        %s312 = scalar_lea.vmem %s3, %s311
      $region44: #{transformer_blocks.19} parent=39 // pred_fallthru
        _
    $region40: #{transformer_blocks.19} parent=5 // pred_fallthru
      _
    %p313 = scmp.le.s32.totalorder 1, %s16
    %p314 = scmp.lt.s32.totalorder %s16, 3
    %p315 = pnand %p313, %p314
    %p316 = pneg %p315
    // Predicated region
    $region45: #{transformer_blocks.19} parent=5 // pred_check
      _
    $region46: #{transformer_blocks.19} parent=5 // pred_check_branch
      %318 = sbr.rel (%p315) target = $region48
    $region47: #{transformer_blocks.19} parent=5 // pred_region
      %s319 = ssub.s32 %s16, 1
      %p320 = pneg %p49
      %p321 = pneg %p46
      %p322 = pneg %p70
      %p323 = pneg %p67
      %p324 = pneg %p91
      %p325 = pneg %p88
      %p326 = scmp.lt.s32.totalorder %s25, 1
      %s327 = scalar_select %p326, %s25, 1
      %p328 = scmp.lt.s32.totalorder %s26, 0
      %s329 = scalar_select %p328, %s26, 0
      %s330 = sadd.s32 %s329, %s327
      %s331 = smul.addr %s330, 8
      %s332 = scalar_lea.vmem %s3, %s331
      %p333 = pneg %p119
      %p334 = pneg %p116
      %p335 = pneg %p140
      %p336 = pneg %p137
      %p337 = pneg %p161
      %p338 = pneg %p158
      %p339 = pneg %p182
      %p340 = pneg %p179
      %p341 = pneg %p210
      %p342 = pneg %p207
      %p343 = scmp.lt.s32.totalorder %s25, 1
      %s344 = scalar_select %p343, %s25, 1
      %p345 = scmp.lt.s32.totalorder %s26, 0
      %s346 = scalar_select %p345, %s26, 0
      %s347 = sadd.s32 %s346, %s344
      %s348 = smul.addr %s347, 4
      %s349 = scalar_lea.vmem %s7, %s348
      %p350 = pneg %p238
      %p351 = pneg %p235
      %p352 = scmp.lt.s32.totalorder %s25, 1
      %s353 = scalar_select %p352, %s25, 1
      %p354 = scmp.lt.s32.totalorder %s26, 0
      %s355 = scalar_select %p354, %s26, 0
      %s356 = sadd.s32 %s355, %s353
      %s357 = smul.addr %s356, 4
      %s358 = scalar_lea.vmem %s8, %s357
      %p359 = pneg %p266
      %p360 = pneg %p263
      %p361 = scmp.lt.s32.totalorder %s25, 1
      %s362 = scalar_select %p361, %s25, 1
      %p363 = scmp.lt.s32.totalorder %s26, 0
      %s364 = scalar_select %p363, %s26, 0
      %s365 = sadd.s32 %s364, %s362
      %s366 = smul.addr %s365, 4
      %s367 = scalar_lea.vmem %s9, %s366
      %p368 = scmp.lt.s32.totalorder %s25, 1
      %s369 = scalar_select %p368, %s25, 1
      %p370 = scmp.lt.s32.totalorder %s26, 0
      %s371 = scalar_select %p370, %s26, 0
      %s372 = sadd.s32 %s371, %s369
      %s373 = smul.addr %s372, 8
      %s374 = scalar_lea.vmem %s3, %s373
      %p375 = scmp.lt.s32.totalorder %s25, 1
      %s376 = scalar_select %p375, %s25, 1
      %p377 = scmp.lt.s32.totalorder %s26, 0
      %s378 = scalar_select %p377, %s26, 0
      %s379 = sadd.s32 %s378, %s376
      %s380 = smul.addr %s379, 4
      %s381 = scalar_lea.vmem %s7, %s380
      %p382 = scmp.lt.s32.totalorder %s25, 1
      %s383 = scalar_select %p382, %s25, 1
      %p384 = scmp.lt.s32.totalorder %s26, 0
      %s385 = scalar_select %p384, %s26, 0
      %s386 = sadd.s32 %s385, %s383
      %s387 = smul.addr %s386, 4
      %s388 = scalar_lea.vmem %s8, %s387
      %p389 = scmp.lt.s32.totalorder %s25, 1
      %s390 = scalar_select %p389, %s25, 1
      %p391 = scmp.lt.s32.totalorder %s26, 0
      %s392 = scalar_select %p391, %s26, 0
      %s393 = sadd.s32 %s392, %s390
      %s394 = smul.addr %s393, 4
      %s395 = scalar_lea.vmem %s9, %s394
      %v397 = vld [vmem:[%s374] sm:$0xff]
      %v398 = vld [vmem:[%s0] sm:$0x1]
      %vm399 = vcmask 261120
      %v400 = vsel %vm399, %v397, 0.0
      %401 = vadd.xlane.f32.xlu0 %v400
      %v402 = vpop.xlane.xlu0 %401
      %v403 = vrcp.pop 32.0
      %v404 = vmul.f32 32.0, %v403
      %v405 = vsub.f32 1.0, %v404
      %v406 = vmul.f32 %v403, %v405
      %v407 = vadd.f32 %v403, %v406
      %vm408 = vweird.f32 %v403
      %v409 = vsel %vm408, %v403, %v407
      %v410 = vmul.f32 %v402, %v409
      %v411 = vsub.f32 %v397, %v410
      %v412 = vmul.f32 %v411, %v411
      %v413 = vsel %vm399, %v412, 0.0
      %414 = vadd.xlane.f32.xlu0 %v413
      %v415 = vpop.xlane.xlu0 %414
      %v416 = vmul.f32 %v415, %v409
      %v417 = vadd.f32 %v416, 1e-05
      %v418 = vrsqrt.pop %v417
      %v419 = vmul.f32 %v418, %v417
      %v420 = vmul.f32 %v419, %v418
      %v421 = vmul.f32 0.5, %v420
      %v422 = vsub.f32 1.5, %v421
      %v423 = vmul.f32 %v418, %v422
      %vm424 = vweird.f32 %v417
      %vm425 = vweird.f32 %v418
      %vm426 = vmor %vm424, %vm425
      %v427 = vsel %vm426, %v418, %v423
      %v428 = vmul.f32 %v411, %v427
      %v430 = vperm.slane %v398, 0
      %v432 = vmul.f32 %v428, %v430
      %v433 = vpack.c.bf16 %v432, %v432
      %v434 = vld [vmem:[%s4] sm:$0xf]
      %v435 = vld [vmem:[%s4 + $0x4] sm:$0xf]
      %v436 = vld [vmem:[%s4 + $0x8] sm:$0xf]
      %v437 = vld [vmem:[%s4 + $0xc] sm:$0xf]
      %v442 = vunpack.c.l.b16 %v434
      %v443 = vunpack.c.l.b16 %v435
      %v444 = vunpack.c.l.b16 %v436
      %v445 = vunpack.c.l.b16 %v437
      %v446 = vpack.c.b16 %v443, %v442
      %v447 = vpack.c.b16 %v445, %v444
      %v451 = vsel %vm399, %v433, 0
      %453 = vmatpush.bf16.msra.mxu0 0
      %454 = vmatpush.bf16.msra.mxu0 0
      %455 = vmatpush.bf16.msra.mxu0 0
      %456 = vmatpush.bf16.msra.mxu0 0
      %457 = vmatpush.bf16.msra.mxu0 0
      %458 = vmatpush.bf16.msra.mxu0 0
      %459 = vmatpush.bf16.msra.mxu0 %v447
      %460 = vmatpush.bf16.msra.mxu0 %v446
      %461 = vmatmul.bf16.gmra.mxu0 %v451
      %v462 = vpop.f32.mrf.mxu0
      %v463 = vadd.f32 0.0, %v462
      %v464 = vpop.f32.mrf.mxu0
      %465 = vdwg.mxu0
      %v466 = vld [vmem:[%s1] sm:$0x1]
      %v467 = vmul.f32 %v463, %v463
      %vm468 = vcmask 64512
      %v469 = vsel %vm468, %v467, 0.0
      %470 = vadd.xlane.f32.xlu0 %v469
      %v471 = vpop.xlane.xlu0 %470
      %v472 = vmax.f32 %v471, 1e-24
      %v473 = vrsqrt.pop %v472
      %v474 = vmul.f32 %v473, %v472
      %v475 = vmul.f32 %v474, %v473
      %v476 = vmul.f32 0.5, %v475
      %v477 = vsub.f32 1.5, %v476
      %v478 = vmul.f32 %v473, %v477
      %vm479 = vweird.f32 %v472
      %vm480 = vweird.f32 %v473
      %vm481 = vmor %vm479, %vm480
      %v482 = vsel %vm481, %v473, %v478
      %v483 = vmul.f32 %v463, %v482
      %v485 = vperm.slane %v466, 0
      %v487 = vmul.f32 %v483, %v485
      %489 = vrot.lane.b32.xlu0 %v467, 120
      %v490 = vpop.permute.xlu0 %489
      %v492 = vsel %vm468, %v490, 0.0
      %493 = vadd.xlane.f32.xlu0 %v492
      %v494 = vpop.xlane.xlu0 %493
      %v495 = vmax.f32 %v494, 1e-24
      %v496 = vrsqrt.pop %v495
      %v497 = vmul.f32 %v496, %v495
      %v498 = vmul.f32 %v497, %v496
      %v499 = vmul.f32 0.5, %v498
      %v500 = vsub.f32 1.5, %v499
      %v501 = vmul.f32 %v496, %v500
      %vm502 = vweird.f32 %v495
      %vm503 = vweird.f32 %v496
      %vm504 = vmor %vm502, %vm503
      %v505 = vsel %vm504, %v496, %v501
      %v506 = vmul.f32 %v463, %v505
      %507 = vrot.lane.b32.xlu0 %v485, 8
      %v508 = vpop.permute.xlu0 %507
      %v510 = vmul.f32 %v506, %v508
      %v511 = vsel %vm468, %v487, %v510
      %v512 = vpack.c.bf16 %v511, %v511
      %vm513 = vcmask 125952
      %514 = vst.msk [vmem:[%s381] sm:$0xf] %vm513, %v512
      %v515 = vld [vmem:[%s5] sm:$0xf]
      %v516 = vld [vmem:[%s5 + $0x4] sm:$0xf]
      %v517 = vld [vmem:[%s5 + $0x8] sm:$0xf]
      %v518 = vld [vmem:[%s5 + $0xc] sm:$0xf]
      %v523 = vunpack.c.l.b16 %v515
      %v524 = vunpack.c.l.b16 %v516
      %v525 = vunpack.c.l.b16 %v517
      %v526 = vunpack.c.l.b16 %v518
      %v527 = vpack.c.b16 %v524, %v523
      %v528 = vpack.c.b16 %v526, %v525
      %531 = vmatpush.bf16.msra.mxu0 0
      %532 = vmatpush.bf16.msra.mxu0 0
      %533 = vmatpush.bf16.msra.mxu0 0
      %534 = vmatpush.bf16.msra.mxu0 0
      %535 = vmatpush.bf16.msra.mxu0 0
      %536 = vmatpush.bf16.msra.mxu0 0
      %537 = vmatpush.bf16.msra.mxu0 %v528
      %538 = vmatpush.bf16.msra.mxu0 %v527
      %539 = vmatmul.bf16.gmra.mxu0 %v451
      %v540 = vpop.f32.mrf.mxu0
      %v541 = vadd.f32 0.0, %v540
      %v542 = vpop.f32.mrf.mxu0
      %543 = vdwg.mxu0
      %v544 = vld [vmem:[%s2] sm:$0x1]
      %v545 = vmul.f32 %v541, %v541
      %v546 = vsel %vm468, %v545, 0.0
      %547 = vadd.xlane.f32.xlu0 %v546
      %v548 = vpop.xlane.xlu0 %547
      %v549 = vmax.f32 %v548, 1e-24
      %v550 = vrsqrt.pop %v549
      %v551 = vmul.f32 %v550, %v549
      %v552 = vmul.f32 %v551, %v550
      %v553 = vmul.f32 0.5, %v552
      %v554 = vsub.f32 1.5, %v553
      %v555 = vmul.f32 %v550, %v554
      %vm556 = vweird.f32 %v549
      %vm557 = vweird.f32 %v550
      %vm558 = vmor %vm556, %vm557
      %v559 = vsel %vm558, %v550, %v555
      %v560 = vmul.f32 %v541, %v559
      %v562 = vperm.slane %v544, 0
      %v564 = vmul.f32 %v560, %v562
      %566 = vrot.lane.b32.xlu0 %v545, 120
      %v567 = vpop.permute.xlu0 %566
      %v569 = vsel %vm468, %v567, 0.0
      %570 = vadd.xlane.f32.xlu0 %v569
      %v571 = vpop.xlane.xlu0 %570
      %v572 = vmax.f32 %v571, 1e-24
      %v573 = vrsqrt.pop %v572
      %v574 = vmul.f32 %v573, %v572
      %v575 = vmul.f32 %v574, %v573
      %v576 = vmul.f32 0.5, %v575
      %v577 = vsub.f32 1.5, %v576
      %v578 = vmul.f32 %v573, %v577
      %vm579 = vweird.f32 %v572
      %vm580 = vweird.f32 %v573
      %vm581 = vmor %vm579, %vm580
      %v582 = vsel %vm581, %v573, %v578
      %v583 = vmul.f32 %v541, %v582
      %584 = vrot.lane.b32.xlu0 %v562, 8
      %v585 = vpop.permute.xlu0 %584
      %v587 = vmul.f32 %v583, %v585
      %v588 = vsel %vm468, %v564, %v587
      %v589 = vpack.c.bf16 %v588, %v588
      %590 = vst.msk [vmem:[%s388] sm:$0xf] %vm513, %v589
      %v591 = vld [vmem:[%s6] sm:$0xf]
      %v592 = vld [vmem:[%s6 + $0x4] sm:$0xf]
      %v593 = vld [vmem:[%s6 + $0x8] sm:$0xf]
      %v594 = vld [vmem:[%s6 + $0xc] sm:$0xf]
      %v599 = vunpack.c.l.b16 %v591
      %v600 = vunpack.c.l.b16 %v592
      %v601 = vunpack.c.l.b16 %v593
      %v602 = vunpack.c.l.b16 %v594
      %v603 = vpack.c.b16 %v600, %v599
      %v604 = vpack.c.b16 %v602, %v601
      %607 = vmatpush.bf16.msra.mxu0 0
      %608 = vmatpush.bf16.msra.mxu0 0
      %609 = vmatpush.bf16.msra.mxu0 0
      %610 = vmatpush.bf16.msra.mxu0 0
      %611 = vmatpush.bf16.msra.mxu0 0
      %612 = vmatpush.bf16.msra.mxu0 0
      %613 = vmatpush.bf16.msra.mxu0 %v604
      %614 = vmatpush.bf16.msra.mxu0 %v603
      %615 = vmatmul.bf16.gmra.mxu0 %v451
      %v616 = vpop.f32.mrf.mxu0
      %v617 = vadd.f32 0.0, %v616
      %v618 = vpop.f32.mrf.mxu0
      %619 = vdwg.mxu0
      %v620 = vpack.c.bf16 %v617, %v617
      %621 = vst.msk [vmem:[%s395] sm:$0xf] %vm513, %v620
      %p622 = scmp.lt.s32.totalorder %s25, 1
      %s623 = scalar_select %p622, %s25, 1
      %p624 = scmp.lt.s32.totalorder %s26, 0
      %s625 = scalar_select %p624, %s26, 0
      %s626 = sadd.s32 %s625, %s623
      %s627 = smul.addr %s626, 4
      %s628 = scalar_lea.vmem %s7, %s627
      %p629 = scmp.lt.s32.totalorder %s25, 1
      %s630 = scalar_select %p629, %s25, 1
      %p631 = scmp.lt.s32.totalorder %s26, 0
      %s632 = scalar_select %p631, %s26, 0
      %s633 = sadd.s32 %s632, %s630
      %s634 = smul.addr %s633, 4
      %s635 = scalar_lea.vmem %s8, %s634
      %p636 = scmp.lt.s32.totalorder %s25, 1
      %s637 = scalar_select %p636, %s25, 1
      %p638 = scmp.lt.s32.totalorder %s26, 0
      %s639 = scalar_select %p638, %s26, 0
      %s640 = sadd.s32 %s639, %s637
      %s641 = smul.addr %s640, 4
      %s642 = scalar_lea.vmem %s9, %s641
      // Predicated region
      $region49: #{transformer_blocks.19} parent=47 // pred_check
        %p643 = pneg %p207
      $region50: #{transformer_blocks.19} parent=47 // pred_check_branch
        %645 = sbr.rel (%p643) target = $region52
      $region51: #{transformer_blocks.19} parent=47 // pred_region
        _
      $region52: #{transformer_blocks.19} parent=47 // pred_fallthru
        _
      // Predicated region
      $region53: #{transformer_blocks.19} parent=47 // pred_check
        %p646 = pneg %p235
      $region54: #{transformer_blocks.19} parent=47 // pred_check_branch
        %648 = sbr.rel (%p646) target = $region56
      $region55: #{transformer_blocks.19} parent=47 // pred_region
        _
      $region56: #{transformer_blocks.19} parent=47 // pred_fallthru
        _
      // Predicated region
      $region57: #{transformer_blocks.19} parent=47 // pred_check
        %p649 = pneg %p263
      $region58: #{transformer_blocks.19} parent=47 // pred_check_branch
        %651 = sbr.rel (%p649) target = $region60
      $region59: #{transformer_blocks.19} parent=47 // pred_region
        _
      $region60: #{transformer_blocks.19} parent=47 // pred_fallthru
        _
    $region48: #{transformer_blocks.19} parent=5 // pred_fallthru
      _
    %p652 = scmp.le.s32.totalorder 2, %s16
    // Predicated region
    $region61: #{transformer_blocks.19} parent=5 // pred_check
      %p653 = pneg %p652
    $region62: #{transformer_blocks.19} parent=5 // pred_check_branch
      %655 = sbr.rel (%p653) target = $region64
    $region63: #{transformer_blocks.19} parent=5 // pred_region
      %s656 = ssub.s32 %s16, 2
      // Predicated region
      $region65: #{transformer_blocks.19} parent=63 // pred_check
        %p657 = pneg %p213
      $region66: #{transformer_blocks.19} parent=63 // pred_check_branch
        %659 = sbr.rel (%p657) target = $region68
      $region67: #{transformer_blocks.19} parent=63 // pred_region
        %p660 = scmp.lt.s32.totalorder %s27, 1
        %s661 = scalar_select %p660, %s27, 1
        %p662 = scmp.lt.s32.totalorder %s28, 0
        %s663 = scalar_select %p662, %s28, 0
        %s664 = sadd.s32 %s663, %s661
        %s665 = smul.addr %s664, 4
        %s666 = scalar_lea.vmem %s7, %s665
      $region68: #{transformer_blocks.19} parent=63 // pred_fallthru
        _
      // Predicated region
      $region69: #{transformer_blocks.19} parent=63 // pred_check
        %p667 = pneg %p241
      $region70: #{transformer_blocks.19} parent=63 // pred_check_branch
        %669 = sbr.rel (%p667) target = $region72
      $region71: #{transformer_blocks.19} parent=63 // pred_region
        %p670 = scmp.lt.s32.totalorder %s27, 1
        %s671 = scalar_select %p670, %s27, 1
        %p672 = scmp.lt.s32.totalorder %s28, 0
        %s673 = scalar_select %p672, %s28, 0
        %s674 = sadd.s32 %s673, %s671
        %s675 = smul.addr %s674, 4
        %s676 = scalar_lea.vmem %s8, %s675
      $region72: #{transformer_blocks.19} parent=63 // pred_fallthru
        _
      // Predicated region
      $region73: #{transformer_blocks.19} parent=63 // pred_check
        %p677 = pneg %p269
      $region74: #{transformer_blocks.19} parent=63 // pred_check_branch
        %679 = sbr.rel (%p677) target = $region76
      $region75: #{transformer_blocks.19} parent=63 // pred_region
        %p680 = scmp.lt.s32.totalorder %s27, 1
        %s681 = scalar_select %p680, %s27, 1
        %p682 = scmp.lt.s32.totalorder %s28, 0
        %s683 = scalar_select %p682, %s28, 0
        %s684 = sadd.s32 %s683, %s681
        %s685 = smul.addr %s684, 4
        %s686 = scalar_lea.vmem %s9, %s685
      $region76: #{transformer_blocks.19} parent=63 // pred_fallthru
        _
    $region64: #{transformer_blocks.19} parent=5 // pred_fallthru
      _
  $region6: #{transformer_blocks.19} parent=0 // loop_footer
    %s20 = sadd.s32 1, %s16
  $region7: #{transformer_blocks.19} parent=0 // loop_footer_branch
    %15 = sbr.rel target = $region3
  $region8: #{transformer_blocks.19} parent=0 // loop_exit
    _

// kernel: transformer_blocks.22
$region0: #{transformer_blocks.22}
  #allocation0 [shape = 'u32[]', space=smem, size = 0x4, offset = 0x4, fixed_abs, tag = 'smem constant byte address 0x4 - core index']
  #allocation1 [shape = 'u32[72,128]{1,0:T(1,128)}', space=vmem, size = 0x9000, scoped, tag = 'internal scratch']
  %s0 = inlined_call_operand.vmem [shape: f32[1,32], index: 0, kind: input, shape index: {}]
  %s1 = inlined_call_operand.vmem [shape: f32[1,8], index: 1, kind: input, shape index: {}]
  %s2 = inlined_call_operand.vmem [shape: f32[2,8,32], index: 2, kind: input, shape index: {}]
  %s3 = inlined_call_operand.vmem [shape: bf16[32,16], index: 3, kind: input, shape index: {}]
  %s4 = inlined_call_operand.vmem [shape: bf16[2,8,16], index: 4, kind: output, shape index: {}]
  %s5 = sld [smem:[#allocation0]]
  $region49: #{transformer_blocks.22} parent=0
    _
  %s7 = ssub.s32 1, %s5
  %s8 = scalar_select 0, %s7, %s5
  loop: start=0, step=1, limit=4
  $region2: #{transformer_blocks.22} parent=0 // loop_pre_header
    _
  $region3: #{transformer_blocks.22} parent=0 // loop_header
    %s10 = sphi 0, %s14
    %p11 = scmp.ge.s32.totalorder %s10, 4
    %s17 = sphi 0, %s29
    %s18 = sphi 0, %s25
    %s19 = sphi 0, %s17
    %s20 = sphi 0, %s18
    %s21 = sphi 0, %s19
    %s22 = sphi 0, %s20
    %s30 = sphi 0, %s30
    %s32 = sphi 0, %s30
    %s33 = sphi 0, %s32
    %s47 = sphi 0, %s33
    %s51 = sphi 0, %s51
    %s53 = sphi 0, %s51
    %s54 = sphi 0, %s53
    %s68 = sphi 0, %s54
    %s76 = sphi 0, %s78
    %s79 = sphi 0, %s76
    %s80 = sphi 0, %s79
    %s96 = sphi 0, %s80
    %s100 = sphi 0, %s100
    %s102 = sphi 0, %s100
    %s103 = sphi 0, %s102
    %s117 = sphi 0, %s103
    %s125 = sphi 0, %s127
    %s128 = sphi 0, %s125
    %s129 = sphi 0, %s128
    %s145 = sphi 0, %s129
  $region4: #{transformer_blocks.22} parent=0 // loop_header_branch
    %13 = sbr.rel (%p11) target = $region8
  $region5: #{transformer_blocks.22} parent=0 // loop_body
    %s15 = ssub.s32 %s10, 1
    %s16 = ssub.s32 %s10, 2
    %s23 = sadd.s32 1, %s18
    %p24 = scmp.ge.s32.totalorder %s23, 1
    %s25 = scalar_select %p24, 0, %s23
    %s26 = sadd.s32 1, %s17
    %s27 = scalar_select %p24, %s26, %s17
    %p28 = scmp.ge.s32.totalorder %s27, 2
    %s29 = scalar_select %p28, 0, %s27
    %s31 = sadd.s32 %s30, 1
    %p34 = scmp.eq.s32.totalorder %s10, 1
    %p35 = scmp.ne.s32.totalorder %s30, %s32
    %p36 = scmp.eq.s32.totalorder %s10, 0
    %p37 = por %p35, %p36
    %p38 = scmp.ne.s32.totalorder %s30, %s32
    %p39 = scmp.eq.s32.totalorder %s15, 1
    %p40 = por %p38, %p39
    %p41 = scmp.ne.s32.totalorder %s32, %s33
    %p42 = scmp.eq.s32.totalorder %s15, 0
    %p43 = por %p41, %p42
    %p44 = scmp.ne.s32.totalorder %s32, %s33
    %p45 = scmp.eq.s32.totalorder %s16, 1
    %p46 = por %p44, %p45
    %p48 = scmp.ne.s32.totalorder %s33, %s47
    %p49 = scmp.eq.s32.totalorder %s16, 0
    %p50 = por %p48, %p49
    %s52 = sadd.s32 %s51, 1
    %p55 = scmp.eq.s32.totalorder %s10, 1
    %p56 = scmp.ne.s32.totalorder %s51, %s53
    %p57 = scmp.eq.s32.totalorder %s10, 0
    %p58 = por %p56, %p57
    %p59 = scmp.ne.s32.totalorder %s51, %s53
    %p60 = scmp.eq.s32.totalorder %s15, 1
    %p61 = por %p59, %p60
    %p62 = scmp.ne.s32.totalorder %s53, %s54
    %p63 = scmp.eq.s32.totalorder %s15, 0
    %p64 = por %p62, %p63
    %p65 = scmp.ne.s32.totalorder %s53, %s54
    %p66 = scmp.eq.s32.totalorder %s16, 1
    %p67 = por %p65, %p66
    %p69 = scmp.ne.s32.totalorder %s54, %s68
    %p70 = scmp.eq.s32.totalorder %s16, 0
    %p71 = por %p69, %p70
    %s72 = ssub.s32 %s17, %s29
    %s73 = ssub.s32 %s18, %s25
    %s74 = sor.u32 %s72, %s73
    %p75 = scmp.eq.s32.totalorder %s74, 0
    %s77 = sadd.s32 %s76, 1
    %s78 = scalar_select %p75, %s76, %s77
    %p81 = pneg %p75
    %p82 = scmp.eq.s32.totalorder %s10, 1
    %p83 = por %p81, %p82
    %p84 = scmp.ne.s32.totalorder %s76, %s79
    %p85 = scmp.eq.s32.totalorder %s10, 0
    %p86 = por %p84, %p85
    %p87 = scmp.ne.s32.totalorder %s76, %s79
    %p88 = scmp.eq.s32.totalorder %s15, 1
    %p89 = por %p87, %p88
    %p90 = scmp.ne.s32.totalorder %s79, %s80
    %p91 = scmp.eq.s32.totalorder %s15, 0
    %p92 = por %p90, %p91
    %p93 = scmp.ne.s32.totalorder %s79, %s80
    %p94 = scmp.eq.s32.totalorder %s16, 1
    %p95 = por %p93, %p94
    %p97 = scmp.ne.s32.totalorder %s80, %s96
    %p98 = scmp.eq.s32.totalorder %s16, 0
    %p99 = por %p97, %p98
    %s101 = sadd.s32 %s100, 1
    %p104 = scmp.eq.s32.totalorder %s10, 1
    %p105 = scmp.ne.s32.totalorder %s100, %s102
    %p106 = scmp.eq.s32.totalorder %s10, 0
    %p107 = por %p105, %p106
    %p108 = scmp.ne.s32.totalorder %s100, %s102
    %p109 = scmp.eq.s32.totalorder %s15, 1
    %p110 = por %p108, %p109
    %p111 = scmp.ne.s32.totalorder %s102, %s103
    %p112 = scmp.eq.s32.totalorder %s15, 0
    %p113 = por %p111, %p112
    %p114 = scmp.ne.s32.totalorder %s102, %s103
    %p115 = scmp.eq.s32.totalorder %s16, 1
    %p116 = por %p114, %p115
    %p118 = scmp.ne.s32.totalorder %s103, %s117
    %p119 = scmp.eq.s32.totalorder %s16, 0
    %p120 = por %p118, %p119
    %s121 = ssub.s32 %s17, %s29
    %s122 = ssub.s32 %s18, %s25
    %s123 = sor.u32 %s121, %s122
    %p124 = scmp.eq.s32.totalorder %s123, 0
    %s126 = sadd.s32 %s125, 1
    %s127 = scalar_select %p124, %s125, %s126
    %p130 = pneg %p124
    %p131 = scmp.eq.s32.totalorder %s10, 1
    %p132 = por %p130, %p131
    %p133 = scmp.ne.s32.totalorder %s125, %s128
    %p134 = scmp.eq.s32.totalorder %s10, 0
    %p135 = por %p133, %p134
    %p136 = scmp.ne.s32.totalorder %s125, %s128
    %p137 = scmp.eq.s32.totalorder %s15, 1
    %p138 = por %p136, %p137
    %p139 = scmp.ne.s32.totalorder %s128, %s129
    %p140 = scmp.eq.s32.totalorder %s15, 0
    %p141 = por %p139, %p140
    %p142 = scmp.ne.s32.totalorder %s128, %s129
    %p143 = scmp.eq.s32.totalorder %s16, 1
    %p144 = por %p142, %p143
    %p146 = scmp.ne.s32.totalorder %s129, %s145
    %p147 = scmp.eq.s32.totalorder %s16, 0
    %p148 = por %p146, %p147
    %p149 = scmp.le.s32.totalorder 1, %s10
    %p150 = scmp.lt.s32.totalorder %s10, 3
    %p151 = pnand %p149, %p150
    %p152 = pneg %p151
    // Predicated region
    $region9: #{transformer_blocks.22} parent=5 // pred_check
      _
    $region10: #{transformer_blocks.22} parent=5 // pred_check_branch
      %154 = sbr.rel (%p151) target = $region12
    $region11: #{transformer_blocks.22} parent=5 // pred_region
      %s155 = ssub.s32 %s10, 1
      // Predicated region
      $region13: #{transformer_blocks.22} parent=11 // pred_check
        %p156 = pneg %p43
      $region14: #{transformer_blocks.22} parent=11 // pred_check_branch
        %158 = sbr.rel (%p156) target = $region16
      $region15: #{transformer_blocks.22} parent=11 // pred_region
        _
      $region16: #{transformer_blocks.22} parent=11 // pred_fallthru
        _
      // Predicated region
      $region17: #{transformer_blocks.22} parent=11 // pred_check
        %p159 = pneg %p64
      $region18: #{transformer_blocks.22} parent=11 // pred_check_branch
        %161 = sbr.rel (%p159) target = $region20
      $region19: #{transformer_blocks.22} parent=11 // pred_region
        _
      $region20: #{transformer_blocks.22} parent=11 // pred_fallthru
        _
      // Predicated region
      $region21: #{transformer_blocks.22} parent=11 // pred_check
        %p162 = pneg %p113
      $region22: #{transformer_blocks.22} parent=11 // pred_check_branch
        %164 = sbr.rel (%p162) target = $region24
      $region23: #{transformer_blocks.22} parent=11 // pred_region
        _
      $region24: #{transformer_blocks.22} parent=11 // pred_fallthru
        _
    $region12: #{transformer_blocks.22} parent=5 // pred_fallthru
      _
    %p165 = scmp.lt.s32.totalorder %s10, 2
    // Predicated region
    $region25: #{transformer_blocks.22} parent=5 // pred_check
      %p166 = pneg %p165
    $region26: #{transformer_blocks.22} parent=5 // pred_check_branch
      %168 = sbr.rel (%p166) target = $region28
    $region27: #{transformer_blocks.22} parent=5 // pred_region
      // Predicated region
      $region29: #{transformer_blocks.22} parent=27 // pred_check
        %p169 = pneg %p86
      $region30: #{transformer_blocks.22} parent=27 // pred_check_branch
        %171 = sbr.rel (%p169) target = $region32
      $region31: #{transformer_blocks.22} parent=27 // pred_region
        %p172 = scmp.lt.s32.totalorder %s17, 1
        %s173 = scalar_select %p172, %s17, 1
        %p174 = scmp.lt.s32.totalorder %s18, 0
        %s175 = scalar_select %p174, %s18, 0
        %s176 = sadd.s32 %s175, %s173
        %s177 = smul.addr %s176, 8
        %s178 = scalar_lea.vmem %s2, %s177
      $region32: #{transformer_blocks.22} parent=27 // pred_fallthru
        _
    $region28: #{transformer_blocks.22} parent=5 // pred_fallthru
      _
    %p179 = scmp.le.s32.totalorder 1, %s10
    %p180 = scmp.lt.s32.totalorder %s10, 3
    %p181 = pnand %p179, %p180
    %p182 = pneg %p181
    // Predicated region
    $region33: #{transformer_blocks.22} parent=5 // pred_check
      _
    $region34: #{transformer_blocks.22} parent=5 // pred_check_branch
      %184 = sbr.rel (%p181) target = $region36
    $region35: #{transformer_blocks.22} parent=5 // pred_region
      %s185 = ssub.s32 %s10, 1
      %p186 = pneg %p43
      %p187 = pneg %p40
      %p188 = pneg %p64
      %p189 = pneg %p61
      %p190 = scmp.lt.s32.totalorder %s19, 1
      %s191 = scalar_select %p190, %s19, 1
      %p192 = scmp.lt.s32.totalorder %s20, 0
      %s193 = scalar_select %p192, %s20, 0
      %s194 = sadd.s32 %s193, %s191
      %s195 = smul.addr %s194, 8
      %s196 = scalar_lea.vmem %s2, %s195
      %p197 = pneg %p92
      %p198 = pneg %p89
      %p199 = pneg %p113
      %p200 = pneg %p110
      %p201 = pneg %p141
      %p202 = pneg %p138
      %p203 = scmp.lt.s32.totalorder %s19, 1
      %s204 = scalar_select %p203, %s19, 1
      %p205 = scmp.lt.s32.totalorder %s20, 0
      %s206 = scalar_select %p205, %s20, 0
      %s207 = sadd.s32 %s206, %s204
      %s208 = smul.addr %s207, 4
      %s209 = scalar_lea.vmem %s4, %s208
      %p210 = scmp.lt.s32.totalorder %s19, 1
      %s211 = scalar_select %p210, %s19, 1
      %p212 = scmp.lt.s32.totalorder %s20, 0
      %s213 = scalar_select %p212, %s20, 0
      %s214 = sadd.s32 %s213, %s211
      %s215 = smul.addr %s214, 8
      %s216 = scalar_lea.vmem %s2, %s215
      %p217 = scmp.lt.s32.totalorder %s19, 1
      %s218 = scalar_select %p217, %s19, 1
      %p219 = scmp.lt.s32.totalorder %s20, 0
      %s220 = scalar_select %p219, %s20, 0
      %s221 = sadd.s32 %s220, %s218
      %s222 = smul.addr %s221, 4
      %s223 = scalar_lea.vmem %s4, %s222
      %v225 = vld [vmem:[%s216] sm:$0xff]
      %v226 = vld [vmem:[%s0] sm:$0x1]
      %vm227 = vcmask 261120
      %v228 = vsel %vm227, %v225, 0.0
      %229 = vadd.xlane.f32.xlu0 %v228
      %v230 = vpop.xlane.xlu0 %229
      %v231 = vrcp.pop 32.0
      %v232 = vmul.f32 32.0, %v231
      %v233 = vsub.f32 1.0, %v232
      %v234 = vmul.f32 %v231, %v233
      %v235 = vadd.f32 %v231, %v234
      %vm236 = vweird.f32 %v231
      %v237 = vsel %vm236, %v231, %v235
      %v238 = vmul.f32 %v230, %v237
      %v239 = vsub.f32 %v225, %v238
      %v240 = vmul.f32 %v239, %v239
      %v241 = vsel %vm227, %v240, 0.0
      %242 = vadd.xlane.f32.xlu0 %v241
      %v243 = vpop.xlane.xlu0 %242
      %v244 = vmul.f32 %v243, %v237
      %v245 = vadd.f32 %v244, 1e-05
      %v246 = vrsqrt.pop %v245
      %v247 = vmul.f32 %v246, %v245
      %v248 = vmul.f32 %v247, %v246
      %v249 = vmul.f32 0.5, %v248
      %v250 = vsub.f32 1.5, %v249
      %v251 = vmul.f32 %v246, %v250
      %vm252 = vweird.f32 %v245
      %vm253 = vweird.f32 %v246
      %vm254 = vmor %vm252, %vm253
      %v255 = vsel %vm254, %v246, %v251
      %v256 = vmul.f32 %v239, %v255
      %v258 = vperm.slane %v226, 0
      %v260 = vmul.f32 %v256, %v258
      %v261 = vpack.c.bf16 %v260, %v260
      %v262 = vld [vmem:[%s3] sm:$0xf]
      %v263 = vld [vmem:[%s3 + $0x4] sm:$0xf]
      %v264 = vld [vmem:[%s3 + $0x8] sm:$0xf]
      %v265 = vld [vmem:[%s3 + $0xc] sm:$0xf]
      %v270 = vunpack.c.l.b16 %v262
      %v271 = vunpack.c.l.b16 %v263
      %v272 = vunpack.c.l.b16 %v264
      %v273 = vunpack.c.l.b16 %v265
      %v274 = vpack.c.b16 %v271, %v270
      %v275 = vpack.c.b16 %v273, %v272
      %v279 = vsel %vm227, %v261, 0
      %281 = vmatpush.bf16.msra.mxu0 0
      %282 = vmatpush.bf16.msra.mxu0 0
      %283 = vmatpush.bf16.msra.mxu0 0
      %284 = vmatpush.bf16.msra.mxu0 0
      %285 = vmatpush.bf16.msra.mxu0 0
      %286 = vmatpush.bf16.msra.mxu0 0
      %287 = vmatpush.bf16.msra.mxu0 %v275
      %288 = vmatpush.bf16.msra.mxu0 %v274
      %289 = vmatmul.bf16.gmra.mxu0 %v279
      %v290 = vpop.f32.mrf.mxu0
      %v291 = vadd.f32 0.0, %v290
      %v292 = vpop.f32.mrf.mxu0
      %293 = vdwg.mxu0
      %v294 = vld [vmem:[%s1] sm:$0x1]
      %v295 = vmul.f32 %v291, %v291
      %vm296 = vcmask 64512
      %v297 = vsel %vm296, %v295, 0.0
      %298 = vadd.xlane.f32.xlu0 %v297
      %v299 = vpop.xlane.xlu0 %298
      %v300 = vmax.f32 %v299, 1e-24
      %v301 = vrsqrt.pop %v300
      %v302 = vmul.f32 %v301, %v300
      %v303 = vmul.f32 %v302, %v301
      %v304 = vmul.f32 0.5, %v303
      %v305 = vsub.f32 1.5, %v304
      %v306 = vmul.f32 %v301, %v305
      %vm307 = vweird.f32 %v300
      %vm308 = vweird.f32 %v301
      %vm309 = vmor %vm307, %vm308
      %v310 = vsel %vm309, %v301, %v306
      %v311 = vmul.f32 %v291, %v310
      %v313 = vperm.slane %v294, 0
      %v315 = vmul.f32 %v311, %v313
      %317 = vrot.lane.b32.xlu0 %v295, 120
      %v318 = vpop.permute.xlu0 %317
      %v320 = vsel %vm296, %v318, 0.0
      %321 = vadd.xlane.f32.xlu0 %v320
      %v322 = vpop.xlane.xlu0 %321
      %v323 = vmax.f32 %v322, 1e-24
      %v324 = vrsqrt.pop %v323
      %v325 = vmul.f32 %v324, %v323
      %v326 = vmul.f32 %v325, %v324
      %v327 = vmul.f32 0.5, %v326
      %v328 = vsub.f32 1.5, %v327
      %v329 = vmul.f32 %v324, %v328
      %vm330 = vweird.f32 %v323
      %vm331 = vweird.f32 %v324
      %vm332 = vmor %vm330, %vm331
      %v333 = vsel %vm332, %v324, %v329
      %v334 = vmul.f32 %v291, %v333
      %335 = vrot.lane.b32.xlu0 %v313, 8
      %v336 = vpop.permute.xlu0 %335
      %v338 = vmul.f32 %v334, %v336
      %v339 = vsel %vm296, %v315, %v338
      %v340 = vpack.c.bf16 %v339, %v339
      %vm341 = vcmask 125952
      %342 = vst.msk [vmem:[%s223] sm:$0xf] %vm341, %v340
      %p343 = scmp.lt.s32.totalorder %s19, 1
      %s344 = scalar_select %p343, %s19, 1
      %p345 = scmp.lt.s32.totalorder %s20, 0
      %s346 = scalar_select %p345, %s20, 0
      %s347 = sadd.s32 %s346, %s344
      %s348 = smul.addr %s347, 4
      %s349 = scalar_lea.vmem %s4, %s348
      // Predicated region
      $region37: #{transformer_blocks.22} parent=35 // pred_check
        %p350 = pneg %p138
      $region38: #{transformer_blocks.22} parent=35 // pred_check_branch
        %352 = sbr.rel (%p350) target = $region40
      $region39: #{transformer_blocks.22} parent=35 // pred_region
        _
      $region40: #{transformer_blocks.22} parent=35 // pred_fallthru
        _
    $region36: #{transformer_blocks.22} parent=5 // pred_fallthru
      _
    %p353 = scmp.le.s32.totalorder 2, %s10
    // Predicated region
    $region41: #{transformer_blocks.22} parent=5 // pred_check
      %p354 = pneg %p353
    $region42: #{transformer_blocks.22} parent=5 // pred_check_branch
      %356 = sbr.rel (%p354) target = $region44
    $region43: #{transformer_blocks.22} parent=5 // pred_region
      %s357 = ssub.s32 %s10, 2
      // Predicated region
      $region45: #{transformer_blocks.22} parent=43 // pred_check
        %p358 = pneg %p144
      $region46: #{transformer_blocks.22} parent=43 // pred_check_branch
        %360 = sbr.rel (%p358) target = $region48
      $region47: #{transformer_blocks.22} parent=43 // pred_region
        %p361 = scmp.lt.s32.totalorder %s21, 1
        %s362 = scalar_select %p361, %s21, 1
        %p363 = scmp.lt.s32.totalorder %s22, 0
        %s364 = scalar_select %p363, %s22, 0
        %s365 = sadd.s32 %s364, %s362
        %s366 = smul.addr %s365, 4
        %s367 = scalar_lea.vmem %s4, %s366
      $region48: #{transformer_blocks.22} parent=43 // pred_fallthru
        _
    $region44: #{transformer_blocks.22} parent=5 // pred_fallthru
      _
  $region6: #{transformer_blocks.22} parent=0 // loop_footer
    %s14 = sadd.s32 1, %s10
  $region7: #{transformer_blocks.22} parent=0 // loop_footer_branch
    %9 = sbr.rel target = $region3
  $region8: #{transformer_blocks.22} parent=0 // loop_exit
    _

// kernel: transformer_blocks.21
$region0: #{transformer_blocks.21}
  #allocation0 [shape = 'u32[]', space=smem, size = 0x4, offset = 0x4, fixed_abs, tag = 'smem constant byte address 0x4 - core index']
  #allocation1 [shape = 'u32[72,128]{1,0:T(1,128)}', space=vmem, size = 0x9000, scoped, tag = 'internal scratch']
  %s0 = inlined_call_operand.vmem [shape: bf16[16,16], index: 0, kind: input, shape index: {}]
  %s1 = inlined_call_operand.vmem [shape: bf16[16,32], index: 1, kind: input, shape index: {}]
  %s2 = inlined_call_operand.vmem [shape: f32[16,32], index: 2, kind: input, shape index: {}]
  %s3 = inlined_call_operand.vmem [shape: f32[16,32], index: 3, kind: output, shape index: {}]
  %s4 = sld [smem:[#allocation0]]
  $region22: #{transformer_blocks.21} parent=0
    _
  %s6 = ssub.s32 1, %s4
  %s7 = scalar_select 0, %s6, %s4
  // Predicated region
  $region2: #{transformer_blocks.21} parent=0 // pred_check
    _
  $region3: #{transformer_blocks.21} parent=0 // pred_check_branch
    %9 = sbr.rel (0) target = $region5
  $region4: #{transformer_blocks.21} parent=0 // pred_region
    _
  $region5: #{transformer_blocks.21} parent=0 // pred_fallthru
    _
  // Predicated region
  $region6: #{transformer_blocks.21} parent=0 // pred_check
    _
  $region7: #{transformer_blocks.21} parent=0 // pred_check_branch
    %11 = sbr.rel (0) target = $region9
  $region8: #{transformer_blocks.21} parent=0 // pred_region
    _
  $region9: #{transformer_blocks.21} parent=0 // pred_fallthru
    _
  // Predicated region
  $region10: #{transformer_blocks.21} parent=0 // pred_check
    _
  $region11: #{transformer_blocks.21} parent=0 // pred_check_branch
    %13 = sbr.rel (0) target = $region13
  $region12: #{transformer_blocks.21} parent=0 // pred_region
    _
  $region13: #{transformer_blocks.21} parent=0 // pred_fallthru
    _
  %v15 = vld [vmem:[%s0] sm:$0xf]
  %v16 = vld [vmem:[%s0 + $0x4] sm:$0xf]
  %v17 = vld [vmem:[%s1] sm:$0xf]
  %v18 = vld [vmem:[%s1 + $0x4] sm:$0xf]
  %v19 = vld [vmem:[%s2] sm:$0xff]
  %v20 = vld [vmem:[%s2 + $0x8] sm:$0xff]
  %v23 = vunpack.c.l.b16 %v15
  %v24 = vunpack.c.l.b16 %v16
  %v25 = vpack.c.b16 %v24, %v23
  %v28 = vunpack.c.l.b16 %v17
  %v29 = vunpack.c.l.b16 %v18
  %v30 = vpack.c.b16 %v29, %v28
  %vm32 = vcmask 130048
  %v34 = vsel %vm32, %v25, 0
  %36 = vmatpush.bf16.msra.mxu0 0
  %37 = vmatpush.bf16.msra.mxu0 0
  %38 = vmatpush.bf16.msra.mxu0 0
  %39 = vmatpush.bf16.msra.mxu0 0
  %40 = vmatpush.bf16.msra.mxu0 0
  %41 = vmatpush.bf16.msra.mxu0 0
  %42 = vmatpush.bf16.msra.mxu0 0
  %43 = vmatpush.bf16.msra.mxu0 %v30
  %44 = vmatmul.bf16.gmra.mxu0 %v34
  %v45 = vpop.f32.mrf.mxu0
  %v46 = vadd.f32 %v19, %v45
  %v47 = vpop.f32.mrf.mxu0
  %v48 = vadd.f32 %v20, %v47
  %49 = vdwg.mxu0
  %vm50 = vcmask 261120
  %51 = vst.msk [vmem:[%s3] sm:$0xff] %vm50, %v46
  %52 = vst.msk [vmem:[%s3 + $0x8] sm:$0xff] %vm50, %v48
  // Predicated region
  $region14: #{transformer_blocks.21} parent=0 // pred_check
    _
  $region15: #{transformer_blocks.21} parent=0 // pred_check_branch
    %54 = sbr.rel (0) target = $region17
  $region16: #{transformer_blocks.21} parent=0 // pred_region
    _
  $region17: #{transformer_blocks.21} parent=0 // pred_fallthru
    _
  // Predicated region
  $region18: #{transformer_blocks.21} parent=0 // pred_check
    _
  $region19: #{transformer_blocks.21} parent=0 // pred_check_branch
    %56 = sbr.rel (0) target = $region21
  $region20: #{transformer_blocks.21} parent=0 // pred_region
    _
  $region21: #{transformer_blocks.21} parent=0 // pred_fallthru
    _

// kernel: transformer_blocks.20
$region0: #{transformer_blocks.20}
  #allocation0 [shape = 'u32[]', space=smem, size = 0x4, offset = 0x4, fixed_abs, tag = 'smem constant byte address 0x4 - core index']
  #allocation1 [shape = 'u32[72,128]{1,0:T(1,128)}', space=vmem, size = 0x9000, scoped, tag = 'internal scratch']
  #allocation2 [shape = 'f32[8,2]{1,0:T(8,128)}', space=vmem, size = 0x1000, scoped, tag = 'scratch operand']
  #allocation3 [shape = 'f32[8,2]{1,0:T(8,128)}', space=vmem, size = 0x1000, scoped, tag = 'scratch operand']
  #allocation4 [shape = 'f32[8,16]{1,0:T(8,128)}', space=vmem, size = 0x1000, scoped, tag = 'scratch operand']
  %s0 = inlined_call_operand.vmem [shape: f32[1,16], index: 0, kind: input, shape index: {}]
  %s1 = inlined_call_operand.vmem [shape: f32[1,16], index: 1, kind: input, shape index: {}]
  %s2 = inlined_call_operand.vmem [shape: bf16[2,8,16], index: 2, kind: input, shape index: {}]
  %s3 = inlined_call_operand.vmem [shape: bf16[2,8,16], index: 3, kind: input, shape index: {}]
  %s4 = inlined_call_operand.vmem [shape: bf16[2,8,16], index: 4, kind: input, shape index: {}]
  %s5 = inlined_call_operand.vmem [shape: bf16[2,8,16], index: 5, kind: output, shape index: {}]
  %s6 = sld [smem:[#allocation0]]
  $region61: #{transformer_blocks.20} parent=0
    _
  %s8 = ssub.s32 1, %s6
  %s9 = scalar_select 0, %s8, %s6
  loop: start=0, step=1, limit=4
  $region2: #{transformer_blocks.20} parent=0 // loop_pre_header
    _
  $region3: #{transformer_blocks.20} parent=0 // loop_header
    %s11 = sphi 0, %s15
    %p12 = scmp.ge.s32.totalorder %s11, 4
    %s18 = sphi 0, %s37
    %s19 = sphi 0, %s33
    %s20 = sphi 0, %s29
    %s21 = sphi 0, %s18
    %s22 = sphi 0, %s19
    %s23 = sphi 0, %s20
    %s24 = sphi 0, %s21
    %s25 = sphi 0, %s22
    %s26 = sphi 0, %s23
    %s38 = sphi 0, %s38
    %s40 = sphi 0, %s38
    %s41 = sphi 0, %s40
    %s55 = sphi 0, %s41
    %s59 = sphi 0, %s59
    %s61 = sphi 0, %s59
    %s62 = sphi 0, %s61
    %s76 = sphi 0, %s62
    %s84 = sphi 0, %s86
    %s87 = sphi 0, %s84
    %s88 = sphi 0, %s87
    %s104 = sphi 0, %s88
    %s112 = sphi 0, %s114
    %s115 = sphi 0, %s112
    %s116 = sphi 0, %s115
    %s132 = sphi 0, %s116
    %s140 = sphi 0, %s142
    %s143 = sphi 0, %s140
    %s144 = sphi 0, %s143
    %s160 = sphi 0, %s144
    %s168 = sphi 0, %s170
    %s171 = sphi 0, %s168
    %s172 = sphi 0, %s171
    %s188 = sphi 0, %s172
  $region4: #{transformer_blocks.20} parent=0 // loop_header_branch
    %14 = sbr.rel (%p12) target = $region8
  $region5: #{transformer_blocks.20} parent=0 // loop_body
    %s16 = ssub.s32 %s11, 1
    %s17 = ssub.s32 %s11, 2
    %s27 = sadd.s32 1, %s20
    %p28 = scmp.ge.s32.totalorder %s27, 1
    %s29 = scalar_select %p28, 0, %s27
    %s30 = sadd.s32 1, %s19
    %s31 = scalar_select %p28, %s30, %s19
    %p32 = scmp.ge.s32.totalorder %s31, 1
    %s33 = scalar_select %p32, 0, %s31
    %s34 = sadd.s32 1, %s18
    %s35 = scalar_select %p32, %s34, %s18
    %p36 = scmp.ge.s32.totalorder %s35, 2
    %s37 = scalar_select %p36, 0, %s35
    %s39 = sadd.s32 %s38, 1
    %p42 = scmp.eq.s32.totalorder %s11, 1
    %p43 = scmp.ne.s32.totalorder %s38, %s40
    %p44 = scmp.eq.s32.totalorder %s11, 0
    %p45 = por %p43, %p44
    %p46 = scmp.ne.s32.totalorder %s38, %s40
    %p47 = scmp.eq.s32.totalorder %s16, 1
    %p48 = por %p46, %p47
    %p49 = scmp.ne.s32.totalorder %s40, %s41
    %p50 = scmp.eq.s32.totalorder %s16, 0
    %p51 = por %p49, %p50
    %p52 = scmp.ne.s32.totalorder %s40, %s41
    %p53 = scmp.eq.s32.totalorder %s17, 1
    %p54 = por %p52, %p53
    %p56 = scmp.ne.s32.totalorder %s41, %s55
    %p57 = scmp.eq.s32.totalorder %s17, 0
    %p58 = por %p56, %p57
    %s60 = sadd.s32 %s59, 1
    %p63 = scmp.eq.s32.totalorder %s11, 1
    %p64 = scmp.ne.s32.totalorder %s59, %s61
    %p65 = scmp.eq.s32.totalorder %s11, 0
    %p66 = por %p64, %p65
    %p67 = scmp.ne.s32.totalorder %s59, %s61
    %p68 = scmp.eq.s32.totalorder %s16, 1
    %p69 = por %p67, %p68
    %p70 = scmp.ne.s32.totalorder %s61, %s62
    %p71 = scmp.eq.s32.totalorder %s16, 0
    %p72 = por %p70, %p71
    %p73 = scmp.ne.s32.totalorder %s61, %s62
    %p74 = scmp.eq.s32.totalorder %s17, 1
    %p75 = por %p73, %p74
    %p77 = scmp.ne.s32.totalorder %s62, %s76
    %p78 = scmp.eq.s32.totalorder %s17, 0
    %p79 = por %p77, %p78
    %s80 = ssub.s32 %s18, %s37
    %s81 = ssub.s32 %s19, %s33
    %s82 = sor.u32 %s80, %s81
    %p83 = scmp.eq.s32.totalorder %s82, 0
    %s85 = sadd.s32 %s84, 1
    %s86 = scalar_select %p83, %s84, %s85
    %p89 = pneg %p83
    %p90 = scmp.eq.s32.totalorder %s11, 1
    %p91 = por %p89, %p90
    %p92 = scmp.ne.s32.totalorder %s84, %s87
    %p93 = scmp.eq.s32.totalorder %s11, 0
    %p94 = por %p92, %p93
    %p95 = scmp.ne.s32.totalorder %s84, %s87
    %p96 = scmp.eq.s32.totalorder %s16, 1
    %p97 = por %p95, %p96
    %p98 = scmp.ne.s32.totalorder %s87, %s88
    %p99 = scmp.eq.s32.totalorder %s16, 0
    %p100 = por %p98, %p99
    %p101 = scmp.ne.s32.totalorder %s87, %s88
    %p102 = scmp.eq.s32.totalorder %s17, 1
    %p103 = por %p101, %p102
    %p105 = scmp.ne.s32.totalorder %s88, %s104
    %p106 = scmp.eq.s32.totalorder %s17, 0
    %p107 = por %p105, %p106
    %s108 = ssub.s32 %s18, %s37
    %s109 = ssub.s32 %s20, %s29
    %s110 = sor.u32 %s108, %s109
    %p111 = scmp.eq.s32.totalorder %s110, 0
    %s113 = sadd.s32 %s112, 1
    %s114 = scalar_select %p111, %s112, %s113
    %p117 = pneg %p111
    %p118 = scmp.eq.s32.totalorder %s11, 1
    %p119 = por %p117, %p118
    %p120 = scmp.ne.s32.totalorder %s112, %s115
    %p121 = scmp.eq.s32.totalorder %s11, 0
    %p122 = por %p120, %p121
    %p123 = scmp.ne.s32.totalorder %s112, %s115
    %p124 = scmp.eq.s32.totalorder %s16, 1
    %p125 = por %p123, %p124
    %p126 = scmp.ne.s32.totalorder %s115, %s116
    %p127 = scmp.eq.s32.totalorder %s16, 0
    %p128 = por %p126, %p127
    %p129 = scmp.ne.s32.totalorder %s115, %s116
    %p130 = scmp.eq.s32.totalorder %s17, 1
    %p131 = por %p129, %p130
    %p133 = scmp.ne.s32.totalorder %s116, %s132
    %p134 = scmp.eq.s32.totalorder %s17, 0
    %p135 = por %p133, %p134
    %s136 = ssub.s32 %s18, %s37
    %s137 = ssub.s32 %s20, %s29
    %s138 = sor.u32 %s136, %s137
    %p139 = scmp.eq.s32.totalorder %s138, 0
    %s141 = sadd.s32 %s140, 1
    %s142 = scalar_select %p139, %s140, %s141
    %p145 = pneg %p139
    %p146 = scmp.eq.s32.totalorder %s11, 1
    %p147 = por %p145, %p146
    %p148 = scmp.ne.s32.totalorder %s140, %s143
    %p149 = scmp.eq.s32.totalorder %s11, 0
    %p150 = por %p148, %p149
    %p151 = scmp.ne.s32.totalorder %s140, %s143
    %p152 = scmp.eq.s32.totalorder %s16, 1
    %p153 = por %p151, %p152
    %p154 = scmp.ne.s32.totalorder %s143, %s144
    %p155 = scmp.eq.s32.totalorder %s16, 0
    %p156 = por %p154, %p155
    %p157 = scmp.ne.s32.totalorder %s143, %s144
    %p158 = scmp.eq.s32.totalorder %s17, 1
    %p159 = por %p157, %p158
    %p161 = scmp.ne.s32.totalorder %s144, %s160
    %p162 = scmp.eq.s32.totalorder %s17, 0
    %p163 = por %p161, %p162
    %s164 = ssub.s32 %s18, %s37
    %s165 = ssub.s32 %s19, %s33
    %s166 = sor.u32 %s164, %s165
    %p167 = scmp.eq.s32.totalorder %s166, 0
    %s169 = sadd.s32 %s168, 1
    %s170 = scalar_select %p167, %s168, %s169
    %p173 = pneg %p167
    %p174 = scmp.eq.s32.totalorder %s11, 1
    %p175 = por %p173, %p174
    %p176 = scmp.ne.s32.totalorder %s168, %s171
    %p177 = scmp.eq.s32.totalorder %s11, 0
    %p178 = por %p176, %p177
    %p179 = scmp.ne.s32.totalorder %s168, %s171
    %p180 = scmp.eq.s32.totalorder %s16, 1
    %p181 = por %p179, %p180
    %p182 = scmp.ne.s32.totalorder %s171, %s172
    %p183 = scmp.eq.s32.totalorder %s16, 0
    %p184 = por %p182, %p183
    %p185 = scmp.ne.s32.totalorder %s171, %s172
    %p186 = scmp.eq.s32.totalorder %s17, 1
    %p187 = por %p185, %p186
    %p189 = scmp.ne.s32.totalorder %s172, %s188
    %p190 = scmp.eq.s32.totalorder %s17, 0
    %p191 = por %p189, %p190
    %p192 = scmp.le.s32.totalorder 1, %s11
    %p193 = scmp.lt.s32.totalorder %s11, 3
    %p194 = pnand %p192, %p193
    %p195 = pneg %p194
    // Predicated region
    $region9: #{transformer_blocks.20} parent=5 // pred_check
      _
    $region10: #{transformer_blocks.20} parent=5 // pred_check_branch
      %197 = sbr.rel (%p194) target = $region12
    $region11: #{transformer_blocks.20} parent=5 // pred_region
      %s198 = ssub.s32 %s11, 1
      // Predicated region
      $region13: #{transformer_blocks.20} parent=11 // pred_check
        %p199 = pneg %p51
      $region14: #{transformer_blocks.20} parent=11 // pred_check_branch
        %201 = sbr.rel (%p199) target = $region16
      $region15: #{transformer_blocks.20} parent=11 // pred_region
        _
      $region16: #{transformer_blocks.20} parent=11 // pred_fallthru
        _
      // Predicated region
      $region17: #{transformer_blocks.20} parent=11 // pred_check
        %p202 = pneg %p72
      $region18: #{transformer_blocks.20} parent=11 // pred_check_branch
        %204 = sbr.rel (%p202) target = $region20
      $region19: #{transformer_blocks.20} parent=11 // pred_region
        _
      $region20: #{transformer_blocks.20} parent=11 // pred_fallthru
        _
    $region12: #{transformer_blocks.20} parent=5 // pred_fallthru
      _
    %p205 = scmp.lt.s32.totalorder %s11, 2
    // Predicated region
    $region21: #{transformer_blocks.20} parent=5 // pred_check
      %p206 = pneg %p205
    $region22: #{transformer_blocks.20} parent=5 // pred_check_branch
      %208 = sbr.rel (%p206) target = $region24
    $region23: #{transformer_blocks.20} parent=5 // pred_region
      // Predicated region
      $region25: #{transformer_blocks.20} parent=23 // pred_check
        %p209 = pneg %p94
      $region26: #{transformer_blocks.20} parent=23 // pred_check_branch
        %211 = sbr.rel (%p209) target = $region28
      $region27: #{transformer_blocks.20} parent=23 // pred_region
        %p212 = scmp.lt.s32.totalorder %s18, 1
        %s213 = scalar_select %p212, %s18, 1
        %p214 = scmp.lt.s32.totalorder %s19, 0
        %s215 = scalar_select %p214, %s19, 0
        %s216 = sadd.s32 %s215, %s213
        %s217 = smul.addr %s216, 4
        %s218 = scalar_lea.vmem %s2, %s217
      $region28: #{transformer_blocks.20} parent=23 // pred_fallthru
        _
      // Predicated region
      $region29: #{transformer_blocks.20} parent=23 // pred_check
        %p219 = pneg %p122
      $region30: #{transformer_blocks.20} parent=23 // pred_check_branch
        %221 = sbr.rel (%p219) target = $region32
      $region31: #{transformer_blocks.20} parent=23 // pred_region
        %p222 = scmp.lt.s32.totalorder %s18, 1
        %s223 = scalar_select %p222, %s18, 1
        %p224 = scmp.lt.s32.totalorder %s20, 0
        %s225 = scalar_select %p224, %s20, 0
        %s226 = sadd.s32 %s225, %s223
        %s227 = smul.addr %s226, 4
        %s228 = scalar_lea.vmem %s3, %s227
      $region32: #{transformer_blocks.20} parent=23 // pred_fallthru
        _
      // Predicated region
      $region33: #{transformer_blocks.20} parent=23 // pred_check
        %p229 = pneg %p150
      $region34: #{transformer_blocks.20} parent=23 // pred_check_branch
        %231 = sbr.rel (%p229) target = $region36
      $region35: #{transformer_blocks.20} parent=23 // pred_region
        %p232 = scmp.lt.s32.totalorder %s18, 1
        %s233 = scalar_select %p232, %s18, 1
        %p234 = scmp.lt.s32.totalorder %s20, 0
        %s235 = scalar_select %p234, %s20, 0
        %s236 = sadd.s32 %s235, %s233
        %s237 = smul.addr %s236, 4
        %s238 = scalar_lea.vmem %s4, %s237
      $region36: #{transformer_blocks.20} parent=23 // pred_fallthru
        _
    $region24: #{transformer_blocks.20} parent=5 // pred_fallthru
      _
    %p239 = scmp.le.s32.totalorder 1, %s11
    %p240 = scmp.lt.s32.totalorder %s11, 3
    %p241 = pnand %p239, %p240
    %p242 = pneg %p241
    // Predicated region
    $region37: #{transformer_blocks.20} parent=5 // pred_check
      _
    $region38: #{transformer_blocks.20} parent=5 // pred_check_branch
      %244 = sbr.rel (%p241) target = $region40
    $region39: #{transformer_blocks.20} parent=5 // pred_region
      %s245 = ssub.s32 %s11, 1
      %p246 = pneg %p51
      %p247 = pneg %p48
      %p248 = pneg %p72
      %p249 = pneg %p69
      %p250 = scmp.lt.s32.totalorder %s21, 1
      %s251 = scalar_select %p250, %s21, 1
      %p252 = scmp.lt.s32.totalorder %s22, 0
      %s253 = scalar_select %p252, %s22, 0
      %s254 = sadd.s32 %s253, %s251
      %s255 = smul.addr %s254, 4
      %s256 = scalar_lea.vmem %s2, %s255
      %p257 = pneg %p100
      %p258 = pneg %p97
      %p259 = scmp.lt.s32.totalorder %s21, 1
      %s260 = scalar_select %p259, %s21, 1
      %p261 = scmp.lt.s32.totalorder %s23, 0
      %s262 = scalar_select %p261, %s23, 0
      %s263 = sadd.s32 %s262, %s260
      %s264 = smul.addr %s263, 4
      %s265 = scalar_lea.vmem %s3, %s264
      %p266 = pneg %p128
      %p267 = pneg %p125
      %p268 = scmp.lt.s32.totalorder %s21, 1
      %s269 = scalar_select %p268, %s21, 1
      %p270 = scmp.lt.s32.totalorder %s23, 0
      %s271 = scalar_select %p270, %s23, 0
      %s272 = sadd.s32 %s271, %s269
      %s273 = smul.addr %s272, 4
      %s274 = scalar_lea.vmem %s4, %s273
      %p275 = pneg %p156
      %p276 = pneg %p153
      %p277 = pneg %p184
      %p278 = pneg %p181
      %p279 = scmp.lt.s32.totalorder %s21, 1
      %s280 = scalar_select %p279, %s21, 1
      %p281 = scmp.lt.s32.totalorder %s22, 0
      %s282 = scalar_select %p281, %s22, 0
      %s283 = sadd.s32 %s282, %s280
      %s284 = smul.addr %s283, 4
      %s285 = scalar_lea.vmem %s5, %s284
      %p286 = scmp.lt.s32.totalorder %s21, 1
      %s287 = scalar_select %p286, %s21, 1
      %p288 = scmp.lt.s32.totalorder %s22, 0
      %s289 = scalar_select %p288, %s22, 0
      %s290 = sadd.s32 %s289, %s287
      %s291 = smul.addr %s290, 4
      %s292 = scalar_lea.vmem %s2, %s291
      %p293 = scmp.lt.s32.totalorder %s21, 1
      %s294 = scalar_select %p293, %s21, 1
      %p295 = scmp.lt.s32.totalorder %s23, 0
      %s296 = scalar_select %p295, %s23, 0
      %s297 = sadd.s32 %s296, %s294
      %s298 = smul.addr %s297, 4
      %s299 = scalar_lea.vmem %s3, %s298
      %p300 = scmp.lt.s32.totalorder %s21, 1
      %s301 = scalar_select %p300, %s21, 1
      %p302 = scmp.lt.s32.totalorder %s23, 0
      %s303 = scalar_select %p302, %s23, 0
      %s304 = sadd.s32 %s303, %s301
      %s305 = smul.addr %s304, 4
      %s306 = scalar_lea.vmem %s4, %s305
      %p307 = scmp.lt.s32.totalorder %s21, 1
      %s308 = scalar_select %p307, %s21, 1
      %p309 = scmp.lt.s32.totalorder %s22, 0
      %s310 = scalar_select %p309, %s22, 0
      %s311 = sadd.s32 %s310, %s308
      %s312 = smul.addr %s311, 4
      %s313 = scalar_lea.vmem %s5, %s312
      %v315 = vld [vmem:[%s292] sm:$0xf]
      %v316 = vld [vmem:[%s299] sm:$0xf]
      %v317 = vld [vmem:[%s306] sm:$0xf]
      %p318 = scmp.eq.s32.totalorder %s23, 0
      // Predicated region
      $region41: #{transformer_blocks.20} parent=39 // pred_check
        %p319 = pneg %p318
      $region42: #{transformer_blocks.20} parent=39 // pred_check_branch
        %321 = sbr.rel (%p319) target = $region44
      $region43: #{transformer_blocks.20} parent=39 // pred_region
        %v322 = vld [vmem:[%s0] sm:$0x1]
        %vm323 = vcmask 15360
        %324 = vst.msk [vmem:[#allocation3] sm:$0xff] %vm323, 1.0
        %v325 = vld [vmem:[%s1] sm:$0x1]
        %v327 = vperm.slane %v325, 0
        %vm329 = vcmask 130048
        %330 = vst.msk [vmem:[#allocation4] sm:$0xff] %vm329, %v327
        %v331 = vunpack.c.l.bf16 %v315
        %v333 = vperm.slane %v322, 0
        %v335 = vmul.f32 %v331, %v333
        %vm336 = vcmask 64512
        %v337 = vsel %vm336, %v335, 0.0
        %338 = vadd.xlane.f32.xlu0 %v337
        %v339 = vpop.xlane.xlu0 %338
        %341 = vrot.lane.b32.xlu0 %v335, 120
        %v342 = vpop.permute.xlu0 %341
        %v344 = vsel %vm336, %v342, 0.0
        %345 = vadd.xlane.f32.xlu0 %v344
        %v346 = vpop.xlane.xlu0 %345
        %vm347 = vcmask 7168
        %v348 = vsel %vm347, %v339, %v346
        %349 = vst.msk [vmem:[#allocation2] sm:$0xff] %vm323, %v348
      $region44: #{transformer_blocks.20} parent=39 // pred_fallthru
        _
      %vm350 = vcmask 64512
      %v352 = vsel %vm350, %v315, 0
      %v355 = vsel %vm350, %v316, 0
      %357 = vmatpush.bf16.xpose.msra.mxu0 0
      %358 = vmatpush.bf16.xpose.msra.mxu0 0
      %359 = vmatpush.bf16.xpose.msra.mxu0 0
      %360 = vmatpush.bf16.xpose.msra.mxu0 0
      %361 = vmatpush.bf16.xpose.msra.mxu0 0
      %362 = vmatpush.bf16.xpose.msra.mxu0 0
      %363 = vmatpush.bf16.xpose.msra.mxu0 0
      %364 = vmatpush.bf16.xpose.msra.mxu0 %v355
      %365 = vmatmul.bf16.gmra.mxu0 %v352
      %v366 = vpop.f32.mrf.mxu0
      %v367 = vadd.f32 0.0, %v366
      %v368 = vpop.f32.mrf.mxu0
      %369 = vdwg.mxu0
      %v370 = vld [vmem:[#allocation2] sm:$0xff]
      %v371 = vsel %vm350, %v367, -inf
      %372 = vmax.xlane.f32.xlu0 %v371
      %v373 = vpop.xlane.xlu0 %372
      %v374 = vmax.f32 %v370, %v373
      %v375 = vsub.f32 %v370, %v374
      %v376 = vmul.f32 %v375, 1.442695
      %v377 = vpow.pop %v376
      %379 = vset.pattern.permute.xlu0 0
      %380 = vperm.xlu0 %379, %v374
      %v381 = vpop.permute.xlu0 %380
      %v383 = vsub.f32 %v367, %v381
      %v384 = vmul.f32 %v383, 1.442695
      %v385 = vpow.pop %v384
      %vm386 = vcmask 7168
      %387 = vst.msk [vmem:[#allocation2] sm:$0xff] %vm386, %v374
      %v388 = vld [vmem:[#allocation3] sm:$0xff]
      %v389 = vmul.f32 %v377, %v388
      %v390 = vsel %vm350, %v385, 0.0
      %391 = vadd.xlane.f32.xlu0 %v390
      %v392 = vpop.xlane.xlu0 %391
      %v393 = vadd.f32 %v389, %v392
      %394 = vst.msk [vmem:[#allocation3] sm:$0xff] %vm386, %v393
      %v395 = vld [vmem:[#allocation4] sm:$0xff]
      %397 = vset.pattern.permute.xlu0 0
      %398 = vperm.xlu0 %397, %v377
      %v399 = vpop.permute.xlu0 %398
      %v401 = vmul.f32 %v399, %v395
      %v402 = vpack.c.bf16 %v385, %v385
      %v404 = vsel %vm350, %v402, 0
      %vm406 = vcmask 1043456
      %v408 = vsel %vm406, %v317, 0
      %410 = vmatpush.bf16.msra.mxu0 0
      %411 = vmatpush.bf16.msra.mxu0 0
      %412 = vmatpush.bf16.msra.mxu0 0
      %413 = vmatpush.bf16.msra.mxu0 0
      %414 = vmatpush.bf16.msra.mxu0 0
      %415 = vmatpush.bf16.msra.mxu0 0
      %416 = vmatpush.bf16.msra.mxu0 0
      %417 = vmatpush.bf16.msra.mxu0 %v408
      %418 = vmatmul.bf16.gmra.mxu0 %v404
      %v419 = vpop.f32.mrf.mxu0
      %v420 = vadd.f32 0.0, %v419
      %v421 = vpop.f32.mrf.mxu0
      %422 = vdwg.mxu0
      %v423 = vadd.f32 %v401, %v420
      %424 = vst.msk [vmem:[#allocation4] sm:$0xff] %vm350, %v423
      %v426 = vunpack.c.l.b16 %v315
      %v427 = vpack.c.b16 %v426, %v426
      %428 = vrot.lane.b32.xlu0 %v427, 120
      %v429 = vpop.permute.xlu0 %428
      %v431 = vunpack.c.l.b16 %v316
      %v432 = vpack.c.b16 %v431, %v431
      %433 = vrot.lane.b32.xlu0 %v432, 120
      %v434 = vpop.permute.xlu0 %433
      %v436 = vsel %vm350, %v429, 0
      %v439 = vsel %vm350, %v434, 0
      %441 = vmatpush.bf16.xpose.msra.mxu0 0
      %442 = vmatpush.bf16.xpose.msra.mxu0 0
      %443 = vmatpush.bf16.xpose.msra.mxu0 0
      %444 = vmatpush.bf16.xpose.msra.mxu0 0
      %445 = vmatpush.bf16.xpose.msra.mxu0 0
      %446 = vmatpush.bf16.xpose.msra.mxu0 0
      %447 = vmatpush.bf16.xpose.msra.mxu0 0
      %448 = vmatpush.bf16.xpose.msra.mxu0 %v439
      %449 = vmatmul.bf16.gmra.mxu0 %v436
      %v450 = vpop.f32.mrf.mxu0
      %v451 = vadd.f32 0.0, %v450
      %v452 = vpop.f32.mrf.mxu0
      %453 = vdwg.mxu0
      %v454 = vld [vmem:[#allocation2] sm:$0xff]
      %v455 = vsel %vm350, %v451, -inf
      %456 = vmax.xlane.f32.xlu0 %v455
      %v457 = vpop.xlane.xlu0 %456
      %v458 = vmax.f32 %v454, %v457
      %v459 = vsub.f32 %v454, %v458
      %v460 = vmul.f32 %v459, 1.442695
      %v461 = vpow.pop %v460
      %463 = vset.pattern.permute.xlu0 1
      %464 = vperm.xlu0 %463, %v458
      %v465 = vpop.permute.xlu0 %464
      %v467 = vsub.f32 %v451, %v465
      %v468 = vmul.f32 %v467, 1.442695
      %v469 = vpow.pop %v468
      %vm470 = vcmask 15368
      %471 = vst.msk [vmem:[#allocation2] sm:$0xff] %vm470, %v458
      %v472 = vld [vmem:[#allocation3] sm:$0xff]
      %v473 = vmul.f32 %v461, %v472
      %v474 = vsel %vm350, %v469, 0.0
      %475 = vadd.xlane.f32.xlu0 %v474
      %v476 = vpop.xlane.xlu0 %475
      %v477 = vadd.f32 %v473, %v476
      %478 = vst.msk [vmem:[#allocation3] sm:$0xff] %vm470, %v477
      %v479 = vld [vmem:[#allocation4] sm:$0xff]
      %481 = vset.pattern.permute.xlu0 1
      %482 = vperm.xlu0 %481, %v461
      %v483 = vpop.permute.xlu0 %482
      %v485 = vmul.f32 %v483, %v479
      %v486 = vpack.c.bf16 %v469, %v469
      %v488 = vunpack.c.l.b16 %v317
      %v489 = vpack.c.b16 %v488, %v488
      %490 = vrot.lane.b32.xlu0 %v489, 120
      %v491 = vpop.permute.xlu0 %490
      %v493 = vsel %vm350, %v486, 0
      %v496 = vsel %vm406, %v491, 0
      %498 = vmatpush.bf16.msra.mxu0 0
      %499 = vmatpush.bf16.msra.mxu0 0
      %500 = vmatpush.bf16.msra.mxu0 0
      %501 = vmatpush.bf16.msra.mxu0 0
      %502 = vmatpush.bf16.msra.mxu0 0
      %503 = vmatpush.bf16.msra.mxu0 0
      %504 = vmatpush.bf16.msra.mxu0 0
      %505 = vmatpush.bf16.msra.mxu0 %v496
      %506 = vmatmul.bf16.gmra.mxu0 %v493
      %v507 = vpop.f32.mrf.mxu0
      %v508 = vadd.f32 0.0, %v507
      %v509 = vpop.f32.mrf.mxu0
      %510 = vdwg.mxu0
      %512 = vrot.lane.b32.xlu0 %v508, 8
      %v513 = vpop.permute.xlu0 %512
      %v515 = vadd.f32 %v485, %v513
      %vm516 = vcmask 130112
      %517 = vst.msk [vmem:[#allocation4] sm:$0xff] %vm516, %v515
      // Predicated region
      $region45: #{transformer_blocks.20} parent=39 // pred_check
        %p518 = pneg %p318
      $region46: #{transformer_blocks.20} parent=39 // pred_check_branch
        %520 = sbr.rel (%p518) target = $region48
      $region47: #{transformer_blocks.20} parent=39 // pred_region
        %v521 = vld [vmem:[#allocation4] sm:$0xff]
        %v522 = vld [vmem:[#allocation3] sm:$0xff]
        %v523 = vrcp.pop %v522
        %525 = vset.pattern.permute.xlu0 0
        %526 = vperm.xlu0 %525, %v523
        %v527 = vpop.permute.xlu0 %526
        %v529 = vmul.f32 %v521, %v527
        %530 = vset.pattern.permute.xlu0 1
        %531 = vperm.xlu0 %530, %v523
        %v532 = vpop.permute.xlu0 %531
        %v534 = vmul.f32 %v521, %v532
        %v535 = vsel %vm350, %v529, %v534
        %v536 = vpack.c.bf16 %v535, %v535
        %vm537 = vcmask 125952
        %538 = vst.msk [vmem:[%s313] sm:$0xf] %vm537, %v536
      $region48: #{transformer_blocks.20} parent=39 // pred_fallthru
        _
      %p539 = scmp.lt.s32.totalorder %s21, 1
      %s540 = scalar_select %p539, %s21, 1
      %p541 = scmp.lt.s32.totalorder %s22, 0
      %s542 = scalar_select %p541, %s22, 0
      %s543 = sadd.s32 %s542, %s540
      %s544 = smul.addr %s543, 4
      %s545 = scalar_lea.vmem %s5, %s544
      // Predicated region
      $region49: #{transformer_blocks.20} parent=39 // pred_check
        %p546 = pneg %p181
      $region50: #{transformer_blocks.20} parent=39 // pred_check_branch
        %548 = sbr.rel (%p546) target = $region52
      $region51: #{transformer_blocks.20} parent=39 // pred_region
        _
      $region52: #{transformer_blocks.20} parent=39 // pred_fallthru
        _
    $region40: #{transformer_blocks.20} parent=5 // pred_fallthru
      _
    %p549 = scmp.le.s32.totalorder 2, %s11
    // Predicated region
    $region53: #{transformer_blocks.20} parent=5 // pred_check
      %p550 = pneg %p549
    $region54: #{transformer_blocks.20} parent=5 // pred_check_branch
      %552 = sbr.rel (%p550) target = $region56
    $region55: #{transformer_blocks.20} parent=5 // pred_region
      %s553 = ssub.s32 %s11, 2
      // Predicated region
      $region57: #{transformer_blocks.20} parent=55 // pred_check
        %p554 = pneg %p187
      $region58: #{transformer_blocks.20} parent=55 // pred_check_branch
        %556 = sbr.rel (%p554) target = $region60
      $region59: #{transformer_blocks.20} parent=55 // pred_region
        %p557 = scmp.lt.s32.totalorder %s24, 1
        %s558 = scalar_select %p557, %s24, 1
        %p559 = scmp.lt.s32.totalorder %s25, 0
        %s560 = scalar_select %p559, %s25, 0
        %s561 = sadd.s32 %s560, %s558
        %s562 = smul.addr %s561, 4
        %s563 = scalar_lea.vmem %s5, %s562
      $region60: #{transformer_blocks.20} parent=55 // pred_fallthru
        _
    $region56: #{transformer_blocks.20} parent=5 // pred_fallthru
      _
  $region6: #{transformer_blocks.20} parent=0 // loop_footer
    %s15 = sadd.s32 1, %s11
  $region7: #{transformer_blocks.20} parent=0 // loop_footer_branch
    %10 = sbr.rel target = $region3
  $region8: #{transformer_blocks.20} parent=0 // loop_exit
    _

// kernel: transformer_blocks.26
$region0: #{transformer_blocks.26}
  #allocation0 [shape = 'u32[]', space=smem, size = 0x4, offset = 0x4, fixed_abs, tag = 'smem constant byte address 0x4 - core index']
  #allocation1 [shape = 'u32[72,128]{1,0:T(1,128)}', space=vmem, size = 0x9000, scoped, tag = 'internal scratch']
  #allocation2 [shape = 'bf16[16,32]{1,0:T(8,128)(2,1)}', space=vmem, size = 0x1000, scoped, tag = 'scratch operand']
  %s0 = inlined_call_operand.vmem [shape: f32[1,32], index: 0, kind: input, shape index: {}]
  %s1 = inlined_call_operand.vmem [shape: f32[16,32], index: 1, kind: input, shape index: {}]
  %s2 = inlined_call_operand.vmem [shape: bf16[32,85], index: 2, kind: input, shape index: {}]
  %s3 = inlined_call_operand.vmem [shape: bf16[32,85], index: 3, kind: input, shape index: {}]
  %s4 = inlined_call_operand.vmem [shape: bf16[16,85], index: 4, kind: output, shape index: {}]
  %s5 = sld [smem:[#allocation0]]
  $region30: #{transformer_blocks.26} parent=0
    _
  %s7 = ssub.s32 1, %s5
  %s8 = scalar_select 0, %s7, %s5
  // Predicated region
  $region2: #{transformer_blocks.26} parent=0 // pred_check
    _
  $region3: #{transformer_blocks.26} parent=0 // pred_check_branch
    %10 = sbr.rel (0) target = $region5
  $region4: #{transformer_blocks.26} parent=0 // pred_region
    _
  $region5: #{transformer_blocks.26} parent=0 // pred_fallthru
    _
  // Predicated region
  $region6: #{transformer_blocks.26} parent=0 // pred_check
    _
  $region7: #{transformer_blocks.26} parent=0 // pred_check_branch
    %12 = sbr.rel (0) target = $region9
  $region8: #{transformer_blocks.26} parent=0 // pred_region
    _
  $region9: #{transformer_blocks.26} parent=0 // pred_fallthru
    _
  // Predicated region
  $region10: #{transformer_blocks.26} parent=0 // pred_check
    _
  $region11: #{transformer_blocks.26} parent=0 // pred_check_branch
    %14 = sbr.rel (0) target = $region13
  $region12: #{transformer_blocks.26} parent=0 // pred_region
    _
  $region13: #{transformer_blocks.26} parent=0 // pred_fallthru
    _
  // Predicated region
  $region14: #{transformer_blocks.26} parent=0 // pred_check
    _
  $region15: #{transformer_blocks.26} parent=0 // pred_check_branch
    %16 = sbr.rel (0) target = $region17
  $region16: #{transformer_blocks.26} parent=0 // pred_region
    _
  $region17: #{transformer_blocks.26} parent=0 // pred_fallthru
    _
  %p18 = scmp.eq.s32.totalorder 0, 0
  // Predicated region
  $region18: #{transformer_blocks.26} parent=0 // pred_check
    %p19 = pneg %p18
  $region19: #{transformer_blocks.26} parent=0 // pred_check_branch
    %21 = sbr.rel (%p19) target = $region21
  $region20: #{transformer_blocks.26} parent=0 // pred_region
    %v22 = vld [vmem:[%s1] sm:$0xff]
    %v23 = vld [vmem:[%s1 + $0x8] sm:$0xff]
    %v24 = vld [vmem:[%s0] sm:$0x1]
    %vm25 = vcmask 261120
    %v26 = vsel %vm25, %v22, 0.0
    %27 = vadd.xlane.f32.xlu0 %v26
    %v28 = vpop.xlane.xlu0 %27
    %v29 = vsel %vm25, %v23, 0.0
    %30 = vadd.xlane.f32.xlu0 %v29
    %v31 = vpop.xlane.xlu0 %30
    %v32 = vrcp.pop 32.0
    %v33 = vmul.f32 32.0, %v32
    %v34 = vsub.f32 1.0, %v33
    %v35 = vmul.f32 %v32, %v34
    %v36 = vadd.f32 %v32, %v35
    %vm37 = vweird.f32 %v32
    %v38 = vsel %vm37, %v32, %v36
    %v39 = vmul.f32 %v28, %v38
    %v40 = vmul.f32 %v31, %v38
    %v41 = vsub.f32 %v22, %v39
    %v42 = vsub.f32 %v23, %v40
    %v43 = vmul.f32 %v41, %v41
    %v44 = vmul.f32 %v42, %v42
    %v45 = vsel %vm25, %v43, 0.0
    %46 = vadd.xlane.f32.xlu0 %v45
    %v47 = vpop.xlane.xlu0 %46
    %v48 = vsel %vm25, %v44, 0.0
    %49 = vadd.xlane.f32.xlu0 %v48
    %v50 = vpop.xlane.xlu0 %49
    %v51 = vmul.f32 %v47, %v38
    %v52 = vmul.f32 %v50, %v38
    %v53 = vadd.f32 %v51, 1e-05
    %v54 = vadd.f32 %v52, 1e-05
    %v55 = vrsqrt.pop %v53
    %v56 = vmul.f32 %v55, %v53
    %v57 = vmul.f32 %v56, %v55
    %v58 = vmul.f32 0.5, %v57
    %v59 = vsub.f32 1.5, %v58
    %v60 = vmul.f32 %v55, %v59
    %vm61 = vweird.f32 %v53
    %vm62 = vweird.f32 %v55
    %vm63 = vmor %vm61, %vm62
    %v64 = vsel %vm63, %v55, %v60
    %v65 = vrsqrt.pop %v54
    %v66 = vmul.f32 %v65, %v54
    %v67 = vmul.f32 %v66, %v65
    %v68 = vmul.f32 0.5, %v67
    %v69 = vsub.f32 1.5, %v68
    %v70 = vmul.f32 %v65, %v69
    %vm71 = vweird.f32 %v54
    %vm72 = vweird.f32 %v65
    %vm73 = vmor %vm71, %vm72
    %v74 = vsel %vm73, %v65, %v70
    %v75 = vmul.f32 %v41, %v64
    %v76 = vmul.f32 %v42, %v74
    %v78 = vperm.slane %v24, 0
    %v80 = vmul.f32 %v75, %v78
    %v81 = vmul.f32 %v76, %v78
    %v82 = vpack.c.bf16 %v80, %v80
    %v83 = vpack.c.bf16 %v81, %v81
    %vm84 = vcmask 257024
    %85 = vst.msk [vmem:[#allocation2] sm:$0xf] %vm84, %v82
    %86 = vst.msk [vmem:[#allocation2 + $0x4] sm:$0xf] %vm84, %v83
  $region21: #{transformer_blocks.26} parent=0 // pred_fallthru
    _
  %v87 = vld [vmem:[#allocation2] sm:$0xf]
  %v88 = vld [vmem:[#allocation2 + $0x4] sm:$0xf]
  %v89 = vld [vmem:[%s2] sm:$0xf]
  %v90 = vld [vmem:[%s2 + $0x4] sm:$0xf]
  %v91 = vld [vmem:[%s2 + $0x8] sm:$0xf]
  %v92 = vld [vmem:[%s2 + $0xc] sm:$0xf]
  %v95 = vunpack.c.l.b16 %v87
  %v96 = vunpack.c.l.b16 %v88
  %v97 = vpack.c.b16 %v96, %v95
  %v102 = vunpack.c.l.b16 %v89
  %v103 = vunpack.c.l.b16 %v90
  %v104 = vunpack.c.l.b16 %v91
  %v105 = vunpack.c.l.b16 %v92
  %v106 = vpack.c.b16 %v103, %v102
  %v107 = vpack.c.b16 %v105, %v104
  %vm110 = vcmask 261120
  %v112 = vsel %vm110, %v97, 0
  %114 = vmatpush.bf16.msra.mxu0 0
  %115 = vmatpush.bf16.msra.mxu0 0
  %116 = vmatpush.bf16.msra.mxu0 0
  %117 = vmatpush.bf16.msra.mxu0 0
  %118 = vmatpush.bf16.msra.mxu0 0
  %119 = vmatpush.bf16.msra.mxu0 0
  %120 = vmatpush.bf16.msra.mxu0 %v107
  %121 = vmatpush.bf16.msra.mxu0 %v106
  %122 = vmatmul.bf16.gmra.mxu0 %v112
  %v123 = vpop.f32.mrf.mxu0
  %v124 = vadd.f32 0.0, %v123
  %v125 = vpop.f32.mrf.mxu0
  %v126 = vadd.f32 0.0, %v125
  %127 = vdwg.mxu0
  %v128 = vld [vmem:[%s3] sm:$0xf]
  %v129 = vld [vmem:[%s3 + $0x4] sm:$0xf]
  %v130 = vld [vmem:[%s3 + $0x8] sm:$0xf]
  %v131 = vld [vmem:[%s3 + $0xc] sm:$0xf]
  %v136 = vunpack.c.l.b16 %v128
  %v137 = vunpack.c.l.b16 %v129
  %v138 = vunpack.c.l.b16 %v130
  %v139 = vunpack.c.l.b16 %v131
  %v140 = vpack.c.b16 %v137, %v136
  %v141 = vpack.c.b16 %v139, %v138
  %144 = vmatpush.bf16.msra.mxu0 0
  %145 = vmatpush.bf16.msra.mxu0 0
  %146 = vmatpush.bf16.msra.mxu0 0
  %147 = vmatpush.bf16.msra.mxu0 0
  %148 = vmatpush.bf16.msra.mxu0 0
  %149 = vmatpush.bf16.msra.mxu0 0
  %150 = vmatpush.bf16.msra.mxu0 %v141
  %151 = vmatpush.bf16.msra.mxu0 %v140
  %152 = vmatmul.bf16.gmra.mxu0 %v112
  %v153 = vpop.f32.mrf.mxu0
  %v154 = vadd.f32 0.0, %v153
  %v155 = vpop.f32.mrf.mxu0
  %v156 = vadd.f32 0.0, %v155
  %157 = vdwg.mxu0
  %v158 = vmul.f32 %v124, 0.5
  %v159 = vmul.f32 %v126, 0.5
  %v160 = vmul.f32 %v124, 0.044715
  %v161 = vmul.f32 %v126, 0.044715
  %v162 = vmul.f32 %v160, %v124
  %v163 = vmul.f32 %v161, %v126
  %v164 = vmul.f32 %v162, %v124
  %v165 = vmul.f32 %v163, %v126
  %v166 = vadd.f32 %v124, %v164
  %v167 = vadd.f32 %v126, %v165
  %v168 = vmul.f32 %v166, 0.7978846
  %v169 = vmul.f32 %v167, 0.7978846
  %v170 = vtanh.pop %v168
  %v171 = vtanh.pop %v169
  %v172 = vadd.f32 %v170, 1.0
  %v173 = vadd.f32 %v171, 1.0
  %v174 = vmul.f32 %v158, %v172
  %v175 = vmul.f32 %v159, %v173
  %v176 = vmul.f32 %v154, %v174
  %v177 = vmul.f32 %v156, %v175
  %v178 = vpack.c.bf16 %v176, %v176
  %v179 = vpack.c.bf16 %v177, %v177
  %vm180 = vcmask 691200
  %181 = vst.msk [vmem:[%s4] sm:$0xf] %vm180, %v178
  %182 = vst.msk [vmem:[%s4 + $0x4] sm:$0xf] %vm180, %v179
  // Predicated region
  $region22: #{transformer_blocks.26} parent=0 // pred_check
    _
  $region23: #{transformer_blocks.26} parent=0 // pred_check_branch
    %184 = sbr.rel (0) target = $region25
  $region24: #{transformer_blocks.26} parent=0 // pred_region
    _
  $region25: #{transformer_blocks.26} parent=0 // pred_fallthru
    _
  // Predicated region
  $region26: #{transformer_blocks.26} parent=0 // pred_check
    _
  $region27: #{transformer_blocks.26} parent=0 // pred_check_branch
    %186 = sbr.rel (0) target = $region29
  $region28: #{transformer_blocks.26} parent=0 // pred_region
    _
  $region29: #{transformer_blocks.26} parent=0 // pred_fallthru
    _

// kernel: transformer_blocks.27
$region0: #{transformer_blocks.27}
  #allocation0 [shape = 'u32[]', space=smem, size = 0x4, offset = 0x4, fixed_abs, tag = 'smem constant byte address 0x4 - core index']
  #allocation1 [shape = 'u32[72,128]{1,0:T(1,128)}', space=vmem, size = 0x9000, scoped, tag = 'internal scratch']
  #allocation2 [shape = 'bf16[16,85]{1,0:T(8,128)(2,1)}', space=vmem, size = 0x1000, scoped, tag = 'scratch operand']
  %s0 = inlined_call_operand.vmem [shape: f32[1,85], index: 0, kind: input, shape index: {}]
  %s1 = inlined_call_operand.vmem [shape: bf16[16,85], index: 1, kind: input, shape index: {}]
  %s2 = inlined_call_operand.vmem [shape: bf16[85,32], index: 2, kind: input, shape index: {}]
  %s3 = inlined_call_operand.vmem [shape: f32[16,32], index: 3, kind: input, shape index: {}]
  %s4 = inlined_call_operand.vmem [shape: f32[16,32], index: 4, kind: output, shape index: {}]
  %s5 = sld [smem:[#allocation0]]
  $region30: #{transformer_blocks.27} parent=0
    _
  %s7 = ssub.s32 1, %s5
  %s8 = scalar_select 0, %s7, %s5
  // Predicated region
  $region2: #{transformer_blocks.27} parent=0 // pred_check
    _
  $region3: #{transformer_blocks.27} parent=0 // pred_check_branch
    %10 = sbr.rel (0) target = $region5
  $region4: #{transformer_blocks.27} parent=0 // pred_region
    _
  $region5: #{transformer_blocks.27} parent=0 // pred_fallthru
    _
  // Predicated region
  $region6: #{transformer_blocks.27} parent=0 // pred_check
    _
  $region7: #{transformer_blocks.27} parent=0 // pred_check_branch
    %12 = sbr.rel (0) target = $region9
  $region8: #{transformer_blocks.27} parent=0 // pred_region
    _
  $region9: #{transformer_blocks.27} parent=0 // pred_fallthru
    _
  // Predicated region
  $region10: #{transformer_blocks.27} parent=0 // pred_check
    _
  $region11: #{transformer_blocks.27} parent=0 // pred_check_branch
    %14 = sbr.rel (0) target = $region13
  $region12: #{transformer_blocks.27} parent=0 // pred_region
    _
  $region13: #{transformer_blocks.27} parent=0 // pred_fallthru
    _
  // Predicated region
  $region14: #{transformer_blocks.27} parent=0 // pred_check
    _
  $region15: #{transformer_blocks.27} parent=0 // pred_check_branch
    %16 = sbr.rel (0) target = $region17
  $region16: #{transformer_blocks.27} parent=0 // pred_region
    _
  $region17: #{transformer_blocks.27} parent=0 // pred_fallthru
    _
  %p18 = scmp.eq.s32.totalorder 0, 0
  // Predicated region
  $region18: #{transformer_blocks.27} parent=0 // pred_check
    %p19 = pneg %p18
  $region19: #{transformer_blocks.27} parent=0 // pred_check_branch
    %21 = sbr.rel (%p19) target = $region21
  $region20: #{transformer_blocks.27} parent=0 // pred_region
    %v22 = vld [vmem:[%s1] sm:$0xf]
    %v23 = vld [vmem:[%s1 + $0x4] sm:$0xf]
    %v24 = vunpack.c.l.bf16 %v22
    %v25 = vunpack.c.l.bf16 %v23
    %v26 = vld [vmem:[%s0] sm:$0x1]
    %vm27 = vcmask 695296
    %v28 = vsel %vm27, %v24, 0.0
    %29 = vadd.xlane.f32.xlu0 %v28
    %v30 = vpop.xlane.xlu0 %29
    %v31 = vsel %vm27, %v25, 0.0
    %32 = vadd.xlane.f32.xlu0 %v31
    %v33 = vpop.xlane.xlu0 %32
    %v34 = vrcp.pop 85.0
    %v35 = vmul.f32 85.0, %v34
    %v36 = vsub.f32 1.0, %v35
    %v37 = vmul.f32 %v34, %v36
    %v38 = vadd.f32 %v34, %v37
    %vm39 = vweird.f32 %v34
    %v40 = vsel %vm39, %v34, %v38
    %v41 = vmul.f32 %v30, %v40
    %v42 = vmul.f32 %v33, %v40
    %v43 = vsub.f32 %v24, %v41
    %v44 = vsub.f32 %v25, %v42
    %v45 = vmul.f32 %v43, %v43
    %v46 = vmul.f32 %v44, %v44
    %v47 = vsel %vm27, %v45, 0.0
    %48 = vadd.xlane.f32.xlu0 %v47
    %v49 = vpop.xlane.xlu0 %48
    %v50 = vsel %vm27, %v46, 0.0
    %51 = vadd.xlane.f32.xlu0 %v50
    %v52 = vpop.xlane.xlu0 %51
    %v53 = vmul.f32 %v49, %v40
    %v54 = vmul.f32 %v52, %v40
    %v55 = vadd.f32 %v53, 1e-05
    %v56 = vadd.f32 %v54, 1e-05
    %v57 = vrsqrt.pop %v55
    %v58 = vmul.f32 %v57, %v55
    %v59 = vmul.f32 %v58, %v57
    %v60 = vmul.f32 0.5, %v59
    %v61 = vsub.f32 1.5, %v60
    %v62 = vmul.f32 %v57, %v61
    %vm63 = vweird.f32 %v55
    %vm64 = vweird.f32 %v57
    %vm65 = vmor %vm63, %vm64
    %v66 = vsel %vm65, %v57, %v62
    %v67 = vrsqrt.pop %v56
    %v68 = vmul.f32 %v67, %v56
    %v69 = vmul.f32 %v68, %v67
    %v70 = vmul.f32 0.5, %v69
    %v71 = vsub.f32 1.5, %v70
    %v72 = vmul.f32 %v67, %v71
    %vm73 = vweird.f32 %v56
    %vm74 = vweird.f32 %v67
    %vm75 = vmor %vm73, %vm74
    %v76 = vsel %vm75, %v67, %v72
    %v77 = vmul.f32 %v43, %v66
    %v78 = vmul.f32 %v44, %v76
    %v80 = vperm.slane %v26, 0
    %v82 = vmul.f32 %v77, %v80
    %v83 = vmul.f32 %v78, %v80
    %v84 = vpack.c.bf16 %v82, %v82
    %v85 = vpack.c.bf16 %v83, %v83
    %vm86 = vcmask 691200
    %87 = vst.msk [vmem:[#allocation2] sm:$0xf] %vm86, %v84
    %88 = vst.msk [vmem:[#allocation2 + $0x4] sm:$0xf] %vm86, %v85
  $region21: #{transformer_blocks.27} parent=0 // pred_fallthru
    _
  %v89 = vld [vmem:[#allocation2] sm:$0xf]
  %v90 = vld [vmem:[#allocation2 + $0x4] sm:$0xf]
  %v91 = vld [vmem:[%s2] sm:$0xf]
  %v92 = vld [vmem:[%s2 + $0x4] sm:$0xf]
  %v93 = vld [vmem:[%s2 + $0x8] sm:$0xf]
  %v94 = vld [vmem:[%s2 + $0xc] sm:$0xf]
  %v95 = vld [vmem:[%s2 + $0x10] sm:$0xf]
  %v96 = vld [vmem:[%s2 + $0x14] sm:$0xf]
  %v97 = vld [vmem:[%s2 + $0x18] sm:$0xf]
  %v98 = vld [vmem:[%s2 + $0x1c] sm:$0xf]
  %v99 = vld [vmem:[%s2 + $0x20] sm:$0xf]
  %v100 = vld [vmem:[%s2 + $0x24] sm:$0xf]
  %v101 = vld [vmem:[%s2 + $0x28] sm:$0x7]
  %v102 = vld [vmem:[%s3] sm:$0xff]
  %v103 = vld [vmem:[%s3 + $0x8] sm:$0xff]
  %v106 = vunpack.c.l.b16 %v89
  %v107 = vunpack.c.l.b16 %v90
  %v108 = vpack.c.b16 %v107, %v106
  %v120 = vunpack.c.l.b16 %v91
  %v121 = vunpack.c.l.b16 %v92
  %v122 = vunpack.c.l.b16 %v93
  %v123 = vunpack.c.l.b16 %v94
  %v124 = vunpack.c.l.b16 %v95
  %v125 = vunpack.c.l.b16 %v96
  %v126 = vunpack.c.l.b16 %v97
  %v127 = vunpack.c.l.b16 %v98
  %v128 = vunpack.c.l.b16 %v99
  %v129 = vunpack.c.l.b16 %v100
  %v130 = vunpack.c.l.b16 %v101
  %v131 = vpack.c.b16 %v121, %v120
  %v132 = vpack.c.b16 %v123, %v122
  %v133 = vpack.c.b16 %v125, %v124
  %v134 = vpack.c.b16 %v127, %v126
  %v135 = vpack.c.b16 %v129, %v128
  %v136 = vpack.c.b16 %v130, %v130
  %vm142 = vcmask 695296
  %v144 = vsel %vm142, %v108, 0
  %vm146 = vcmask 1041408
  %vm147 = vcmask 1042432
  %v148 = vsel %vm146, 4294967295, 65535
  %v149 = vsel %vm147, %v148, 0
  %v151 = vand.u32 %v136, %v149
  %153 = vmatpush.bf16.msra.mxu0 0
  %154 = vmatpush.bf16.msra.mxu0 0
  %155 = vmatpush.bf16.msra.mxu0 %v151
  %156 = vmatpush.bf16.msra.mxu0 %v135
  %157 = vmatpush.bf16.msra.mxu0 %v134
  %158 = vmatpush.bf16.msra.mxu0 %v133
  %159 = vmatpush.bf16.msra.mxu0 %v132
  %160 = vmatpush.bf16.msra.mxu0 %v131
  %161 = vmatmul.bf16.gmra.mxu0 %v144
  %v162 = vpop.f32.mrf.mxu0
  %v163 = vadd.f32 %v102, %v162
  %v164 = vpop.f32.mrf.mxu0
  %v165 = vadd.f32 %v103, %v164
  %166 = vdwg.mxu0
  %vm167 = vcmask 261120
  %168 = vst.msk [vmem:[%s4] sm:$0xff] %vm167, %v163
  %169 = vst.msk [vmem:[%s4 + $0x8] sm:$0xff] %vm167, %v165
  // Predicated region
  $region22: #{transformer_blocks.27} parent=0 // pred_check
    _
  $region23: #{transformer_blocks.27} parent=0 // pred_check_branch
    %171 = sbr.rel (0) target = $region25
  $region24: #{transformer_blocks.27} parent=0 // pred_region
    _
  $region25: #{transformer_blocks.27} parent=0 // pred_fallthru
    _
  // Predicated region
  $region26: #{transformer_blocks.27} parent=0 // pred_check
    _
  $region27: #{transformer_blocks.27} parent=0 // pred_check_branch
    %173 = sbr.rel (0) target = $region29
  $region28: #{transformer_blocks.27} parent=0 // pred_region
    _
  $region29: #{transformer_blocks.27} parent=0 // pred_fallthru
    _

// kernel: transformer_blocks.24
$region0: #{transformer_blocks.24}
  #allocation0 [shape = 'u32[]', space=smem, size = 0x4, offset = 0x4, fixed_abs, tag = 'smem constant byte address 0x4 - core index']
  #allocation1 [shape = 'u32[72,128]{1,0:T(1,128)}', space=vmem, size = 0x9000, scoped, tag = 'internal scratch']
  #allocation2 [shape = 'f32[8,2]{1,0:T(8,128)}', space=vmem, size = 0x1000, scoped, tag = 'scratch operand']
  #allocation3 [shape = 'f32[8,2]{1,0:T(8,128)}', space=vmem, size = 0x1000, scoped, tag = 'scratch operand']
  #allocation4 [shape = 'f32[8,16]{1,0:T(8,128)}', space=vmem, size = 0x1000, scoped, tag = 'scratch operand']
  %s0 = inlined_call_operand.vmem [shape: f32[1,16], index: 0, kind: input, shape index: {}]
  %s1 = inlined_call_operand.vmem [shape: f32[1,16], index: 1, kind: input, shape index: {}]
  %s2 = inlined_call_operand.vmem [shape: bf16[2,8,16], index: 2, kind: input, shape index: {}]
  %s3 = inlined_call_operand.vmem [shape: bf16[2,6,16], index: 3, kind: input, shape index: {}]
  %s4 = inlined_call_operand.vmem [shape: bf16[2,6,16], index: 4, kind: input, shape index: {}]
  %s5 = inlined_call_operand.vmem [shape: s32[2,1,6], index: 5, kind: input, shape index: {}]
  %s6 = inlined_call_operand.vmem [shape: bf16[2,8,16], index: 6, kind: output, shape index: {}]
  %s7 = sld [smem:[#allocation0]]
  $region65: #{transformer_blocks.24} parent=0
    _
  %s9 = ssub.s32 1, %s7
  %s10 = scalar_select 0, %s9, %s7
  loop: start=0, step=1, limit=4
  $region2: #{transformer_blocks.24} parent=0 // loop_pre_header
    _
  $region3: #{transformer_blocks.24} parent=0 // loop_header
    %s12 = sphi 0, %s16
    %p13 = scmp.ge.s32.totalorder %s12, 4
    %s19 = sphi 0, %s38
    %s20 = sphi 0, %s34
    %s21 = sphi 0, %s30
    %s22 = sphi 0, %s19
    %s23 = sphi 0, %s20
    %s24 = sphi 0, %s21
    %s25 = sphi 0, %s22
    %s26 = sphi 0, %s23
    %s27 = sphi 0, %s24
    %s39 = sphi 0, %s39
    %s41 = sphi 0, %s39
    %s42 = sphi 0, %s41
    %s56 = sphi 0, %s42
    %s60 = sphi 0, %s60
    %s62 = sphi 0, %s60
    %s63 = sphi 0, %s62
    %s77 = sphi 0, %s63
    %s85 = sphi 0, %s87
    %s88 = sphi 0, %s85
    %s89 = sphi 0, %s88
    %s105 = sphi 0, %s89
    %s113 = sphi 0, %s115
    %s116 = sphi 0, %s113
    %s117 = sphi 0, %s116
    %s133 = sphi 0, %s117
    %s141 = sphi 0, %s143
    %s144 = sphi 0, %s141
    %s145 = sphi 0, %s144
    %s161 = sphi 0, %s145
    %s169 = sphi 0, %s171
    %s172 = sphi 0, %s169
    %s173 = sphi 0, %s172
    %s189 = sphi 0, %s173
    %s197 = sphi 0, %s199
    %s200 = sphi 0, %s197
    %s201 = sphi 0, %s200
    %s217 = sphi 0, %s201
  $region4: #{transformer_blocks.24} parent=0 // loop_header_branch
    %15 = sbr.rel (%p13) target = $region8
  $region5: #{transformer_blocks.24} parent=0 // loop_body
    %s17 = ssub.s32 %s12, 1
    %s18 = ssub.s32 %s12, 2
    %s28 = sadd.s32 1, %s21
    %p29 = scmp.ge.s32.totalorder %s28, 1
    %s30 = scalar_select %p29, 0, %s28
    %s31 = sadd.s32 1, %s20
    %s32 = scalar_select %p29, %s31, %s20
    %p33 = scmp.ge.s32.totalorder %s32, 1
    %s34 = scalar_select %p33, 0, %s32
    %s35 = sadd.s32 1, %s19
    %s36 = scalar_select %p33, %s35, %s19
    %p37 = scmp.ge.s32.totalorder %s36, 2
    %s38 = scalar_select %p37, 0, %s36
    %s40 = sadd.s32 %s39, 1
    %p43 = scmp.eq.s32.totalorder %s12, 1
    %p44 = scmp.ne.s32.totalorder %s39, %s41
    %p45 = scmp.eq.s32.totalorder %s12, 0
    %p46 = por %p44, %p45
    %p47 = scmp.ne.s32.totalorder %s39, %s41
    %p48 = scmp.eq.s32.totalorder %s17, 1
    %p49 = por %p47, %p48
    %p50 = scmp.ne.s32.totalorder %s41, %s42
    %p51 = scmp.eq.s32.totalorder %s17, 0
    %p52 = por %p50, %p51
    %p53 = scmp.ne.s32.totalorder %s41, %s42
    %p54 = scmp.eq.s32.totalorder %s18, 1
    %p55 = por %p53, %p54
    %p57 = scmp.ne.s32.totalorder %s42, %s56
    %p58 = scmp.eq.s32.totalorder %s18, 0
    %p59 = por %p57, %p58
    %s61 = sadd.s32 %s60, 1
    %p64 = scmp.eq.s32.totalorder %s12, 1
    %p65 = scmp.ne.s32.totalorder %s60, %s62
    %p66 = scmp.eq.s32.totalorder %s12, 0
    %p67 = por %p65, %p66
    %p68 = scmp.ne.s32.totalorder %s60, %s62
    %p69 = scmp.eq.s32.totalorder %s17, 1
    %p70 = por %p68, %p69
    %p71 = scmp.ne.s32.totalorder %s62, %s63
    %p72 = scmp.eq.s32.totalorder %s17, 0
    %p73 = por %p71, %p72
    %p74 = scmp.ne.s32.totalorder %s62, %s63
    %p75 = scmp.eq.s32.totalorder %s18, 1
    %p76 = por %p74, %p75
    %p78 = scmp.ne.s32.totalorder %s63, %s77
    %p79 = scmp.eq.s32.totalorder %s18, 0
    %p80 = por %p78, %p79
    %s81 = ssub.s32 %s19, %s38
    %s82 = ssub.s32 %s20, %s34
    %s83 = sor.u32 %s81, %s82
    %p84 = scmp.eq.s32.totalorder %s83, 0
    %s86 = sadd.s32 %s85, 1
    %s87 = scalar_select %p84, %s85, %s86
    %p90 = pneg %p84
    %p91 = scmp.eq.s32.totalorder %s12, 1
    %p92 = por %p90, %p91
    %p93 = scmp.ne.s32.totalorder %s85, %s88
    %p94 = scmp.eq.s32.totalorder %s12, 0
    %p95 = por %p93, %p94
    %p96 = scmp.ne.s32.totalorder %s85, %s88
    %p97 = scmp.eq.s32.totalorder %s17, 1
    %p98 = por %p96, %p97
    %p99 = scmp.ne.s32.totalorder %s88, %s89
    %p100 = scmp.eq.s32.totalorder %s17, 0
    %p101 = por %p99, %p100
    %p102 = scmp.ne.s32.totalorder %s88, %s89
    %p103 = scmp.eq.s32.totalorder %s18, 1
    %p104 = por %p102, %p103
    %p106 = scmp.ne.s32.totalorder %s89, %s105
    %p107 = scmp.eq.s32.totalorder %s18, 0
    %p108 = por %p106, %p107
    %s109 = ssub.s32 %s19, %s38
    %s110 = ssub.s32 %s21, %s30
    %s111 = sor.u32 %s109, %s110
    %p112 = scmp.eq.s32.totalorder %s111, 0
    %s114 = sadd.s32 %s113, 1
    %s115 = scalar_select %p112, %s113, %s114
    %p118 = pneg %p112
    %p119 = scmp.eq.s32.totalorder %s12, 1
    %p120 = por %p118, %p119
    %p121 = scmp.ne.s32.totalorder %s113, %s116
    %p122 = scmp.eq.s32.totalorder %s12, 0
    %p123 = por %p121, %p122
    %p124 = scmp.ne.s32.totalorder %s113, %s116
    %p125 = scmp.eq.s32.totalorder %s17, 1
    %p126 = por %p124, %p125
    %p127 = scmp.ne.s32.totalorder %s116, %s117
    %p128 = scmp.eq.s32.totalorder %s17, 0
    %p129 = por %p127, %p128
    %p130 = scmp.ne.s32.totalorder %s116, %s117
    %p131 = scmp.eq.s32.totalorder %s18, 1
    %p132 = por %p130, %p131
    %p134 = scmp.ne.s32.totalorder %s117, %s133
    %p135 = scmp.eq.s32.totalorder %s18, 0
    %p136 = por %p134, %p135
    %s137 = ssub.s32 %s19, %s38
    %s138 = ssub.s32 %s21, %s30
    %s139 = sor.u32 %s137, %s138
    %p140 = scmp.eq.s32.totalorder %s139, 0
    %s142 = sadd.s32 %s141, 1
    %s143 = scalar_select %p140, %s141, %s142
    %p146 = pneg %p140
    %p147 = scmp.eq.s32.totalorder %s12, 1
    %p148 = por %p146, %p147
    %p149 = scmp.ne.s32.totalorder %s141, %s144
    %p150 = scmp.eq.s32.totalorder %s12, 0
    %p151 = por %p149, %p150
    %p152 = scmp.ne.s32.totalorder %s141, %s144
    %p153 = scmp.eq.s32.totalorder %s17, 1
    %p154 = por %p152, %p153
    %p155 = scmp.ne.s32.totalorder %s144, %s145
    %p156 = scmp.eq.s32.totalorder %s17, 0
    %p157 = por %p155, %p156
    %p158 = scmp.ne.s32.totalorder %s144, %s145
    %p159 = scmp.eq.s32.totalorder %s18, 1
    %p160 = por %p158, %p159
    %p162 = scmp.ne.s32.totalorder %s145, %s161
    %p163 = scmp.eq.s32.totalorder %s18, 0
    %p164 = por %p162, %p163
    %s165 = ssub.s32 %s19, %s38
    %s166 = ssub.s32 %s21, %s30
    %s167 = sor.u32 %s165, %s166
    %p168 = scmp.eq.s32.totalorder %s167, 0
    %s170 = sadd.s32 %s169, 1
    %s171 = scalar_select %p168, %s169, %s170
    %p174 = pneg %p168
    %p175 = scmp.eq.s32.totalorder %s12, 1
    %p176 = por %p174, %p175
    %p177 = scmp.ne.s32.totalorder %s169, %s172
    %p178 = scmp.eq.s32.totalorder %s12, 0
    %p179 = por %p177, %p178
    %p180 = scmp.ne.s32.totalorder %s169, %s172
    %p181 = scmp.eq.s32.totalorder %s17, 1
    %p182 = por %p180, %p181
    %p183 = scmp.ne.s32.totalorder %s172, %s173
    %p184 = scmp.eq.s32.totalorder %s17, 0
    %p185 = por %p183, %p184
    %p186 = scmp.ne.s32.totalorder %s172, %s173
    %p187 = scmp.eq.s32.totalorder %s18, 1
    %p188 = por %p186, %p187
    %p190 = scmp.ne.s32.totalorder %s173, %s189
    %p191 = scmp.eq.s32.totalorder %s18, 0
    %p192 = por %p190, %p191
    %s193 = ssub.s32 %s19, %s38
    %s194 = ssub.s32 %s20, %s34
    %s195 = sor.u32 %s193, %s194
    %p196 = scmp.eq.s32.totalorder %s195, 0
    %s198 = sadd.s32 %s197, 1
    %s199 = scalar_select %p196, %s197, %s198
    %p202 = pneg %p196
    %p203 = scmp.eq.s32.totalorder %s12, 1
    %p204 = por %p202, %p203
    %p205 = scmp.ne.s32.totalorder %s197, %s200
    %p206 = scmp.eq.s32.totalorder %s12, 0
    %p207 = por %p205, %p206
    %p208 = scmp.ne.s32.totalorder %s197, %s200
    %p209 = scmp.eq.s32.totalorder %s17, 1
    %p210 = por %p208, %p209
    %p211 = scmp.ne.s32.totalorder %s200, %s201
    %p212 = scmp.eq.s32.totalorder %s17, 0
    %p213 = por %p211, %p212
    %p214 = scmp.ne.s32.totalorder %s200, %s201
    %p215 = scmp.eq.s32.totalorder %s18, 1
    %p216 = por %p214, %p215
    %p218 = scmp.ne.s32.totalorder %s201, %s217
    %p219 = scmp.eq.s32.totalorder %s18, 0
    %p220 = por %p218, %p219
    %p221 = scmp.le.s32.totalorder 1, %s12
    %p222 = scmp.lt.s32.totalorder %s12, 3
    %p223 = pnand %p221, %p222
    %p224 = pneg %p223
    // Predicated region
    $region9: #{transformer_blocks.24} parent=5 // pred_check
      _
    $region10: #{transformer_blocks.24} parent=5 // pred_check_branch
      %226 = sbr.rel (%p223) target = $region12
    $region11: #{transformer_blocks.24} parent=5 // pred_region
      %s227 = ssub.s32 %s12, 1
      // Predicated region
      $region13: #{transformer_blocks.24} parent=11 // pred_check
        %p228 = pneg %p52
      $region14: #{transformer_blocks.24} parent=11 // pred_check_branch
        %230 = sbr.rel (%p228) target = $region16
      $region15: #{transformer_blocks.24} parent=11 // pred_region
        _
      $region16: #{transformer_blocks.24} parent=11 // pred_fallthru
        _
      // Predicated region
      $region17: #{transformer_blocks.24} parent=11 // pred_check
        %p231 = pneg %p73
      $region18: #{transformer_blocks.24} parent=11 // pred_check_branch
        %233 = sbr.rel (%p231) target = $region20
      $region19: #{transformer_blocks.24} parent=11 // pred_region
        _
      $region20: #{transformer_blocks.24} parent=11 // pred_fallthru
        _
    $region12: #{transformer_blocks.24} parent=5 // pred_fallthru
      _
    %p234 = scmp.lt.s32.totalorder %s12, 2
    // Predicated region
    $region21: #{transformer_blocks.24} parent=5 // pred_check
      %p235 = pneg %p234
    $region22: #{transformer_blocks.24} parent=5 // pred_check_branch
      %237 = sbr.rel (%p235) target = $region24
    $region23: #{transformer_blocks.24} parent=5 // pred_region
      // Predicated region
      $region25: #{transformer_blocks.24} parent=23 // pred_check
        %p238 = pneg %p95
      $region26: #{transformer_blocks.24} parent=23 // pred_check_branch
        %240 = sbr.rel (%p238) target = $region28
      $region27: #{transformer_blocks.24} parent=23 // pred_region
        %p241 = scmp.lt.s32.totalorder %s19, 1
        %s242 = scalar_select %p241, %s19, 1
        %p243 = scmp.lt.s32.totalorder %s20, 0
        %s244 = scalar_select %p243, %s20, 0
        %s245 = sadd.s32 %s244, %s242
        %s246 = smul.addr %s245, 4
        %s247 = scalar_lea.vmem %s2, %s246
      $region28: #{transformer_blocks.24} parent=23 // pred_fallthru
        _
      // Predicated region
      $region29: #{transformer_blocks.24} parent=23 // pred_check
        %p248 = pneg %p123
      $region30: #{transformer_blocks.24} parent=23 // pred_check_branch
        %250 = sbr.rel (%p248) target = $region32
      $region31: #{transformer_blocks.24} parent=23 // pred_region
        %p251 = scmp.lt.s32.totalorder %s19, 1
        %s252 = scalar_select %p251, %s19, 1
        %p253 = scmp.lt.s32.totalorder %s21, 0
        %s254 = scalar_select %p253, %s21, 0
        %s255 = sadd.s32 %s254, %s252
        %s256 = smul.addr %s255, 4
        %s257 = scalar_lea.vmem %s3, %s256
      $region32: #{transformer_blocks.24} parent=23 // pred_fallthru
        _
      // Predicated region
      $region33: #{transformer_blocks.24} parent=23 // pred_check
        %p258 = pneg %p151
      $region34: #{transformer_blocks.24} parent=23 // pred_check_branch
        %260 = sbr.rel (%p258) target = $region36
      $region35: #{transformer_blocks.24} parent=23 // pred_region
        %p261 = scmp.lt.s32.totalorder %s19, 1
        %s262 = scalar_select %p261, %s19, 1
        %p263 = scmp.lt.s32.totalorder %s21, 0
        %s264 = scalar_select %p263, %s21, 0
        %s265 = sadd.s32 %s264, %s262
        %s266 = smul.addr %s265, 4
        %s267 = scalar_lea.vmem %s4, %s266
      $region36: #{transformer_blocks.24} parent=23 // pred_fallthru
        _
      // Predicated region
      $region37: #{transformer_blocks.24} parent=23 // pred_check
        %p268 = pneg %p179
      $region38: #{transformer_blocks.24} parent=23 // pred_check_branch
        %270 = sbr.rel (%p268) target = $region40
      $region39: #{transformer_blocks.24} parent=23 // pred_region
        %p271 = scmp.lt.s32.totalorder %s19, 1
        %s272 = scalar_select %p271, %s19, 1
        %p273 = scmp.lt.s32.totalorder %s21, 0
        %s274 = scalar_select %p273, %s21, 0
        %s275 = sadd.s32 %s274, %s272
        %s276 = scalar_lea.vmem %s5, %s275
      $region40: #{transformer_blocks.24} parent=23 // pred_fallthru
        _
    $region24: #{transformer_blocks.24} parent=5 // pred_fallthru
      _
    %p277 = scmp.le.s32.totalorder 1, %s12
    %p278 = scmp.lt.s32.totalorder %s12, 3
    %p279 = pnand %p277, %p278
    %p280 = pneg %p279
    // Predicated region
    $region41: #{transformer_blocks.24} parent=5 // pred_check
      _
    $region42: #{transformer_blocks.24} parent=5 // pred_check_branch
      %282 = sbr.rel (%p279) target = $region44
    $region43: #{transformer_blocks.24} parent=5 // pred_region
      %s283 = ssub.s32 %s12, 1
      %p284 = pneg %p52
      %p285 = pneg %p49
      %p286 = pneg %p73
      %p287 = pneg %p70
      %p288 = scmp.lt.s32.totalorder %s22, 1
      %s289 = scalar_select %p288, %s22, 1
      %p290 = scmp.lt.s32.totalorder %s23, 0
      %s291 = scalar_select %p290, %s23, 0
      %s292 = sadd.s32 %s291, %s289
      %s293 = smul.addr %s292, 4
      %s294 = scalar_lea.vmem %s2, %s293
      %p295 = pneg %p101
      %p296 = pneg %p98
      %p297 = scmp.lt.s32.totalorder %s22, 1
      %s298 = scalar_select %p297, %s22, 1
      %p299 = scmp.lt.s32.totalorder %s24, 0
      %s300 = scalar_select %p299, %s24, 0
      %s301 = sadd.s32 %s300, %s298
      %s302 = smul.addr %s301, 4
      %s303 = scalar_lea.vmem %s3, %s302
      %p304 = pneg %p129
      %p305 = pneg %p126
      %p306 = scmp.lt.s32.totalorder %s22, 1
      %s307 = scalar_select %p306, %s22, 1
      %p308 = scmp.lt.s32.totalorder %s24, 0
      %s309 = scalar_select %p308, %s24, 0
      %s310 = sadd.s32 %s309, %s307
      %s311 = smul.addr %s310, 4
      %s312 = scalar_lea.vmem %s4, %s311
      %p313 = pneg %p157
      %p314 = pneg %p154
      %p315 = scmp.lt.s32.totalorder %s22, 1
      %s316 = scalar_select %p315, %s22, 1
      %p317 = scmp.lt.s32.totalorder %s24, 0
      %s318 = scalar_select %p317, %s24, 0
      %s319 = sadd.s32 %s318, %s316
      %s320 = scalar_lea.vmem %s5, %s319
      %p321 = pneg %p185
      %p322 = pneg %p182
      %p323 = pneg %p213
      %p324 = pneg %p210
      %p325 = scmp.lt.s32.totalorder %s22, 1
      %s326 = scalar_select %p325, %s22, 1
      %p327 = scmp.lt.s32.totalorder %s23, 0
      %s328 = scalar_select %p327, %s23, 0
      %s329 = sadd.s32 %s328, %s326
      %s330 = smul.addr %s329, 4
      %s331 = scalar_lea.vmem %s6, %s330
      %p332 = scmp.lt.s32.totalorder %s22, 1
      %s333 = scalar_select %p332, %s22, 1
      %p334 = scmp.lt.s32.totalorder %s23, 0
      %s335 = scalar_select %p334, %s23, 0
      %s336 = sadd.s32 %s335, %s333
      %s337 = smul.addr %s336, 4
      %s338 = scalar_lea.vmem %s2, %s337
      %p339 = scmp.lt.s32.totalorder %s22, 1
      %s340 = scalar_select %p339, %s22, 1
      %p341 = scmp.lt.s32.totalorder %s24, 0
      %s342 = scalar_select %p341, %s24, 0
      %s343 = sadd.s32 %s342, %s340
      %s344 = smul.addr %s343, 4
      %s345 = scalar_lea.vmem %s3, %s344
      %p346 = scmp.lt.s32.totalorder %s22, 1
      %s347 = scalar_select %p346, %s22, 1
      %p348 = scmp.lt.s32.totalorder %s24, 0
      %s349 = scalar_select %p348, %s24, 0
      %s350 = sadd.s32 %s349, %s347
      %s351 = smul.addr %s350, 4
      %s352 = scalar_lea.vmem %s4, %s351
      %p353 = scmp.lt.s32.totalorder %s22, 1
      %s354 = scalar_select %p353, %s22, 1
      %p355 = scmp.lt.s32.totalorder %s24, 0
      %s356 = scalar_select %p355, %s24, 0
      %s357 = sadd.s32 %s356, %s354
      %s358 = scalar_lea.vmem %s5, %s357
      %p359 = scmp.lt.s32.totalorder %s22, 1
      %s360 = scalar_select %p359, %s22, 1
      %p361 = scmp.lt.s32.totalorder %s23, 0
      %s362 = scalar_select %p361, %s23, 0
      %s363 = sadd.s32 %s362, %s360
      %s364 = smul.addr %s363, 4
      %s365 = scalar_lea.vmem %s6, %s364
      %v367 = vld [vmem:[%s338] sm:$0xf]
      %v368 = vld [vmem:[%s345] sm:$0x7]
      %v369 = vld [vmem:[%s352] sm:$0x7]
      %p370 = scmp.eq.s32.totalorder %s24, 0
      // Predicated region
      $region45: #{transformer_blocks.24} parent=43 // pred_check
        %p371 = pneg %p370
      $region46: #{transformer_blocks.24} parent=43 // pred_check_branch
        %373 = sbr.rel (%p371) target = $region48
      $region47: #{transformer_blocks.24} parent=43 // pred_region
        %v374 = vld [vmem:[%s0] sm:$0x1]
        %vm375 = vcmask 15360
        %376 = vst.msk [vmem:[#allocation3] sm:$0xff] %vm375, 1.0
        %v377 = vld [vmem:[%s1] sm:$0x1]
        %v379 = vperm.slane %v377, 0
        %vm381 = vcmask 130048
        %382 = vst.msk [vmem:[#allocation4] sm:$0xff] %vm381, %v379
        %v383 = vunpack.c.l.bf16 %v367
        %v385 = vperm.slane %v374, 0
        %v387 = vmul.f32 %v383, %v385
        %vm388 = vcmask 64512
        %v389 = vsel %vm388, %v387, 0.0
        %390 = vadd.xlane.f32.xlu0 %v389
        %v391 = vpop.xlane.xlu0 %390
        %393 = vrot.lane.b32.xlu0 %v387, 120
        %v394 = vpop.permute.xlu0 %393
        %v396 = vsel %vm388, %v394, 0.0
        %397 = vadd.xlane.f32.xlu0 %v396
        %v398 = vpop.xlane.xlu0 %397
        %vm399 = vcmask 7168
        %v400 = vsel %vm399, %v391, %v398
        %401 = vst.msk [vmem:[#allocation2] sm:$0xff] %vm375, %v400
      $region48: #{transformer_blocks.24} parent=43 // pred_fallthru
        _
      %v402 = vld [vmem:[%s358] sm:$0x1]
      %vm403 = vcmp.ne.s32.totalorder %v402, 0
      %vm404 = vcmask 64512
      %v406 = vsel %vm404, %v367, 0
      %v409 = vsel %vm404, %v368, 0
      %411 = vmatpush.bf16.xpose.msra.mxu0 0
      %412 = vmatpush.bf16.xpose.msra.mxu0 0
      %413 = vmatpush.bf16.xpose.msra.mxu0 0
      %414 = vmatpush.bf16.xpose.msra.mxu0 0
      %415 = vmatpush.bf16.xpose.msra.mxu0 0
      %416 = vmatpush.bf16.xpose.msra.mxu0 0
      %417 = vmatpush.bf16.xpose.msra.mxu0 0
      %418 = vmatpush.bf16.xpose.msra.mxu0 %v409
      %419 = vmatmul.bf16.gmra.mxu0 %v406
      %v420 = vpop.f32.mrf.mxu0
      %v421 = vadd.f32 0.0, %v420
      %v422 = vpop.f32.mrf.mxu0
      %423 = vdwg.mxu0
      %v424 = vsel %vm403, 1, 0
      %v425 = vperm.slane %v424, 0
      %vm426 = vcmp.eq.s32.totalorder %v425, 1
      %v427 = vsel %vm426, %v421, -1e+30
      %v428 = vld [vmem:[#allocation2] sm:$0xff]
      %vm429 = vcmask 48128
      %v430 = vsel %vm429, %v427, -inf
      %431 = vmax.xlane.f32.xlu0 %v430
      %v432 = vpop.xlane.xlu0 %431
      %v433 = vmax.f32 %v428, %v432
      %v434 = vsub.f32 %v428, %v433
      %v435 = vmul.f32 %v434, 1.442695
      %v436 = vpow.pop %v435
      %438 = vset.pattern.permute.xlu0 0
      %439 = vperm.xlu0 %438, %v433
      %v440 = vpop.permute.xlu0 %439
      %v442 = vsub.f32 %v427, %v440
      %v443 = vmul.f32 %v442, 1.442695
      %v444 = vpow.pop %v443
      %vm445 = vcmask 7168
      %446 = vst.msk [vmem:[#allocation2] sm:$0xff] %vm445, %v433
      %v447 = vld [vmem:[#allocation3] sm:$0xff]
      %v448 = vmul.f32 %v436, %v447
      %v449 = vsel %vm429, %v444, 0.0
      %450 = vadd.xlane.f32.xlu0 %v449
      %v451 = vpop.xlane.xlu0 %450
      %v452 = vadd.f32 %v448, %v451
      %453 = vst.msk [vmem:[#allocation3] sm:$0xff] %vm445, %v452
      %v454 = vld [vmem:[#allocation4] sm:$0xff]
      %456 = vset.pattern.permute.xlu0 0
      %457 = vperm.xlu0 %456, %v436
      %v458 = vpop.permute.xlu0 %457
      %v460 = vmul.f32 %v458, %v454
      %v461 = vpack.c.bf16 %v444, %v444
      %v463 = vsel %vm429, %v461, 0
      %vm465 = vcmask 1042432
      %v467 = vsel %vm465, %v369, 0
      %469 = vmatpush.bf16.msra.mxu0 0
      %470 = vmatpush.bf16.msra.mxu0 0
      %471 = vmatpush.bf16.msra.mxu0 0
      %472 = vmatpush.bf16.msra.mxu0 0
      %473 = vmatpush.bf16.msra.mxu0 0
      %474 = vmatpush.bf16.msra.mxu0 0
      %475 = vmatpush.bf16.msra.mxu0 0
      %476 = vmatpush.bf16.msra.mxu0 %v467
      %477 = vmatmul.bf16.gmra.mxu0 %v463
      %v478 = vpop.f32.mrf.mxu0
      %v479 = vadd.f32 0.0, %v478
      %v480 = vpop.f32.mrf.mxu0
      %481 = vdwg.mxu0
      %v482 = vadd.f32 %v460, %v479
      %483 = vst.msk [vmem:[#allocation4] sm:$0xff] %vm404, %v482
      %v485 = vunpack.c.l.b16 %v367
      %v486 = vpack.c.b16 %v485, %v485
      %487 = vrot.lane.b32.xlu0 %v486, 120
      %v488 = vpop.permute.xlu0 %487
      %v490 = vunpack.c.l.b16 %v368
      %v491 = vpack.c.b16 %v490, %v490
      %492 = vrot.lane.b32.xlu0 %v491, 120
      %v493 = vpop.permute.xlu0 %492
      %v495 = vsel %vm404, %v488, 0
      %v498 = vsel %vm404, %v493, 0
      %500 = vmatpush.bf16.xpose.msra.mxu0 0
      %501 = vmatpush.bf16.xpose.msra.mxu0 0
      %502 = vmatpush.bf16.xpose.msra.mxu0 0
      %503 = vmatpush.bf16.xpose.msra.mxu0 0
      %504 = vmatpush.bf16.xpose.msra.mxu0 0
      %505 = vmatpush.bf16.xpose.msra.mxu0 0
      %506 = vmatpush.bf16.xpose.msra.mxu0 0
      %507 = vmatpush.bf16.xpose.msra.mxu0 %v498
      %508 = vmatmul.bf16.gmra.mxu0 %v495
      %v509 = vpop.f32.mrf.mxu0
      %v510 = vadd.f32 0.0, %v509
      %v511 = vpop.f32.mrf.mxu0
      %512 = vdwg.mxu0
      %v513 = vsel %vm426, %v510, -1e+30
      %v514 = vld [vmem:[#allocation2] sm:$0xff]
      %v515 = vsel %vm429, %v513, -inf
      %516 = vmax.xlane.f32.xlu0 %v515
      %v517 = vpop.xlane.xlu0 %516
      %v518 = vmax.f32 %v514, %v517
      %v519 = vsub.f32 %v514, %v518
      %v520 = vmul.f32 %v519, 1.442695
      %v521 = vpow.pop %v520
      %523 = vset.pattern.permute.xlu0 1
      %524 = vperm.xlu0 %523, %v518
      %v525 = vpop.permute.xlu0 %524
      %v527 = vsub.f32 %v513, %v525
      %v528 = vmul.f32 %v527, 1.442695
      %v529 = vpow.pop %v528
      %vm530 = vcmask 15368
      %531 = vst.msk [vmem:[#allocation2] sm:$0xff] %vm530, %v518
      %v532 = vld [vmem:[#allocation3] sm:$0xff]
      %v533 = vmul.f32 %v521, %v532
      %v534 = vsel %vm429, %v529, 0.0
      %535 = vadd.xlane.f32.xlu0 %v534
      %v536 = vpop.xlane.xlu0 %535
      %v537 = vadd.f32 %v533, %v536
      %538 = vst.msk [vmem:[#allocation3] sm:$0xff] %vm530, %v537
      %v539 = vld [vmem:[#allocation4] sm:$0xff]
      %541 = vset.pattern.permute.xlu0 1
      %542 = vperm.xlu0 %541, %v521
      %v543 = vpop.permute.xlu0 %542
      %v545 = vmul.f32 %v543, %v539
      %v546 = vpack.c.bf16 %v529, %v529
      %v548 = vunpack.c.l.b16 %v369
      %v549 = vpack.c.b16 %v548, %v548
      %550 = vrot.lane.b32.xlu0 %v549, 120
      %v551 = vpop.permute.xlu0 %550
      %v553 = vsel %vm429, %v546, 0
      %v556 = vsel %vm465, %v551, 0
      %558 = vmatpush.bf16.msra.mxu0 0
      %559 = vmatpush.bf16.msra.mxu0 0
      %560 = vmatpush.bf16.msra.mxu0 0
      %561 = vmatpush.bf16.msra.mxu0 0
      %562 = vmatpush.bf16.msra.mxu0 0
      %563 = vmatpush.bf16.msra.mxu0 0
      %564 = vmatpush.bf16.msra.mxu0 0
      %565 = vmatpush.bf16.msra.mxu0 %v556
      %566 = vmatmul.bf16.gmra.mxu0 %v553
      %v567 = vpop.f32.mrf.mxu0
      %v568 = vadd.f32 0.0, %v567
      %v569 = vpop.f32.mrf.mxu0
      %570 = vdwg.mxu0
      %572 = vrot.lane.b32.xlu0 %v568, 8
      %v573 = vpop.permute.xlu0 %572
      %v575 = vadd.f32 %v545, %v573
      %vm576 = vcmask 130112
      %577 = vst.msk [vmem:[#allocation4] sm:$0xff] %vm576, %v575
      // Predicated region
      $region49: #{transformer_blocks.24} parent=43 // pred_check
        %p578 = pneg %p370
      $region50: #{transformer_blocks.24} parent=43 // pred_check_branch
        %580 = sbr.rel (%p578) target = $region52
      $region51: #{transformer_blocks.24} parent=43 // pred_region
        %v581 = vld [vmem:[#allocation4] sm:$0xff]
        %v582 = vld [vmem:[#allocation3] sm:$0xff]
        %v583 = vrcp.pop %v582
        %585 = vset.pattern.permute.xlu0 0
        %586 = vperm.xlu0 %585, %v583
        %v587 = vpop.permute.xlu0 %586
        %v589 = vmul.f32 %v581, %v587
        %590 = vset.pattern.permute.xlu0 1
        %591 = vperm.xlu0 %590, %v583
        %v592 = vpop.permute.xlu0 %591
        %v594 = vmul.f32 %v581, %v592
        %v595 = vsel %vm404, %v589, %v594
        %v596 = vpack.c.bf16 %v595, %v595
        %vm597 = vcmask 125952
        %598 = vst.msk [vmem:[%s365] sm:$0xf] %vm597, %v596
      $region52: #{transformer_blocks.24} parent=43 // pred_fallthru
        _
      %p599 = scmp.lt.s32.totalorder %s22, 1
      %s600 = scalar_select %p599, %s22, 1
      %p601 = scmp.lt.s32.totalorder %s23, 0
      %s602 = scalar_select %p601, %s23, 0
      %s603 = sadd.s32 %s602, %s600
      %s604 = smul.addr %s603, 4
      %s605 = scalar_lea.vmem %s6, %s604
      // Predicated region
      $region53: #{transformer_blocks.24} parent=43 // pred_check
        %p606 = pneg %p210
      $region54: #{transformer_blocks.24} parent=43 // pred_check_branch
        %608 = sbr.rel (%p606) target = $region56
      $region55: #{transformer_blocks.24} parent=43 // pred_region
        _
      $region56: #{transformer_blocks.24} parent=43 // pred_fallthru
        _
    $region44: #{transformer_blocks.24} parent=5 // pred_fallthru
      _
    %p609 = scmp.le.s32.totalorder 2, %s12
    // Predicated region
    $region57: #{transformer_blocks.24} parent=5 // pred_check
      %p610 = pneg %p609
    $region58: #{transformer_blocks.24} parent=5 // pred_check_branch
      %612 = sbr.rel (%p610) target = $region60
    $region59: #{transformer_blocks.24} parent=5 // pred_region
      %s613 = ssub.s32 %s12, 2
      // Predicated region
      $region61: #{transformer_blocks.24} parent=59 // pred_check
        %p614 = pneg %p216
      $region62: #{transformer_blocks.24} parent=59 // pred_check_branch
        %616 = sbr.rel (%p614) target = $region64
      $region63: #{transformer_blocks.24} parent=59 // pred_region
        %p617 = scmp.lt.s32.totalorder %s25, 1
        %s618 = scalar_select %p617, %s25, 1
        %p619 = scmp.lt.s32.totalorder %s26, 0
        %s620 = scalar_select %p619, %s26, 0
        %s621 = sadd.s32 %s620, %s618
        %s622 = smul.addr %s621, 4
        %s623 = scalar_lea.vmem %s6, %s622
      $region64: #{transformer_blocks.24} parent=59 // pred_fallthru
        _
    $region60: #{transformer_blocks.24} parent=5 // pred_fallthru
      _
  $region6: #{transformer_blocks.24} parent=0 // loop_footer
    %s16 = sadd.s32 1, %s12
  $region7: #{transformer_blocks.24} parent=0 // loop_footer_branch
    %11 = sbr.rel target = $region3
  $region8: #{transformer_blocks.24} parent=0 // loop_exit
    _

// kernel: transformer_blocks.23
$region0: #{transformer_blocks.23}
  #allocation0 [shape = 'u32[]', space=smem, size = 0x4, offset = 0x4, fixed_abs, tag = 'smem constant byte address 0x4 - core index']
  #allocation1 [shape = 'u32[72,128]{1,0:T(1,128)}', space=vmem, size = 0x9000, scoped, tag = 'internal scratch']
  %s0 = inlined_call_operand.vmem [shape: f32[1,32], index: 0, kind: input, shape index: {}]
  %s1 = inlined_call_operand.vmem [shape: f32[1,8], index: 1, kind: input, shape index: {}]
  %s2 = inlined_call_operand.vmem [shape: f32[2,6,32], index: 2, kind: input, shape index: {}]
  %s3 = inlined_call_operand.vmem [shape: bf16[32,16], index: 3, kind: input, shape index: {}]
  %s4 = inlined_call_operand.vmem [shape: bf16[32,16], index: 4, kind: input, shape index: {}]
  %s5 = inlined_call_operand.vmem [shape: bf16[2,6,16], index: 5, kind: output, shape index: {0}]
  %s6 = inlined_call_operand.vmem [shape: bf16[2,6,16], index: 6, kind: output, shape index: {1}]
  %7 = xla_tuple %s5, %s6
  %s8 = sld [smem:[#allocation0]]
  $region61: #{transformer_blocks.23} parent=0
    _
  %s10 = ssub.s32 1, %s8
  %s11 = scalar_select 0, %s10, %s8
  loop: start=0, step=1, limit=4
  $region2: #{transformer_blocks.23} parent=0 // loop_pre_header
    _
  $region3: #{transformer_blocks.23} parent=0 // loop_header
    %s13 = sphi 0, %s17
    %p14 = scmp.ge.s32.totalorder %s13, 4
    %s20 = sphi 0, %s32
    %s21 = sphi 0, %s28
    %s22 = sphi 0, %s20
    %s23 = sphi 0, %s21
    %s24 = sphi 0, %s22
    %s25 = sphi 0, %s23
    %s33 = sphi 0, %s33
    %s35 = sphi 0, %s33
    %s36 = sphi 0, %s35
    %s50 = sphi 0, %s36
    %s54 = sphi 0, %s54
    %s56 = sphi 0, %s54
    %s57 = sphi 0, %s56
    %s71 = sphi 0, %s57
    %s79 = sphi 0, %s81
    %s82 = sphi 0, %s79
    %s83 = sphi 0, %s82
    %s99 = sphi 0, %s83
    %s103 = sphi 0, %s103
    %s105 = sphi 0, %s103
    %s106 = sphi 0, %s105
    %s120 = sphi 0, %s106
    %s124 = sphi 0, %s124
    %s126 = sphi 0, %s124
    %s127 = sphi 0, %s126
    %s141 = sphi 0, %s127
    %s149 = sphi 0, %s151
    %s152 = sphi 0, %s149
    %s153 = sphi 0, %s152
    %s169 = sphi 0, %s153
    %s177 = sphi 0, %s179
    %s180 = sphi 0, %s177
    %s181 = sphi 0, %s180
    %s197 = sphi 0, %s181
  $region4: #{transformer_blocks.23} parent=0 // loop_header_branch
    %16 = sbr.rel (%p14) target = $region8
  $region5: #{transformer_blocks.23} parent=0 // loop_body
    %s18 = ssub.s32 %s13, 1
    %s19 = ssub.s32 %s13, 2
    %s26 = sadd.s32 1, %s21
    %p27 = scmp.ge.s32.totalorder %s26, 1
    %s28 = scalar_select %p27, 0, %s26
    %s29 = sadd.s32 1, %s20
    %s30 = scalar_select %p27, %s29, %s20
    %p31 = scmp.ge.s32.totalorder %s30, 2
    %s32 = scalar_select %p31, 0, %s30
    %s34 = sadd.s32 %s33, 1
    %p37 = scmp.eq.s32.totalorder %s13, 1
    %p38 = scmp.ne.s32.totalorder %s33, %s35
    %p39 = scmp.eq.s32.totalorder %s13, 0
    %p40 = por %p38, %p39
    %p41 = scmp.ne.s32.totalorder %s33, %s35
    %p42 = scmp.eq.s32.totalorder %s18, 1
    %p43 = por %p41, %p42
    %p44 = scmp.ne.s32.totalorder %s35, %s36
    %p45 = scmp.eq.s32.totalorder %s18, 0
    %p46 = por %p44, %p45
    %p47 = scmp.ne.s32.totalorder %s35, %s36
    %p48 = scmp.eq.s32.totalorder %s19, 1
    %p49 = por %p47, %p48
    %p51 = scmp.ne.s32.totalorder %s36, %s50
    %p52 = scmp.eq.s32.totalorder %s19, 0
    %p53 = por %p51, %p52
    %s55 = sadd.s32 %s54, 1
    %p58 = scmp.eq.s32.totalorder %s13, 1
    %p59 = scmp.ne.s32.totalorder %s54, %s56
    %p60 = scmp.eq.s32.totalorder %s13, 0
    %p61 = por %p59, %p60
    %p62 = scmp.ne.s32.totalorder %s54, %s56
    %p63 = scmp.eq.s32.totalorder %s18, 1
    %p64 = por %p62, %p63
    %p65 = scmp.ne.s32.totalorder %s56, %s57
    %p66 = scmp.eq.s32.totalorder %s18, 0
    %p67 = por %p65, %p66
    %p68 = scmp.ne.s32.totalorder %s56, %s57
    %p69 = scmp.eq.s32.totalorder %s19, 1
    %p70 = por %p68, %p69
    %p72 = scmp.ne.s32.totalorder %s57, %s71
    %p73 = scmp.eq.s32.totalorder %s19, 0
    %p74 = por %p72, %p73
    %s75 = ssub.s32 %s20, %s32
    %s76 = ssub.s32 %s21, %s28
    %s77 = sor.u32 %s75, %s76
    %p78 = scmp.eq.s32.totalorder %s77, 0
    %s80 = sadd.s32 %s79, 1
    %s81 = scalar_select %p78, %s79, %s80
    %p84 = pneg %p78
    %p85 = scmp.eq.s32.totalorder %s13, 1
    %p86 = por %p84, %p85
    %p87 = scmp.ne.s32.totalorder %s79, %s82
    %p88 = scmp.eq.s32.totalorder %s13, 0
    %p89 = por %p87, %p88
    %p90 = scmp.ne.s32.totalorder %s79, %s82
    %p91 = scmp.eq.s32.totalorder %s18, 1
    %p92 = por %p90, %p91
    %p93 = scmp.ne.s32.totalorder %s82, %s83
    %p94 = scmp.eq.s32.totalorder %s18, 0
    %p95 = por %p93, %p94
    %p96 = scmp.ne.s32.totalorder %s82, %s83
    %p97 = scmp.eq.s32.totalorder %s19, 1
    %p98 = por %p96, %p97
    %p100 = scmp.ne.s32.totalorder %s83, %s99
    %p101 = scmp.eq.s32.totalorder %s19, 0
    %p102 = por %p100, %p101
    %s104 = sadd.s32 %s103, 1
    %p107 = scmp.eq.s32.totalorder %s13, 1
    %p108 = scmp.ne.s32.totalorder %s103, %s105
    %p109 = scmp.eq.s32.totalorder %s13, 0
    %p110 = por %p108, %p109
    %p111 = scmp.ne.s32.totalorder %s103, %s105
    %p112 = scmp.eq.s32.totalorder %s18, 1
    %p113 = por %p111, %p112
    %p114 = scmp.ne.s32.totalorder %s105, %s106
    %p115 = scmp.eq.s32.totalorder %s18, 0
    %p116 = por %p114, %p115
    %p117 = scmp.ne.s32.totalorder %s105, %s106
    %p118 = scmp.eq.s32.totalorder %s19, 1
    %p119 = por %p117, %p118
    %p121 = scmp.ne.s32.totalorder %s106, %s120
    %p122 = scmp.eq.s32.totalorder %s19, 0
    %p123 = por %p121, %p122
    %s125 = sadd.s32 %s124, 1
    %p128 = scmp.eq.s32.totalorder %s13, 1
    %p129 = scmp.ne.s32.totalorder %s124, %s126
    %p130 = scmp.eq.s32.totalorder %s13, 0
    %p131 = por %p129, %p130
    %p132 = scmp.ne.s32.totalorder %s124, %s126
    %p133 = scmp.eq.s32.totalorder %s18, 1
    %p134 = por %p132, %p133
    %p135 = scmp.ne.s32.totalorder %s126, %s127
    %p136 = scmp.eq.s32.totalorder %s18, 0
    %p137 = por %p135, %p136
    %p138 = scmp.ne.s32.totalorder %s126, %s127
    %p139 = scmp.eq.s32.totalorder %s19, 1
    %p140 = por %p138, %p139
    %p142 = scmp.ne.s32.totalorder %s127, %s141
    %p143 = scmp.eq.s32.totalorder %s19, 0
    %p144 = por %p142, %p143
    %s145 = ssub.s32 %s20, %s32
    %s146 = ssub.s32 %s21, %s28
    %s147 = sor.u32 %s145, %s146
    %p148 = scmp.eq.s32.totalorder %s147, 0
    %s150 = sadd.s32 %s149, 1
    %s151 = scalar_select %p148, %s149, %s150
    %p154 = pneg %p148
    %p155 = scmp.eq.s32.totalorder %s13, 1
    %p156 = por %p154, %p155
    %p157 = scmp.ne.s32.totalorder %s149, %s152
    %p158 = scmp.eq.s32.totalorder %s13, 0
    %p159 = por %p157, %p158
    %p160 = scmp.ne.s32.totalorder %s149, %s152
    %p161 = scmp.eq.s32.totalorder %s18, 1
    %p162 = por %p160, %p161
    %p163 = scmp.ne.s32.totalorder %s152, %s153
    %p164 = scmp.eq.s32.totalorder %s18, 0
    %p165 = por %p163, %p164
    %p166 = scmp.ne.s32.totalorder %s152, %s153
    %p167 = scmp.eq.s32.totalorder %s19, 1
    %p168 = por %p166, %p167
    %p170 = scmp.ne.s32.totalorder %s153, %s169
    %p171 = scmp.eq.s32.totalorder %s19, 0
    %p172 = por %p170, %p171
    %s173 = ssub.s32 %s20, %s32
    %s174 = ssub.s32 %s21, %s28
    %s175 = sor.u32 %s173, %s174
    %p176 = scmp.eq.s32.totalorder %s175, 0
    %s178 = sadd.s32 %s177, 1
    %s179 = scalar_select %p176, %s177, %s178
    %p182 = pneg %p176
    %p183 = scmp.eq.s32.totalorder %s13, 1
    %p184 = por %p182, %p183
    %p185 = scmp.ne.s32.totalorder %s177, %s180
    %p186 = scmp.eq.s32.totalorder %s13, 0
    %p187 = por %p185, %p186
    %p188 = scmp.ne.s32.totalorder %s177, %s180
    %p189 = scmp.eq.s32.totalorder %s18, 1
    %p190 = por %p188, %p189
    %p191 = scmp.ne.s32.totalorder %s180, %s181
    %p192 = scmp.eq.s32.totalorder %s18, 0
    %p193 = por %p191, %p192
    %p194 = scmp.ne.s32.totalorder %s180, %s181
    %p195 = scmp.eq.s32.totalorder %s19, 1
    %p196 = por %p194, %p195
    %p198 = scmp.ne.s32.totalorder %s181, %s197
    %p199 = scmp.eq.s32.totalorder %s19, 0
    %p200 = por %p198, %p199
    %p201 = scmp.le.s32.totalorder 1, %s13
    %p202 = scmp.lt.s32.totalorder %s13, 3
    %p203 = pnand %p201, %p202
    %p204 = pneg %p203
    // Predicated region
    $region9: #{transformer_blocks.23} parent=5 // pred_check
      _
    $region10: #{transformer_blocks.23} parent=5 // pred_check_branch
      %206 = sbr.rel (%p203) target = $region12
    $region11: #{transformer_blocks.23} parent=5 // pred_region
      %s207 = ssub.s32 %s13, 1
      // Predicated region
      $region13: #{transformer_blocks.23} parent=11 // pred_check
        %p208 = pneg %p46
      $region14: #{transformer_blocks.23} parent=11 // pred_check_branch
        %210 = sbr.rel (%p208) target = $region16
      $region15: #{transformer_blocks.23} parent=11 // pred_region
        _
      $region16: #{transformer_blocks.23} parent=11 // pred_fallthru
        _
      // Predicated region
      $region17: #{transformer_blocks.23} parent=11 // pred_check
        %p211 = pneg %p67
      $region18: #{transformer_blocks.23} parent=11 // pred_check_branch
        %213 = sbr.rel (%p211) target = $region20
      $region19: #{transformer_blocks.23} parent=11 // pred_region
        _
      $region20: #{transformer_blocks.23} parent=11 // pred_fallthru
        _
      // Predicated region
      $region21: #{transformer_blocks.23} parent=11 // pred_check
        %p214 = pneg %p116
      $region22: #{transformer_blocks.23} parent=11 // pred_check_branch
        %216 = sbr.rel (%p214) target = $region24
      $region23: #{transformer_blocks.23} parent=11 // pred_region
        _
      $region24: #{transformer_blocks.23} parent=11 // pred_fallthru
        _
      // Predicated region
      $region25: #{transformer_blocks.23} parent=11 // pred_check
        %p217 = pneg %p137
      $region26: #{transformer_blocks.23} parent=11 // pred_check_branch
        %219 = sbr.rel (%p217) target = $region28
      $region27: #{transformer_blocks.23} parent=11 // pred_region
        _
      $region28: #{transformer_blocks.23} parent=11 // pred_fallthru
        _
    $region12: #{transformer_blocks.23} parent=5 // pred_fallthru
      _
    %p220 = scmp.lt.s32.totalorder %s13, 2
    // Predicated region
    $region29: #{transformer_blocks.23} parent=5 // pred_check
      %p221 = pneg %p220
    $region30: #{transformer_blocks.23} parent=5 // pred_check_branch
      %223 = sbr.rel (%p221) target = $region32
    $region31: #{transformer_blocks.23} parent=5 // pred_region
      // Predicated region
      $region33: #{transformer_blocks.23} parent=31 // pred_check
        %p224 = pneg %p89
      $region34: #{transformer_blocks.23} parent=31 // pred_check_branch
        %226 = sbr.rel (%p224) target = $region36
      $region35: #{transformer_blocks.23} parent=31 // pred_region
        %p227 = scmp.lt.s32.totalorder %s20, 1
        %s228 = scalar_select %p227, %s20, 1
        %p229 = scmp.lt.s32.totalorder %s21, 0
        %s230 = scalar_select %p229, %s21, 0
        %s231 = sadd.s32 %s230, %s228
        %s232 = smul.addr %s231, 8
        %s233 = scalar_lea.vmem %s2, %s232
      $region36: #{transformer_blocks.23} parent=31 // pred_fallthru
        _
    $region32: #{transformer_blocks.23} parent=5 // pred_fallthru
      _
    %p234 = scmp.le.s32.totalorder 1, %s13
    %p235 = scmp.lt.s32.totalorder %s13, 3
    %p236 = pnand %p234, %p235
    %p237 = pneg %p236
    // Predicated region
    $region37: #{transformer_blocks.23} parent=5 // pred_check
      _
    $region38: #{transformer_blocks.23} parent=5 // pred_check_branch
      %239 = sbr.rel (%p236) target = $region40
    $region39: #{transformer_blocks.23} parent=5 // pred_region
      %s240 = ssub.s32 %s13, 1
      %p241 = pneg %p46
      %p242 = pneg %p43
      %p243 = pneg %p67
      %p244 = pneg %p64
      %p245 = scmp.lt.s32.totalorder %s22, 1
      %s246 = scalar_select %p245, %s22, 1
      %p247 = scmp.lt.s32.totalorder %s23, 0
      %s248 = scalar_select %p247, %s23, 0
      %s249 = sadd.s32 %s248, %s246
      %s250 = smul.addr %s249, 8
      %s251 = scalar_lea.vmem %s2, %s250
      %p252 = pneg %p95
      %p253 = pneg %p92
      %p254 = pneg %p116
      %p255 = pneg %p113
      %p256 = pneg %p137
      %p257 = pneg %p134
      %p258 = pneg %p165
      %p259 = pneg %p162
      %p260 = scmp.lt.s32.totalorder %s22, 1
      %s261 = scalar_select %p260, %s22, 1
      %p262 = scmp.lt.s32.totalorder %s23, 0
      %s263 = scalar_select %p262, %s23, 0
      %s264 = sadd.s32 %s263, %s261
      %s265 = smul.addr %s264, 4
      %s266 = scalar_lea.vmem %s5, %s265
      %p267 = pneg %p193
      %p268 = pneg %p190
      %p269 = scmp.lt.s32.totalorder %s22, 1
      %s270 = scalar_select %p269, %s22, 1
      %p271 = scmp.lt.s32.totalorder %s23, 0
      %s272 = scalar_select %p271, %s23, 0
      %s273 = sadd.s32 %s272, %s270
      %s274 = smul.addr %s273, 4
      %s275 = scalar_lea.vmem %s6, %s274
      %p276 = scmp.lt.s32.totalorder %s22, 1
      %s277 = scalar_select %p276, %s22, 1
      %p278 = scmp.lt.s32.totalorder %s23, 0
      %s279 = scalar_select %p278, %s23, 0
      %s280 = sadd.s32 %s279, %s277
      %s281 = smul.addr %s280, 8
      %s282 = scalar_lea.vmem %s2, %s281
      %p283 = scmp.lt.s32.totalorder %s22, 1
      %s284 = scalar_select %p283, %s22, 1
      %p285 = scmp.lt.s32.totalorder %s23, 0
      %s286 = scalar_select %p285, %s23, 0
      %s287 = sadd.s32 %s286, %s284
      %s288 = smul.addr %s287, 4
      %s289 = scalar_lea.vmem %s5, %s288
      %p290 = scmp.lt.s32.totalorder %s22, 1
      %s291 = scalar_select %p290, %s22, 1
      %p292 = scmp.lt.s32.totalorder %s23, 0
      %s293 = scalar_select %p292, %s23, 0
      %s294 = sadd.s32 %s293, %s291
      %s295 = smul.addr %s294, 4
      %s296 = scalar_lea.vmem %s6, %s295
      %v298 = vld [vmem:[%s282] sm:$0x3f]
      %v299 = vpack.c.bf16 %v298, %v298
      %v300 = vld [vmem:[%s3] sm:$0xf]
      %v301 = vld [vmem:[%s3 + $0x4] sm:$0xf]
      %v302 = vld [vmem:[%s3 + $0x8] sm:$0xf]
      %v303 = vld [vmem:[%s3 + $0xc] sm:$0xf]
      %v308 = vunpack.c.l.b16 %v300
      %v309 = vunpack.c.l.b16 %v301
      %v310 = vunpack.c.l.b16 %v302
      %v311 = vunpack.c.l.b16 %v303
      %v312 = vpack.c.b16 %v309, %v308
      %v313 = vpack.c.b16 %v311, %v310
      %vm316 = vcmask 261120
      %v318 = vsel %vm316, %v299, 0
      %320 = vmatpush.bf16.msra.mxu0 0
      %321 = vmatpush.bf16.msra.mxu0 0
      %322 = vmatpush.bf16.msra.mxu0 0
      %323 = vmatpush.bf16.msra.mxu0 0
      %324 = vmatpush.bf16.msra.mxu0 0
      %325 = vmatpush.bf16.msra.mxu0 0
      %326 = vmatpush.bf16.msra.mxu0 %v313
      %327 = vmatpush.bf16.msra.mxu0 %v312
      %328 = vmatmul.bf16.gmra.mxu0 %v318
      %v329 = vpop.f32.mrf.mxu0
      %v330 = vadd.f32 0.0, %v329
      %v331 = vpop.f32.mrf.mxu0
      %332 = vdwg.mxu0
      %v333 = vld [vmem:[%s1] sm:$0x1]
      %v334 = vmul.f32 %v330, %v330
      %vm335 = vcmask 62464
      %v336 = vsel %vm335, %v334, 0.0
      %337 = vadd.xlane.f32.xlu0 %v336
      %v338 = vpop.xlane.xlu0 %337
      %v339 = vmax.f32 %v338, 1e-24
      %v340 = vrsqrt.pop %v339
      %v341 = vmul.f32 %v340, %v339
      %v342 = vmul.f32 %v341, %v340
      %v343 = vmul.f32 0.5, %v342
      %v344 = vsub.f32 1.5, %v343
      %v345 = vmul.f32 %v340, %v344
      %vm346 = vweird.f32 %v339
      %vm347 = vweird.f32 %v340
      %vm348 = vmor %vm346, %vm347
      %v349 = vsel %vm348, %v340, %v345
      %v350 = vmul.f32 %v330, %v349
      %v352 = vperm.slane %v333, 0
      %v354 = vmul.f32 %v350, %v352
      %356 = vrot.lane.b32.xlu0 %v334, 120
      %v357 = vpop.permute.xlu0 %356
      %v359 = vsel %vm335, %v357, 0.0
      %360 = vadd.xlane.f32.xlu0 %v359
      %v361 = vpop.xlane.xlu0 %360
      %v362 = vmax.f32 %v361, 1e-24
      %v363 = vrsqrt.pop %v362
      %v364 = vmul.f32 %v363, %v362
      %v365 = vmul.f32 %v364, %v363
      %v366 = vmul.f32 0.5, %v365
      %v367 = vsub.f32 1.5, %v366
      %v368 = vmul.f32 %v363, %v367
      %vm369 = vweird.f32 %v362
      %vm370 = vweird.f32 %v363
      %vm371 = vmor %vm369, %vm370
      %v372 = vsel %vm371, %v363, %v368
      %v373 = vmul.f32 %v330, %v372
      %374 = vrot.lane.b32.xlu0 %v352, 8
      %v375 = vpop.permute.xlu0 %374
      %v377 = vmul.f32 %v373, %v375
      %vm378 = vcmask 64512
      %v379 = vsel %vm378, %v354, %v377
      %v380 = vpack.c.bf16 %v379, %v379
      %vm381 = vcmask 124928
      %382 = vst.msk [vmem:[%s289] sm:$0x7] %vm381, %v380
      %v383 = vld [vmem:[%s4] sm:$0xf]
      %v384 = vld [vmem:[%s4 + $0x4] sm:$0xf]
      %v385 = vld [vmem:[%s4 + $0x8] sm:$0xf]
      %v386 = vld [vmem:[%s4 + $0xc] sm:$0xf]
      %v391 = vunpack.c.l.b16 %v383
      %v392 = vunpack.c.l.b16 %v384
      %v393 = vunpack.c.l.b16 %v385
      %v394 = vunpack.c.l.b16 %v386
      %v395 = vpack.c.b16 %v392, %v391
      %v396 = vpack.c.b16 %v394, %v393
      %399 = vmatpush.bf16.msra.mxu0 0
      %400 = vmatpush.bf16.msra.mxu0 0
      %401 = vmatpush.bf16.msra.mxu0 0
      %402 = vmatpush.bf16.msra.mxu0 0
      %403 = vmatpush.bf16.msra.mxu0 0
      %404 = vmatpush.bf16.msra.mxu0 0
      %405 = vmatpush.bf16.msra.mxu0 %v396
      %406 = vmatpush.bf16.msra.mxu0 %v395
      %407 = vmatmul.bf16.gmra.mxu0 %v318
      %v408 = vpop.f32.mrf.mxu0
      %v409 = vadd.f32 0.0, %v408
      %v410 = vpop.f32.mrf.mxu0
      %411 = vdwg.mxu0
      %v412 = vpack.c.bf16 %v409, %v409
      %413 = vst.msk [vmem:[%s296] sm:$0x7] %vm381, %v412
      %p414 = scmp.lt.s32.totalorder %s22, 1
      %s415 = scalar_select %p414, %s22, 1
      %p416 = scmp.lt.s32.totalorder %s23, 0
      %s417 = scalar_select %p416, %s23, 0
      %s418 = sadd.s32 %s417, %s415
      %s419 = smul.addr %s418, 4
      %s420 = scalar_lea.vmem %s5, %s419
      %p421 = scmp.lt.s32.totalorder %s22, 1
      %s422 = scalar_select %p421, %s22, 1
      %p423 = scmp.lt.s32.totalorder %s23, 0
      %s424 = scalar_select %p423, %s23, 0
      %s425 = sadd.s32 %s424, %s422
      %s426 = smul.addr %s425, 4
      %s427 = scalar_lea.vmem %s6, %s426
      // Predicated region
      $region41: #{transformer_blocks.23} parent=39 // pred_check
        %p428 = pneg %p162
      $region42: #{transformer_blocks.23} parent=39 // pred_check_branch
        %430 = sbr.rel (%p428) target = $region44
      $region43: #{transformer_blocks.23} parent=39 // pred_region
        _
      $region44: #{transformer_blocks.23} parent=39 // pred_fallthru
        _
      // Predicated region
      $region45: #{transformer_blocks.23} parent=39 // pred_check
        %p431 = pneg %p190
      $region46: #{transformer_blocks.23} parent=39 // pred_check_branch
        %433 = sbr.rel (%p431) target = $region48
      $region47: #{transformer_blocks.23} parent=39 // pred_region
        _
      $region48: #{transformer_blocks.23} parent=39 // pred_fallthru
        _
    $region40: #{transformer_blocks.23} parent=5 // pred_fallthru
      _
    %p434 = scmp.le.s32.totalorder 2, %s13
    // Predicated region
    $region49: #{transformer_blocks.23} parent=5 // pred_check
      %p435 = pneg %p434
    $region50: #{transformer_blocks.23} parent=5 // pred_check_branch
      %437 = sbr.rel (%p435) target = $region52
    $region51: #{transformer_blocks.23} parent=5 // pred_region
      %s438 = ssub.s32 %s13, 2
      // Predicated region
      $region53: #{transformer_blocks.23} parent=51 // pred_check
        %p439 = pneg %p168
      $region54: #{transformer_blocks.23} parent=51 // pred_check_branch
        %441 = sbr.rel (%p439) target = $region56
      $region55: #{transformer_blocks.23} parent=51 // pred_region
        %p442 = scmp.lt.s32.totalorder %s24, 1
        %s443 = scalar_select %p442, %s24, 1
        %p444 = scmp.lt.s32.totalorder %s25, 0
        %s445 = scalar_select %p444, %s25, 0
        %s446 = sadd.s32 %s445, %s443
        %s447 = smul.addr %s446, 4
        %s448 = scalar_lea.vmem %s5, %s447
      $region56: #{transformer_blocks.23} parent=51 // pred_fallthru
        _
      // Predicated region
      $region57: #{transformer_blocks.23} parent=51 // pred_check
        %p449 = pneg %p196
      $region58: #{transformer_blocks.23} parent=51 // pred_check_branch
        %451 = sbr.rel (%p449) target = $region60
      $region59: #{transformer_blocks.23} parent=51 // pred_region
        %p452 = scmp.lt.s32.totalorder %s24, 1
        %s453 = scalar_select %p452, %s24, 1
        %p454 = scmp.lt.s32.totalorder %s25, 0
        %s455 = scalar_select %p454, %s25, 0
        %s456 = sadd.s32 %s455, %s453
        %s457 = smul.addr %s456, 4
        %s458 = scalar_lea.vmem %s6, %s457
      $region60: #{transformer_blocks.23} parent=51 // pred_fallthru
        _
    $region52: #{transformer_blocks.23} parent=5 // pred_fallthru
      _
  $region6: #{transformer_blocks.23} parent=0 // loop_footer
    %s17 = sadd.s32 1, %s13
  $region7: #{transformer_blocks.23} parent=0 // loop_footer_branch
    %12 = sbr.rel target = $region3
  $region8: #{transformer_blocks.23} parent=0 // loop_exit
    _

// kernel: transformer_blocks.37
$region0: #{transformer_blocks.37}
  #allocation0 [shape = 'u32[]', space=smem, size = 0x4, offset = 0x4, fixed_abs, tag = 'smem constant byte address 0x4 - core index']
  #allocation1 [shape = 'u32[72,128]{1,0:T(1,128)}', space=vmem, size = 0x9000, scoped, tag = 'internal scratch']
  %s0 = inlined_call_operand.vmem [shape: f32[1,32], index: 0, kind: input, shape index: {}]
  %s1 = inlined_call_operand.vmem [shape: f32[16,32], index: 1, kind: input, shape index: {}]
  %s2 = inlined_call_operand.hbm [shape: f32[16,32], index: 2, kind: output, shape index: {}]
  %s3 = sld [smem:[#allocation0]]
  $region18: #{transformer_blocks.37} parent=0
    _
  %s5 = ssub.s32 1, %s3
  %s6 = scalar_select 0, %s5, %s3
  $region1: #{transformer_blocks.37} parent=0
    #allocation2 [shape = 'u8[8192]{0}', space=vmem, size = 0x2000, scoped, tag = 'output window, operand 0, single buffered']
    #allocation3 [shape = 's32[1]{0}', space=sflag, size = 0x4, scoped, tag = 'scoped memory for transformer_blocks.37']
    %7 = vsyncpa [#allocation3], 0
    // Predicated region
    $region2: #{transformer_blocks.37} parent=1 // pred_check
      _
    $region3: #{transformer_blocks.37} parent=1 // pred_check_branch
      %9 = sbr.rel (0) target = $region5
    $region4: #{transformer_blocks.37} parent=1 // pred_region
      _
    $region5: #{transformer_blocks.37} parent=1 // pred_fallthru
      _
    // Predicated region
    $region6: #{transformer_blocks.37} parent=1 // pred_check
      _
    $region7: #{transformer_blocks.37} parent=1 // pred_check_branch
      %11 = sbr.rel (0) target = $region9
    $region8: #{transformer_blocks.37} parent=1 // pred_region
      _
    $region9: #{transformer_blocks.37} parent=1 // pred_fallthru
      _
    %v12 = vld [vmem:[%s1] sm:$0xff]
    %v13 = vld [vmem:[%s1 + $0x8] sm:$0xff]
    %v14 = vld [vmem:[%s0] sm:$0x1]
    %vm15 = vcmask 261120
    %v16 = vsel %vm15, %v12, 0.0
    %17 = vadd.xlane.f32.xlu0 %v16
    %v18 = vpop.xlane.xlu0 %17
    %v19 = vsel %vm15, %v13, 0.0
    %20 = vadd.xlane.f32.xlu0 %v19
    %v21 = vpop.xlane.xlu0 %20
    %v22 = vrcp.pop 32.0
    %v23 = vmul.f32 32.0, %v22
    %v24 = vsub.f32 1.0, %v23
    %v25 = vmul.f32 %v22, %v24
    %v26 = vadd.f32 %v22, %v25
    %vm27 = vweird.f32 %v22
    %v28 = vsel %vm27, %v22, %v26
    %v29 = vmul.f32 %v18, %v28
    %v30 = vmul.f32 %v21, %v28
    %v31 = vsub.f32 %v12, %v29
    %v32 = vsub.f32 %v13, %v30
    %v33 = vmul.f32 %v31, %v31
    %v34 = vmul.f32 %v32, %v32
    %v35 = vsel %vm15, %v33, 0.0
    %36 = vadd.xlane.f32.xlu0 %v35
    %v37 = vpop.xlane.xlu0 %36
    %v38 = vsel %vm15, %v34, 0.0
    %39 = vadd.xlane.f32.xlu0 %v38
    %v40 = vpop.xlane.xlu0 %39
    %v41 = vmul.f32 %v37, %v28
    %v42 = vmul.f32 %v40, %v28
    %v43 = vadd.f32 %v41, 1e-05
    %v44 = vadd.f32 %v42, 1e-05
    %v45 = vrsqrt.pop %v43
    %v46 = vmul.f32 %v45, %v43
    %v47 = vmul.f32 %v46, %v45
    %v48 = vmul.f32 0.5, %v47
    %v49 = vsub.f32 1.5, %v48
    %v50 = vmul.f32 %v45, %v49
    %vm51 = vweird.f32 %v43
    %vm52 = vweird.f32 %v45
    %vm53 = vmor %vm51, %vm52
    %v54 = vsel %vm53, %v45, %v50
    %v55 = vrsqrt.pop %v44
    %v56 = vmul.f32 %v55, %v44
    %v57 = vmul.f32 %v56, %v55
    %v58 = vmul.f32 0.5, %v57
    %v59 = vsub.f32 1.5, %v58
    %v60 = vmul.f32 %v55, %v59
    %vm61 = vweird.f32 %v44
    %vm62 = vweird.f32 %v55
    %vm63 = vmor %vm61, %vm62
    %v64 = vsel %vm63, %v55, %v60
    %v65 = vmul.f32 %v31, %v54
    %v66 = vmul.f32 %v32, %v64
    %v68 = vperm.slane %v14, 0
    %v70 = vmul.f32 %v65, %v68
    %v71 = vmul.f32 %v66, %v68
    %72 = vst.msk [vmem:[#allocation2] sm:$0xff] %vm15, %v70
    %73 = vst.msk [vmem:[#allocation2 + $0x8] sm:$0xff] %vm15, %v71
    // Predicated region
    $region10: #{transformer_blocks.37} parent=1 // pred_check
      _
    $region11: #{transformer_blocks.37} parent=1 // pred_check_branch
      %75 = sbr.rel (0) target = $region13
    $region12: #{transformer_blocks.37} parent=1 // pred_region
      %77 = vsyncadd [#allocation3], 0
      %s78 = sshll.u32 [#allocation2], 4
      %s79 = int_to_ptr.vmem [resolvable:$true] %s78
      %s80 = sshll.u32 %s2, 4
      %s81 = int_to_ptr.hbm [resolvable:$true] %s80
      %86 = dma.vmem_to_hbm [thread:$0]  %s79, 256, %s81, [#allocation3], 128, 128, 8
    $region13: #{transformer_blocks.37} parent=1 // pred_fallthru
      _
    // Predicated region
    $region14: #{transformer_blocks.37} parent=1 // pred_check
      _
    $region15: #{transformer_blocks.37} parent=1 // pred_check_branch
      %88 = sbr.rel (0) target = $region17
    $region16: #{transformer_blocks.37} parent=1 // pred_region
      %90 = dma.done [#allocation3], 256
    $region17: #{transformer_blocks.37} parent=1 // pred_fallthru
      _
    %91 = vsyncpa [#allocation3], 1

</llo_original>
